<compile_context>
chip_gen: v7x
topology: tpu7x:2x2x1
jax: 0.10.0
libtpu: 0.0.40
codegen_flags: <defaults>
</compile_context>

<pallas_src>
import functools

import numpy as np

import jax
import jax.numpy as jnp
from jax.experimental import pallas as pl
from jax.experimental.pallas import tpu as pltpu


_MIN_TILE = 256  # batch-tile granularity (multiple of 128; matches v6e/v7x MXU rows)


def _round_up(x, m):
    return ((x + m - 1) // m) * m


# --------------------------------------------------------------------------- #
# Hardware / feature detection (done once, cached)
# --------------------------------------------------------------------------- #
@functools.lru_cache(maxsize=1)
def _vmem_budget_bytes():
    """Generation-aware VMEM budget with ~25% headroom for Mosaic scratch."""
    cap = 64 * 1024 * 1024  # conservative default (v7x per-TensorCore VMEM)
    try:
        cap = int(pltpu.get_tpu_info().vmem_capacity_bytes)
    except Exception:
        pass
    return max(32 * 1024 * 1024, (cap // 4) * 3)


@functools.lru_cache(maxsize=1)
def _single_buffer_supported():
    """Feature-detect pl.Buffered(1) once with a tiny probe kernel.

    Scope of this try/except is only the probe; a failure just disables the
    single-buffer optimization, it cannot mask errors in the real kernel.
    """
    if not hasattr(pl, "Buffered"):
        return False
    try:
        def probe(w_ref, x_ref, o_ref):
            o_ref[...] = x_ref[...] + w_ref[...]

        w_spec = pl.BlockSpec((8, 128), lambda i: (0, 0),
                              pipeline_mode=pl.Buffered(1))
        fn = pl.pallas_call(
            probe,
            out_shape=jax.ShapeDtypeStruct((16, 128), jnp.float32),
            grid_spec=pltpu.PrefetchScalarGridSpec(
                num_scalar_prefetch=0,
                grid=(2,),
                in_specs=[w_spec, pl.BlockSpec((8, 128), lambda i: (i, 0))],
                out_specs=pl.BlockSpec((8, 128), lambda i: (i, 0)),
            ),
        )
        jax.block_until_ready(
            fn(jnp.zeros((8, 128), jnp.float32), jnp.zeros((16, 128), jnp.float32)))
        return True
    except Exception:
        return False


# --------------------------------------------------------------------------- #
# Kernel
# --------------------------------------------------------------------------- #
def _mlp_kernel(x_ref,
                w1_ref, b1_ref,
                w2_ref, b2_ref,
                w3_ref, b3_ref,
                w4_ref, b4_ref,
                w5_ref, b5_ref,
                o_ref,
                acc_ref):
    """Fused forward for one (batch_tile, k_tile) block.

    Grid = (batch tiles ["parallel"], K tiles of layer 1 ["arbitrary"]).
    Layer-1 partial products accumulate in f32 scratch; layers 2..5 and the
    output store run only on the last K step.
    """
    k = pl.program_id(1)

    @pl.when(k == 0)
    def _zero():
        acc_ref[...] = jnp.zeros_like(acc_ref)

    # Layer 1 partial matmul (bf16 operands, f32 accumulation).
    acc_ref[...] += jnp.dot(x_ref[...], w1_ref[...],
                            preferred_element_type=jnp.float32)

    @pl.when(k == pl.num_programs(1) - 1)
    def _finalize():
        def layer(h, w_ref, b_ref, relu):
            a = jnp.dot(h, w_ref[...], preferred_element_type=jnp.float32) + b_ref[...]
            if relu:
                # ReLU in f32, then a single pack to bf16 for the next MXU push.
                return jnp.maximum(a, 0.0).astype(jnp.bfloat16)
            return a

        h = jnp.maximum(acc_ref[...] + b1_ref[...], 0.0).astype(jnp.bfloat16)
        h = layer(h, w2_ref, b2_ref, True)    # Dropout(0.2) = identity (eval mode)
        h = layer(h, w3_ref, b3_ref, True)
        h = layer(h, w4_ref, b4_ref, True)
        o_ref[...] = layer(h, w5_ref, b5_ref, False).astype(o_ref.dtype)


# --------------------------------------------------------------------------- #
# Param preparation (one-time): padding + bf16 cast
# --------------------------------------------------------------------------- #
def prepare_params(params, *, k_tile_max=512):
    """Pad narrow dims to full 128-lane width, pad input_dim to a K-tile multiple,
    cast weights to bf16. Run once at init; reuse the result for every forward."""
    (w1, b1), (w2, b2), (w3, b3), (w4, b4), (w5, b5) = params
    d_in = int(w1.shape[0])
    num_classes = int(w5.shape[1])

    # K-tiling of the first matmul only matters for large input_dim.
    if d_in <= k_tile_max:
        k_tile, d_in_p = d_in, d_in
    else:
        k_tile = k_tile_max
        d_in_p = _round_up(d_in, k_tile)

    h4p = max(128, _round_up(w4.shape[1], 128))     # hidden 64  -> 128
    cp = max(128, _round_up(num_classes, 128))      # classes 10 -> 128

    w1p = jnp.pad(w1, ((0, d_in_p - d_in), (0, 0)))
    w4p = jnp.pad(w4, ((0, 0), (0, h4p - w4.shape[1])))
    b4p = jnp.pad(b4, ((0, 0), (0, h4p - b4.shape[1])))
    w5p = jnp.pad(w5, ((0, h4p - w5.shape[0]), (0, cp - w5.shape[1])))
    b5p = jnp.pad(b5, ((0, 0), (0, cp - b5.shape[1])))

    weights = tuple(w.astype(jnp.bfloat16) for w in (w1p, w2, w3, w4p, w5p))
    biases = tuple(b.astype(jnp.float32) for b in (b1, b2, b3, b4p, b5p))
    return {
        "weights": weights,
        "biases": biases,
        "num_classes": num_classes,
        "input_dim": d_in,
        "d_in_padded": int(d_in_p),
        "k_tile": int(k_tile),
    }


# --------------------------------------------------------------------------- #
# Forward
# --------------------------------------------------------------------------- #
@functools.partial(
    jax.jit,
    static_argnames=("batch_tile", "k_tile", "d_in_padded", "num_classes",
                     "single_buffer", "out_dtype"))
def _large_mlp_forward_impl(x, weights, biases, *, batch_tile, k_tile, d_in_padded,
                            num_classes, single_buffer, out_dtype):
    w1, w2, w3, w4, w5 = weights
    b1, b2, b3, b4, b5 = biases
    B, d_in = x.shape
    H1 = int(w1.shape[1])      # 512
    Cp = int(w5.shape[1])      # padded class dim (>=128, lane-dense)

    # ---- pad input features (zeros; zero rows of w1 keep the matmul exact) ----
    xp = x.astype(jnp.bfloat16)
    if d_in_padded != d_in:
        xp = jnp.pad(xp, ((0, 0), (0, d_in_padded - d_in)))
    # ---- pad batch up to a tile multiple ----
    B_pad = _round_up(B, batch_tile)
    if B_pad != B:
        xp = jnp.pad(xp, ((0, B_pad - B), (0, 0)))

    nb = B_pad // batch_tile
    nk = d_in_padded // k_tile
    grid = (nb, nk)

    def _rep(shape):
        # Replicated (constant block index) weights/biases: DMA'd once; a single
        # VMEM buffer suffices when pl.Buffered(1) is available.
        if single_buffer:
            return pl.BlockSpec(shape, lambda i, k: (0, 0),
                                pipeline_mode=pl.Buffered(1))
        return pl.BlockSpec(shape, lambda i, k: (0, 0))

    if nk == 1:
        w1_spec = _rep(w1.shape)
    else:
        w1_spec = pl.BlockSpec((k_tile, H1), lambda i, k: (k, 0))

    in_specs = [pl.BlockSpec((batch_tile, k_tile), lambda i, k: (i, k)),   # x tile
                w1_spec, _rep(b1.shape),
                _rep(w2.shape), _rep(b2.shape),
                _rep(w3.shape), _rep(b3.shape),
                _rep(w4.shape), _rep(b4.shape),
                _rep(w5.shape), _rep(b5.shape)]
    out_specs = pl.BlockSpec((batch_tile, Cp), lambda i, k: (i, 0))        # lane-dense

    out_itemsize = np.dtype(out_dtype).itemsize

    # ---- cost estimate (advisory, helps XLA schedule the custom call) ----
    flops = 2 * B_pad * sum(int(w.shape[0]) * int(w.shape[1]) for w in weights)
    bytes_accessed = (xp.size * 2
                      + sum(w.size * 2 for w in weights)
                      + sum(b.size * 4 for b in biases)
                      + B_pad * Cp * out_itemsize)
    cost = pl.CostEstimate(flops=flops, transcendentals=0,
                           bytes_accessed=bytes_accessed)

    # ---- VMEM budget: tiles (double-buffered) + weights + f32 acc + temps ----
    wbuf = 1 if single_buffer else 2
    w_bytes = sum(w.size * 2 for w in weights) + sum(b.size * 4 for b in biases)
    vmem_est = (2 * batch_tile * k_tile * 2            # x tile (bf16, 2 bufs)
                + 2 * k_tile * H1 * 2                  # w1 tile (bf16, 2 bufs)
                + 2 * batch_tile * Cp * out_itemsize   # out tile (2 bufs)
                + wbuf * w_bytes                       # resident weights/biases
                + batch_tile * H1 * 4                  # f32 accumulator scratch
                + 4 * batch_tile * H1 * 4)             # f32 intermediates headroom
    vmem_limit = int(min(_vmem_budget_bytes(), max(2 * vmem_est, 32 * 1024 * 1024)))

    out = pl.pallas_call(
        _mlp_kernel,
        out_shape=jax.ShapeDtypeStruct((B_pad, Cp), out_dtype),
        grid_spec=pltpu.PrefetchScalarGridSpec(
            num_scalar_prefetch=0,
            grid=grid,
            in_specs=in_specs,
            out_specs=out_specs,
            scratch_shapes=[pltpu.VMEM((batch_tile, H1), jnp.float32)],
        ),
        compiler_params=pltpu.CompilerParams(
            # Batch tiles shard across both TensorCores on v7x; K axis is a reduction.
            dimension_semantics=("parallel", "arbitrary"),
            vmem_limit_bytes=vmem_limit,
        ),
        cost_estimate=cost,
    )(xp, w1, b1, w2, b2, w3, b3, w4, b4, w5, b5)

    return out[:B, :num_classes]


def _choose_batch_tile(B, target):
    """Multiple of 256; clamped so the batch grid has >=2 steps when B allows it
    (keeps both v7x TensorCores busy), capped by `target` (default 1024)."""
    b_pad = _round_up(max(int(B), 1), _MIN_TILE)
    tile = min(int(target), b_pad)
    if b_pad >= 2 * _MIN_TILE:
        tile = min(tile, _round_up(b_pad // 2, _MIN_TILE))
    return max(_MIN_TILE, _round_up(tile, _MIN_TILE))


def large_mlp_forward(x, prepared, *, batch_tile=None, target_batch_tile=1024,
                      out_dtype=jnp.bfloat16):
    """Fused LargeMLP forward (eval mode). `prepared` comes from prepare_params().

    Returns (B, num_classes) logits in `out_dtype` (bf16 by default to halve the
    HBM output stream; cast to f32 outside if full precision is required).
    Note: bf16 MXU operands with f32 accumulation give ~1e-2-level drift vs an
    all-f32 reference.
    """
    B = x.shape[0]
    if batch_tile is None:
        batch_tile = _choose_batch_tile(B, target_batch_tile)
    else:
        batch_tile = max(_MIN_TILE, _round_up(int(batch_tile), _MIN_TILE))
    return _large_mlp_forward_impl(
        x, prepared["weights"], prepared["biases"],
        batch_tile=int(batch_tile),
        k_tile=prepared["k_tile"],
        d_in_padded=prepared["d_in_padded"],
        num_classes=prepared["num_classes"],
        single_buffer=_single_buffer_supported(),
        out_dtype=out_dtype,
    )


# --------------------------------------------------------------------------- #
# Init + reference (for the self-test)
# --------------------------------------------------------------------------- #
def init_large_mlp_params(key, input_dim, num_classes=10):
    """PyTorch nn.Linear default init: W, b ~ U(-1/sqrt(fan_in), 1/sqrt(fan_in)).
    Weights stored as (in, out) so forward is h @ W + b."""
    dims = [input_dim, 512, 256, 128, 64, num_classes]
    params = []
    for fan_in, fan_out in zip(dims[:-1], dims[1:]):
        key, kw, kb = jax.random.split(key, 3)
        bound = 1.0 / jnp.sqrt(float(fan_in))
        w = jax.random.uniform(kw, (fan_in, fan_out), jnp.float32, -bound, bound)
        b = jax.random.uniform(kb, (1, fan_out), jnp.float32, -bound, bound)
        params.append((w, b))
    return params


def _reference_forward(x, params):
    """Plain-JAX f32 reference (eval-mode dropout = identity)."""
    h = x
    for i, (w, b) in enumerate(params):
        h = h @ w + b
        if i < len(params) - 1:
            h = jnp.maximum(h, 0.0)
    return h


if __name__ == "__main__":
    key = jax.random.PRNGKey(0)
    k_param, k_x = jax.random.split(key)

    input_dim = 64
    num_classes = 10
    batch = 512          # -> 2 parallel batch tiles of 256 (exercises megacore path)

    params = init_large_mlp_params(k_param, input_dim, num_classes)
    prepared = prepare_params(params)          # one-time pad + bf16 cast

    x = jax.random.normal(k_x, (batch, input_dim), jnp.float32)

    out = jax.block_until_ready(large_mlp_forward(x, prepared))
    ref = _reference_forward(x, params)

    assert out.shape == (batch, num_classes)
    assert jnp.allclose(out.astype(jnp.float32), ref, atol=5e-2, rtol=5e-2), \
        "mismatch vs f32 reference"

    # Ragged batch (not a multiple of the tile) also works via zero padding.
    x_small = x[:8]
    out_small = jax.block_until_ready(large_mlp_forward(x_small, prepared))
    assert out_small.shape == (8, num_classes)
    assert jnp.allclose(out_small.astype(jnp.float32), ref[:8], atol=5e-2, rtol=5e-2), \
        "ragged-batch mismatch"

    print("KERNEL_OK")
</pallas_src>

<mosaic_0001>
module attributes {stable_mosaic.version = 11 : i64} {
  func.func @probe(%arg0: i32, %arg1: memref<8x128xf32, #tpu.memory_space<vmem>>, %arg2: memref<8x128xf32, #tpu.memory_space<vmem>>, %arg3: memref<8x128xf32, #tpu.memory_space<vmem>>) attributes {dimension_semantics = [#tpu.dimension_semantics<arbitrary>], iteration_bounds = array<i64: 2>, scalar_prefetch = 0 : i64, scratch_operands = 0 : i64, tpu.core_type = #tpu.core_type<tc>, window_params = [{pipeline_mode = #tpu.pipeline_mode<synchronous>, transform_indices = @transform_0, window_bounds = array<i64: 8, 128>}, {transform_indices = @transform_1, window_bounds = array<i64: 8, 128>}, {transform_indices = @transform_2, window_bounds = array<i64: 8, 128>}]} {
    %c0 = arith.constant 0 : index
    %c0_0 = arith.constant 0 : index
    %0 = vector.load %arg2[%c0, %c0_0] : memref<8x128xf32, #tpu.memory_space<vmem>>, vector<8x128xf32>
    %c0_1 = arith.constant 0 : index
    %c0_2 = arith.constant 0 : index
    %1 = vector.load %arg1[%c0_1, %c0_2] : memref<8x128xf32, #tpu.memory_space<vmem>>, vector<8x128xf32>
    %2 = arith.addf %0, %1 : vector<8x128xf32>
    %c0_3 = arith.constant 0 : index
    %c0_4 = arith.constant 0 : index
    %3 = vector.load %arg3[%c0_3, %c0_4] : memref<8x128xf32, #tpu.memory_space<vmem>>, vector<8x128xf32>
    tpu.vector_store %arg3[%c0_3, %c0_4], %2 {strides = array<i32>} : memref<8x128xf32, #tpu.memory_space<vmem>>, vector<8x128xf32>,
    return
  }
  func.func @transform_0(%arg0: i32) -> (i32, i32) {
    %c0_i32 = arith.constant 0 : i32
    %c0_i32_0 = arith.constant 0 : i32
    %c0_i32_1 = arith.constant 0 : i32
    return %c0_i32, %c0_i32_0 : i32, i32
  }
  func.func @transform_1(%arg0: i32) -> (i32, i32) {
    %c0_i32 = arith.constant 0 : i32
    %c0_i32_0 = arith.constant 0 : i32
    return %arg0, %c0_i32 : i32, i32
  }
  func.func @transform_2(%arg0: i32) -> (i32, i32) {
    %c0_i32 = arith.constant 0 : i32
    %c0_i32_0 = arith.constant 0 : i32
    return %arg0, %c0_i32 : i32, i32
  }
}

module attributes {stable_mosaic.version = 11 : i64} {
  func.func @_mlp_kernel(%arg0: i32, %arg1: i32, %arg2: memref<256x64xbf16, #tpu.memory_space<vmem>>, %arg3: memref<64x512xbf16, #tpu.memory_space<vmem>>, %arg4: memref<1x512xf32, #tpu.memory_space<vmem>>, %arg5: memref<512x256xbf16, #tpu.memory_space<vmem>>, %arg6: memref<1x256xf32, #tpu.memory_space<vmem>>, %arg7: memref<256x128xbf16, #tpu.memory_space<vmem>>, %arg8: memref<1x128xf32, #tpu.memory_space<vmem>>, %arg9: memref<128x128xbf16, #tpu.memory_space<vmem>>, %arg10: memref<1x128xf32, #tpu.memory_space<vmem>>, %arg11: memref<128x128xbf16, #tpu.memory_space<vmem>>, %arg12: memref<1x128xf32, #tpu.memory_space<vmem>>, %arg13: memref<256x128xbf16, #tpu.memory_space<vmem>>, %arg14: memref<256x512xf32, #tpu.memory_space<vmem>>) attributes {dimension_semantics = [#tpu.dimension_semantics<parallel>, #tpu.dimension_semantics<arbitrary>], iteration_bounds = array<i64: 2, 1>, scalar_prefetch = 0 : i64, scratch_operands = 1 : i64, tpu.core_type = #tpu.core_type<tc>, window_params = [{transform_indices = @transform_0, window_bounds = array<i64: 256, 64>}, {pipeline_mode = #tpu.pipeline_mode<synchronous>, transform_indices = @transform_1, window_bounds = array<i64: 64, 512>}, {pipeline_mode = #tpu.pipeline_mode<synchronous>, transform_indices = @transform_2, window_bounds = array<i64: 1, 512>}, {pipeline_mode = #tpu.pipeline_mode<synchronous>, transform_indices = @transform_3, window_bounds = array<i64: 512, 256>}, {pipeline_mode = #tpu.pipeline_mode<synchronous>, transform_indices = @transform_4, window_bounds = array<i64: 1, 256>}, {pipeline_mode = #tpu.pipeline_mode<synchronous>, transform_indices = @transform_5, window_bounds = array<i64: 256, 128>}, {pipeline_mode = #tpu.pipeline_mode<synchronous>, transform_indices = @transform_6, window_bounds = array<i64: 1, 128>}, {pipeline_mode = #tpu.pipeline_mode<synchronous>, transform_indices = @transform_7, window_bounds = array<i64: 128, 128>}, {pipeline_mode = #tpu.pipeline_mode<synchronous>, transform_indices = @transform_8, window_bounds = array<i64: 1, 128>}, {pipeline_mode = #tpu.pipeline_mode<synchronous>, transform_indices = @transform_9, window_bounds = array<i64: 128, 128>}, {pipeline_mode = #tpu.pipeline_mode<synchronous>, transform_indices = @transform_10, window_bounds = array<i64: 1, 128>}, {transform_indices = @transform_11, window_bounds = array<i64: 256, 128>}]} {
    %c0_i32 = arith.constant 0 : i32
    %0 = arith.cmpi eq, %arg1, %c0_i32 : i32
    %1 = arith.extui %0 : i1 to i32
    %c0_i32_0 = arith.constant 0 : i32
    %2 = arith.cmpi ne, %1, %c0_i32_0 : i32
    scf.if %2 {
      %cst_10 = arith.constant 0.000000e+00 : f32
      %12 = vector.broadcast %cst_10 : f32 to vector<256x512xf32>
      %c0_11 = arith.constant 0 : index
      %c0_12 = arith.constant 0 : index
      %13 = vector.load %arg14[%c0_11, %c0_12] : memref<256x512xf32, #tpu.memory_space<vmem>>, vector<256x512xf32>
      tpu.vector_store %arg14[%c0_11, %c0_12], %12 {strides = array<i32>} : memref<256x512xf32, #tpu.memory_space<vmem>>, vector<256x512xf32>,
    } else {
    }
    %c0 = arith.constant 0 : index
    %c0_1 = arith.constant 0 : index
    %3 = vector.load %arg14[%c0, %c0_1] : memref<256x512xf32, #tpu.memory_space<vmem>>, vector<256x512xf32>
    %c0_2 = arith.constant 0 : index
    %c0_3 = arith.constant 0 : index
    %4 = vector.load %arg2[%c0_2, %c0_3] : memref<256x64xbf16, #tpu.memory_space<vmem>>, vector<256x64xbf16>
    %c0_4 = arith.constant 0 : index
    %c0_5 = arith.constant 0 : index
    %5 = vector.load %arg3[%c0_4, %c0_5] : memref<64x512xbf16, #tpu.memory_space<vmem>>, vector<64x512xbf16>
    %cst = arith.constant dense<0.000000e+00> : vector<256x512xf32>
    %6 = tpu.matmul %4, %5, %cst {dimension_numbers = #tpu.dot_dimension_numbers<[1], [0], [0], [1], [0, 0, 1, 1], [], []>} : vector<256x64xbf16>, vector<64x512xbf16>, vector<256x512xf32> -> vector<256x512xf32>
    %7 = arith.addf %3, %6 : vector<256x512xf32>
    %c0_6 = arith.constant 0 : index
    %c0_7 = arith.constant 0 : index
    %8 = vector.load %arg14[%c0_6, %c0_7] : memref<256x512xf32, #tpu.memory_space<vmem>>, vector<256x512xf32>
    tpu.vector_store %arg14[%c0_6, %c0_7], %7 {strides = array<i32>} : memref<256x512xf32, #tpu.memory_space<vmem>>, vector<256x512xf32>,
    %c0_i32_8 = arith.constant 0 : i32
    %9 = arith.cmpi eq, %arg1, %c0_i32_8 : i32
    %10 = arith.extui %9 : i1 to i32
    %c0_i32_9 = arith.constant 0 : i32
    %11 = arith.cmpi ne, %10, %c0_i32_9 : i32
    scf.if %11 {
      %c0_10 = arith.constant 0 : index
      %c0_11 = arith.constant 0 : index
      %12 = vector.load %arg14[%c0_10, %c0_11] : memref<256x512xf32, #tpu.memory_space<vmem>>, vector<256x512xf32>
      %c0_12 = arith.constant 0 : index
      %c0_13 = arith.constant 0 : index
      %13 = vector.load %arg4[%c0_12, %c0_13] : memref<1x512xf32, #tpu.memory_space<vmem>>, vector<1x512xf32>
      %14 = vector.broadcast %13 : vector<1x512xf32> to vector<256x512xf32>
      %15 = arith.addf %12, %14 : vector<256x512xf32>
      %cst_14 = arith.constant 0.000000e+00 : f32
      %16 = vector.broadcast %cst_14 : f32 to vector<256x512xf32>
      %17 = arith.maximumf %15, %16 : vector<256x512xf32>
      %18 = arith.truncf %17 : vector<256x512xf32> to vector<256x512xbf16>
      %c0_15 = arith.constant 0 : index
      %c0_16 = arith.constant 0 : index
      %19 = vector.load %arg5[%c0_15, %c0_16] : memref<512x256xbf16, #tpu.memory_space<vmem>>, vector<512x256xbf16>
      %cst_17 = arith.constant dense<0.000000e+00> : vector<256x256xf32>
      %20 = tpu.matmul %18, %19, %cst_17 {dimension_numbers = #tpu.dot_dimension_numbers<[1], [0], [0], [1], [0, 0, 1, 1], [], []>} : vector<256x512xbf16>, vector<512x256xbf16>, vector<256x256xf32> -> vector<256x256xf32>
      %c0_18 = arith.constant 0 : index
      %c0_19 = arith.constant 0 : index
      %21 = vector.load %arg6[%c0_18, %c0_19] : memref<1x256xf32, #tpu.memory_space<vmem>>, vector<1x256xf32>
      %22 = vector.broadcast %21 : vector<1x256xf32> to vector<256x256xf32>
      %23 = arith.addf %20, %22 : vector<256x256xf32>
      %cst_20 = arith.constant 0.000000e+00 : f32
      %24 = vector.broadcast %cst_20 : f32 to vector<256x256xf32>
      %25 = arith.maximumf %23, %24 : vector<256x256xf32>
      %26 = arith.truncf %25 : vector<256x256xf32> to vector<256x256xbf16>
      %c0_21 = arith.constant 0 : index
      %c0_22 = arith.constant 0 : index
      %27 = vector.load %arg7[%c0_21, %c0_22] : memref<256x128xbf16, #tpu.memory_space<vmem>>, vector<256x128xbf16>
      %cst_23 = arith.constant dense<0.000000e+00> : vector<256x128xf32>
      %28 = tpu.matmul %26, %27, %cst_23 {dimension_numbers = #tpu.dot_dimension_numbers<[1], [0], [0], [1], [0, 0, 1, 1], [], []>} : vector<256x256xbf16>, vector<256x128xbf16>, vector<256x128xf32> -> vector<256x128xf32>
      %c0_24 = arith.constant 0 : index
      %c0_25 = arith.constant 0 : index
      %29 = vector.load %arg8[%c0_24, %c0_25] : memref<1x128xf32, #tpu.memory_space<vmem>>, vector<1x128xf32>
      %30 = vector.broadcast %29 : vector<1x128xf32> to vector<256x128xf32>
      %31 = arith.addf %28, %30 : vector<256x128xf32>
      %cst_26 = arith.constant 0.000000e+00 : f32
      %32 = vector.broadcast %cst_26 : f32 to vector<256x128xf32>
      %33 = arith.maximumf %31, %32 : vector<256x128xf32>
      %34 = arith.truncf %33 : vector<256x128xf32> to vector<256x128xbf16>
      %c0_27 = arith.constant 0 : index
      %c0_28 = arith.constant 0 : index
      %35 = vector.load %arg9[%c0_27, %c0_28] : memref<128x128xbf16, #tpu.memory_space<vmem>>, vector<128x128xbf16>
      %cst_29 = arith.constant dense<0.000000e+00> : vector<256x128xf32>
      %36 = tpu.matmul %34, %35, %cst_29 {dimension_numbers = #tpu.dot_dimension_numbers<[1], [0], [0], [1], [0, 0, 1, 1], [], []>} : vector<256x128xbf16>, vector<128x128xbf16>, vector<256x128xf32> -> vector<256x128xf32>
      %c0_30 = arith.constant 0 : index
      %c0_31 = arith.constant 0 : index
      %37 = vector.load %arg10[%c0_30, %c0_31] : memref<1x128xf32, #tpu.memory_space<vmem>>, vector<1x128xf32>
      %38 = vector.broadcast %37 : vector<1x128xf32> to vector<256x128xf32>
      %39 = arith.addf %36, %38 : vector<256x128xf32>
      %cst_32 = arith.constant 0.000000e+00 : f32
      %40 = vector.broadcast %cst_32 : f32 to vector<256x128xf32>
      %41 = arith.maximumf %39, %40 : vector<256x128xf32>
      %42 = arith.truncf %41 : vector<256x128xf32> to vector<256x128xbf16>
      %c0_33 = arith.constant 0 : index
      %c0_34 = arith.constant 0 : index
      %43 = vector.load %arg11[%c0_33, %c0_34] : memref<128x128xbf16, #tpu.memory_space<vmem>>, vector<128x128xbf16>
      %cst_35 = arith.constant dense<0.000000e+00> : vector<256x128xf32>
      %44 = tpu.matmul %42, %43, %cst_35 {dimension_numbers = #tpu.dot_dimension_numbers<[1], [0], [0], [1], [0, 0, 1, 1], [], []>} : vector<256x128xbf16>, vector<128x128xbf16>, vector<256x128xf32> -> vector<256x128xf32>
      %c0_36 = arith.constant 0 : index
      %c0_37 = arith.constant 0 : index
      %45 = vector.load %arg12[%c0_36, %c0_37] : memref<1x128xf32, #tpu.memory_space<vmem>>, vector<1x128xf32>
      %46 = vector.broadcast %45 : vector<1x128xf32> to vector<256x128xf32>
      %47 = arith.addf %44, %46 : vector<256x128xf32>
      %48 = arith.truncf %47 : vector<256x128xf32> to vector<256x128xbf16>
      %c0_38 = arith.constant 0 : index
      %c0_39 = arith.constant 0 : index
      %49 = vector.load %arg13[%c0_38, %c0_39] : memref<256x128xbf16, #tpu.memory_space<vmem>>, vector<256x128xbf16>
      tpu.vector_store %arg13[%c0_38, %c0_39], %48 {strides = array<i32>} : memref<256x128xbf16, #tpu.memory_space<vmem>>, vector<256x128xbf16>,
    } else {
    }
    return
  }
  func.func @transform_0(%arg0: i32, %arg1: i32) -> (i32, i32) {
    %c0_i32 = arith.constant 0 : i32
    return %arg0, %arg1 : i32, i32
  }
  func.func @transform_1(%arg0: i32, %arg1: i32) -> (i32, i32) {
    %c0_i32 = arith.constant 0 : i32
    %c0_i32_0 = arith.constant 0 : i32
    %c0_i32_1 = arith.constant 0 : i32
    return %c0_i32, %c0_i32_0 : i32, i32
  }
  func.func @transform_2(%arg0: i32, %arg1: i32) -> (i32, i32) {
    %c0_i32 = arith.constant 0 : i32
    %c0_i32_0 = arith.constant 0 : i32
    %c0_i32_1 = arith.constant 0 : i32
    return %c0_i32, %c0_i32_0 : i32, i32
  }
  func.func @transform_3(%arg0: i32, %arg1: i32) -> (i32, i32) {
    %c0_i32 = arith.constant 0 : i32
    %c0_i32_0 = arith.constant 0 : i32
    %c0_i32_1 = arith.constant 0 : i32
    return %c0_i32, %c0_i32_0 : i32, i32
  }
  func.func @transform_4(%arg0: i32, %arg1: i32) -> (i32, i32) {
    %c0_i32 = arith.constant 0 : i32
    %c0_i32_0 = arith.constant 0 : i32
    %c0_i32_1 = arith.constant 0 : i32
    return %c0_i32, %c0_i32_0 : i32, i32
  }
  func.func @transform_5(%arg0: i32, %arg1: i32) -> (i32, i32) {
    %c0_i32 = arith.constant 0 : i32
    %c0_i32_0 = arith.constant 0 : i32
    %c0_i32_1 = arith.constant 0 : i32
    return %c0_i32, %c0_i32_0 : i32, i32
  }
  func.func @transform_6(%arg0: i32, %arg1: i32) -> (i32, i32) {
    %c0_i32 = arith.constant 0 : i32
    %c0_i32_0 = arith.constant 0 : i32
    %c0_i32_1 = arith.constant 0 : i32
    return %c0_i32, %c0_i32_0 : i32, i32
  }
  func.func @transform_7(%arg0: i32, %arg1: i32) -> (i32, i32) {
    %c0_i32 = arith.constant 0 : i32
    %c0_i32_0 = arith.constant 0 : i32
    %c0_i32_1 = arith.constant 0 : i32
    return %c0_i32, %c0_i32_0 : i32, i32
  }
  func.func @transform_8(%arg0: i32, %arg1: i32) -> (i32, i32) {
    %c0_i32 = arith.constant 0 : i32
    %c0_i32_0 = arith.constant 0 : i32
    %c0_i32_1 = arith.constant 0 : i32
    return %c0_i32, %c0_i32_0 : i32, i32
  }
  func.func @transform_9(%arg0: i32, %arg1: i32) -> (i32, i32) {
    %c0_i32 = arith.constant 0 : i32
    %c0_i32_0 = arith.constant 0 : i32
    %c0_i32_1 = arith.constant 0 : i32
    return %c0_i32, %c0_i32_0 : i32, i32
  }
  func.func @transform_10(%arg0: i32, %arg1: i32) -> (i32, i32) {
    %c0_i32 = arith.constant 0 : i32
    %c0_i32_0 = arith.constant 0 : i32
    %c0_i32_1 = arith.constant 0 : i32
    return %c0_i32, %c0_i32_0 : i32, i32
  }
  func.func @transform_11(%arg0: i32, %arg1: i32) -> (i32, i32) {
    %c0_i32 = arith.constant 0 : i32
    %c0_i32_0 = arith.constant 0 : i32
    return %arg0, %c0_i32 : i32, i32
  }
}

</mosaic_0001>

<llo_original>
// kernel: tpu_custom_call.1
$region0: #{tpu_custom_call.1}
  #allocation0 [shape = 'u32[]', space=smem, size = 0x4, offset = 0x4, fixed_abs, tag = 'smem constant byte address 0x4 - core index']
  #allocation1 [shape = 'u32[144,128]{1,0:T(1,128)}', space=vmem, size = 0x12000, scoped, tag = 'internal scratch']
  %s0 = inlined_call_operand.hbm [shape: f32[8,128], index: 0, kind: input, shape index: {}]
  %s1 = inlined_call_operand.hbm [shape: f32[16,128], index: 1, kind: input, shape index: {}]
  %s2 = inlined_call_operand.hbm [shape: f32[16,128], index: 2, kind: output, shape index: {}]
  %s3 = sld [smem:[#allocation0]]
  $region49: #{tpu_custom_call.1} parent=0
    _
  %s5 = ssub.s32 1, %s3
  %s6 = scalar_select 0, %s5, %s3
  $region1: #{tpu_custom_call.1} parent=0
    #allocation2 [shape = 'u8[4096]{0}', space=vmem, size = 0x1000, scoped, tag = 'input window, operand 0, single buffered']
    #allocation3 [shape = 's32[2]{0}', space=sflag, size = 0x8, scoped, tag = 'scoped memory for tpu_custom_call.1']
    #allocation4 [shape = 's32[2]{0}', space=sflag, size = 0x8, scoped, tag = 'scoped memory for tpu_custom_call.1']
    #allocation5 [shape = 'u8[8192]{0}', space=vmem, size = 0x2000, scoped, tag = 'input window, operand 1']
    #allocation6 [shape = 's32[2]{0}', space=sflag, size = 0x8, scoped, tag = 'scoped memory for tpu_custom_call.1']
    #allocation7 [shape = 'u8[8192]{0}', space=vmem, size = 0x2000, scoped, tag = 'output window, operand 0']
    %7 = vsyncpa [#allocation3], 0
    %8 = vsyncpa [#allocation6], 0
    %s9 = scalar_lea.sflag [#allocation6], 1
    %10 = vsyncpa %s9, 0
    %11 = vsyncpa [#allocation4], 0
    %s12 = scalar_lea.sflag [#allocation4], 1
    %13 = vsyncpa %s12, 0
    loop: start=0, step=1, limit=4
    $region2: #{tpu_custom_call.1} parent=1 // loop_pre_header
      _
    $region3: #{tpu_custom_call.1} parent=1 // loop_header
      %s15 = sphi 0, %s19
      %p16 = scmp.ge.s32.totalorder %s15, 4
      %s23 = sphi 0, %s23
      %s25 = sphi 0, %s23
      %s26 = sphi 0, %s25
      %s40 = sphi 0, %s26
      %s46 = sphi 0, %s48
      %s49 = sphi 0, %s46
      %s50 = sphi 0, %s49
      %s66 = sphi 0, %s50
      %s72 = sphi 0, %s74
      %s75 = sphi 0, %s72
      %s76 = sphi 0, %s75
      %s92 = sphi 0, %s76
    $region4: #{tpu_custom_call.1} parent=1 // loop_header_branch
      %18 = sbr.rel (%p16) target = $region8
    $region5: #{tpu_custom_call.1} parent=1 // loop_body
      %s20 = ssub.s32 %s15, 1
      %s21 = ssub.s32 %s15, 2
      %s22 = sadd.s32 %s15, 1
      %s24 = sadd.s32 %s23, 1
      %p27 = scmp.eq.s32.totalorder %s15, 1
      %p28 = scmp.ne.s32.totalorder %s23, %s25
      %p29 = scmp.eq.s32.totalorder %s15, 0
      %p30 = por %p28, %p29
      %p31 = scmp.ne.s32.totalorder %s23, %s25
      %p32 = scmp.eq.s32.totalorder %s20, 1
      %p33 = por %p31, %p32
      %p34 = scmp.ne.s32.totalorder %s25, %s26
      %p35 = scmp.eq.s32.totalorder %s20, 0
      %p36 = por %p34, %p35
      %p37 = scmp.ne.s32.totalorder %s25, %s26
      %p38 = scmp.eq.s32.totalorder %s21, 1
      %p39 = por %p37, %p38
      %p41 = scmp.ne.s32.totalorder %s26, %s40
      %p42 = scmp.eq.s32.totalorder %s21, 0
      %p43 = por %p41, %p42
      %s44 = ssub.s32 %s15, %s22
      %p45 = scmp.eq.s32.totalorder %s44, 0
      %s47 = sadd.s32 %s46, 1
      %s48 = scalar_select %p45, %s46, %s47
      %p51 = pneg %p45
      %p52 = scmp.eq.s32.totalorder %s15, 1
      %p53 = por %p51, %p52
      %p54 = scmp.ne.s32.totalorder %s46, %s49
      %p55 = scmp.eq.s32.totalorder %s15, 0
      %p56 = por %p54, %p55
      %p57 = scmp.ne.s32.totalorder %s46, %s49
      %p58 = scmp.eq.s32.totalorder %s20, 1
      %p59 = por %p57, %p58
      %p60 = scmp.ne.s32.totalorder %s49, %s50
      %p61 = scmp.eq.s32.totalorder %s20, 0
      %p62 = por %p60, %p61
      %p63 = scmp.ne.s32.totalorder %s49, %s50
      %p64 = scmp.eq.s32.totalorder %s21, 1
      %p65 = por %p63, %p64
      %p67 = scmp.ne.s32.totalorder %s50, %s66
      %p68 = scmp.eq.s32.totalorder %s21, 0
      %p69 = por %p67, %p68
      %s70 = ssub.s32 %s15, %s22
      %p71 = scmp.eq.s32.totalorder %s70, 0
      %s73 = sadd.s32 %s72, 1
      %s74 = scalar_select %p71, %s72, %s73
      %p77 = pneg %p71
      %p78 = scmp.eq.s32.totalorder %s15, 1
      %p79 = por %p77, %p78
      %p80 = scmp.ne.s32.totalorder %s72, %s75
      %p81 = scmp.eq.s32.totalorder %s15, 0
      %p82 = por %p80, %p81
      %p83 = scmp.ne.s32.totalorder %s72, %s75
      %p84 = scmp.eq.s32.totalorder %s20, 1
      %p85 = por %p83, %p84
      %p86 = scmp.ne.s32.totalorder %s75, %s76
      %p87 = scmp.eq.s32.totalorder %s20, 0
      %p88 = por %p86, %p87
      %p89 = scmp.ne.s32.totalorder %s75, %s76
      %p90 = scmp.eq.s32.totalorder %s21, 1
      %p91 = por %p89, %p90
      %p93 = scmp.ne.s32.totalorder %s76, %s92
      %p94 = scmp.eq.s32.totalorder %s21, 0
      %p95 = por %p93, %p94
      %p96 = scmp.le.s32.totalorder 1, %s15
      %p97 = scmp.lt.s32.totalorder %s15, 3
      %p98 = pnand %p96, %p97
      %p99 = pneg %p98
      // Predicated region
      $region9: #{tpu_custom_call.1} parent=5 // pred_check
        _
      $region10: #{tpu_custom_call.1} parent=5 // pred_check_branch
        %101 = sbr.rel (%p98) target = $region12
      $region11: #{tpu_custom_call.1} parent=5 // pred_region
        %s102 = ssub.s32 %s15, 1
        // Predicated region
        $region13: #{tpu_custom_call.1} parent=11 // pred_check
          %p103 = pneg %p36
        $region14: #{tpu_custom_call.1} parent=11 // pred_check_branch
          %105 = sbr.rel (%p103) target = $region16
        $region15: #{tpu_custom_call.1} parent=11 // pred_region
          %s107 = ssub.s32 128, 128
          %108 = vsyncadd [#allocation3], %s107
          %s110 = sshll.u32 [#allocation2], 4
          %s111 = int_to_ptr.vmem [resolvable:$true] %s110
          %113 = dma.hbm_to_vmem [thread:$0]  %s0, 128, %s111, [#allocation3]
        $region16: #{tpu_custom_call.1} parent=11 // pred_fallthru
          _
      $region12: #{tpu_custom_call.1} parent=5 // pred_fallthru
        _
      %p114 = scmp.lt.s32.totalorder %s15, 2
      // Predicated region
      $region17: #{tpu_custom_call.1} parent=5 // pred_check
        %p115 = pneg %p114
      $region18: #{tpu_custom_call.1} parent=5 // pred_check_branch
        %117 = sbr.rel (%p115) target = $region20
      $region19: #{tpu_custom_call.1} parent=5 // pred_region
        // Predicated region
        $region21: #{tpu_custom_call.1} parent=19 // pred_check
          %p118 = pneg %p56
        $region22: #{tpu_custom_call.1} parent=19 // pred_check_branch
          %120 = sbr.rel (%p118) target = $region24
        $region23: #{tpu_custom_call.1} parent=19 // pred_region
          %s121 = sand.u32 %s46, 1
          %s122 = scalar_lea.sflag [#allocation6], %s121
          %s123 = sand.u32 %s46, 1
          %s124 = smul.addr %s123, 8
          %s125 = scalar_lea.vmem [#allocation5], %s124
          %s127 = ssub.s32 128, 128
          %128 = vsyncadd %s122, %s127
          %s129 = smul.addr %s15, 128
          %s130 = scalar_lea.hbm %s1, %s129
          %s132 = sshll.u32 %s125, 4
          %s133 = int_to_ptr.vmem [resolvable:$true] %s132
          %135 = dma.hbm_to_vmem [thread:$0]  %s130, 128, %s133, %s122
        $region24: #{tpu_custom_call.1} parent=19 // pred_fallthru
          _
      $region20: #{tpu_custom_call.1} parent=5 // pred_fallthru
        _
      %p136 = scmp.le.s32.totalorder 1, %s15
      %p137 = scmp.lt.s32.totalorder %s15, 3
      %p138 = pnand %p136, %p137
      %p139 = pneg %p138
      // Predicated region
      $region25: #{tpu_custom_call.1} parent=5 // pred_check
        _
      $region26: #{tpu_custom_call.1} parent=5 // pred_check_branch
        %141 = sbr.rel (%p138) target = $region28
      $region27: #{tpu_custom_call.1} parent=5 // pred_region
        %s142 = ssub.s32 %s15, 1
        // Predicated region
        $region29: #{tpu_custom_call.1} parent=27 // pred_check
          %p143 = pneg %p36
        $region30: #{tpu_custom_call.1} parent=27 // pred_check_branch
          %145 = sbr.rel (%p143) target = $region32
        $region31: #{tpu_custom_call.1} parent=27 // pred_region
          %146 = dma.done [#allocation3], 128
        $region32: #{tpu_custom_call.1} parent=27 // pred_fallthru
          _
        %s147 = sand.u32 %s49, 1
        %s148 = scalar_lea.sflag [#allocation6], %s147
        %s149 = sand.u32 %s49, 1
        %s150 = smul.addr %s149, 8
        %s151 = scalar_lea.vmem [#allocation5], %s150
        // Predicated region
        $region33: #{tpu_custom_call.1} parent=27 // pred_check
          %p152 = pneg %p62
        $region34: #{tpu_custom_call.1} parent=27 // pred_check_branch
          %154 = sbr.rel (%p152) target = $region36
        $region35: #{tpu_custom_call.1} parent=27 // pred_region
          %155 = dma.done %s148, 128
        $region36: #{tpu_custom_call.1} parent=27 // pred_fallthru
          _
        %p156 = pneg %p36
        %p157 = pneg %p33
        %s158 = sand.u32 %s49, 1
        %s159 = scalar_lea.sflag [#allocation6], %s158
        %s160 = sand.u32 %s49, 1
        %s161 = smul.addr %s160, 8
        %s162 = scalar_lea.vmem [#allocation5], %s161
        %p163 = pneg %p62
        %p164 = pneg %p59
        %p165 = pneg %p88
        %p166 = pneg %p85
        %s167 = sand.u32 %s75, 1
        %s168 = scalar_lea.sflag [#allocation4], %s167
        %s169 = sand.u32 %s75, 1
        %s170 = smul.addr %s169, 8
        %s171 = scalar_lea.vmem [#allocation7], %s170
        %v172 = vld [vmem:[%s151] sm:$0xff]
        %v173 = vld [vmem:[#allocation2] sm:$0xff]
        %v174 = vadd.f32 %v172, %v173
        %175 = vst [vmem:[%s171] sm:$0xff] %v174
        %s176 = sand.u32 %s75, 1
        %s177 = scalar_lea.sflag [#allocation4], %s176
        %s178 = sand.u32 %s75, 1
        %s179 = smul.addr %s178, 8
        %s180 = scalar_lea.vmem [#allocation7], %s179
        // Predicated region
        $region37: #{tpu_custom_call.1} parent=27 // pred_check
          %p181 = pneg %p85
        $region38: #{tpu_custom_call.1} parent=27 // pred_check_branch
          %183 = sbr.rel (%p181) target = $region40
        $region39: #{tpu_custom_call.1} parent=27 // pred_region
          %s185 = ssub.s32 128, 128
          %186 = vsyncadd %s177, %s185
          %s187 = smul.addr %s20, 128
          %s188 = scalar_lea.hbm %s2, %s187
          %s190 = sshll.u32 %s180, 4
          %s191 = int_to_ptr.vmem [resolvable:$true] %s190
          %193 = dma.vmem_to_hbm [thread:$0]  %s191, 128, %s188, %s177
        $region40: #{tpu_custom_call.1} parent=27 // pred_fallthru
          _
      $region28: #{tpu_custom_call.1} parent=5 // pred_fallthru
        _
      %p194 = scmp.le.s32.totalorder 2, %s15
      // Predicated region
      $region41: #{tpu_custom_call.1} parent=5 // pred_check
        %p195 = pneg %p194
      $region42: #{tpu_custom_call.1} parent=5 // pred_check_branch
        %197 = sbr.rel (%p195) target = $region44
      $region43: #{tpu_custom_call.1} parent=5 // pred_region
        %s198 = ssub.s32 %s15, 2
        // Predicated region
        $region45: #{tpu_custom_call.1} parent=43 // pred_check
          %p199 = pneg %p91
        $region46: #{tpu_custom_call.1} parent=43 // pred_check_branch
          %201 = sbr.rel (%p199) target = $region48
        $region47: #{tpu_custom_call.1} parent=43 // pred_region
          %s202 = sand.u32 %s76, 1
          %s203 = scalar_lea.sflag [#allocation4], %s202
          %s204 = sand.u32 %s76, 1
          %s205 = smul.addr %s204, 8
          %s206 = scalar_lea.vmem [#allocation7], %s205
          %207 = dma.done %s203, 128
        $region48: #{tpu_custom_call.1} parent=43 // pred_fallthru
          _
      $region44: #{tpu_custom_call.1} parent=5 // pred_fallthru
        _
    $region6: #{tpu_custom_call.1} parent=1 // loop_footer
      %s19 = sadd.s32 1, %s15
    $region7: #{tpu_custom_call.1} parent=1 // loop_footer_branch
      %14 = sbr.rel target = $region3
    $region8: #{tpu_custom_call.1} parent=1 // loop_exit
      _
    %208 = vsyncpa [#allocation3], 1
    %s209 = scalar_lea.sflag [#allocation3], 1
    %210 = vsyncpa %s209, 1
    %211 = vsyncpa [#allocation6], 1
    %s212 = scalar_lea.sflag [#allocation6], 1
    %213 = vsyncpa %s212, 1
    %214 = vsyncpa [#allocation4], 1
    %s215 = scalar_lea.sflag [#allocation4], 1
    %216 = vsyncpa %s215, 1

// kernel: _large_mlp_forward_impl.1
$region0: #{_large_mlp_forward_impl.1}
  #allocation0 [shape = 'u32[]', space=smem, size = 0x4, offset = 0x4, fixed_abs, tag = 'smem constant byte address 0x4 - core index']
  #allocation1 [shape = 'u32[144,128]{1,0:T(1,128)}', space=vmem, size = 0x12000, scoped, tag = 'internal scratch']
  #allocation2 [shape = 'f32[256,512]{1,0:T(8,128)}', space=vmem, size = 0x80000, scoped, tag = 'scratch operand']
  %s0 = inlined_call_operand.vmem [shape: bf16[512,64], index: 0, kind: input, shape index: {}]
  %s1 = inlined_call_operand.vmem [shape: bf16[64,512], index: 1, kind: input, shape index: {}]
  %s2 = inlined_call_operand.vmem [shape: f32[1,512], index: 2, kind: input, shape index: {}]
  %s3 = inlined_call_operand.vmem [shape: bf16[512,256], index: 3, kind: input, shape index: {}]
  %s4 = inlined_call_operand.vmem [shape: f32[1,256], index: 4, kind: input, shape index: {}]
  %s5 = inlined_call_operand.vmem [shape: bf16[256,128], index: 5, kind: input, shape index: {}]
  %s6 = inlined_call_operand.vmem [shape: f32[1,128], index: 6, kind: input, shape index: {}]
  %s7 = inlined_call_operand.hbm [shape: bf16[128,128], index: 7, kind: input, shape index: {}]
  %s8 = inlined_call_operand.vmem [shape: f32[1,128], index: 8, kind: input, shape index: {}]
  %s9 = inlined_call_operand.hbm [shape: bf16[128,128], index: 9, kind: input, shape index: {}]
  %s10 = inlined_call_operand.vmem [shape: f32[1,128], index: 10, kind: input, shape index: {}]
  %s11 = inlined_call_operand.vmem [shape: bf16[512,128], index: 11, kind: output, shape index: {}]
  %s12 = sld [smem:[#allocation0]]
  $region93: #{_large_mlp_forward_impl.1} parent=0
    _
  %s14 = ssub.s32 1, %s12
  %s15 = scalar_select 0, %s14, %s12
  $region1: #{_large_mlp_forward_impl.1} parent=0
    #allocation3 [shape = 'u8[32768]{0}', space=vmem, size = 0x8000, scoped, tag = 'input window, operand 7, single buffered']
    #allocation4 [shape = 's32[2]{0}', space=sflag, size = 0x8, scoped, tag = 'scoped memory for _large_mlp_forward_impl.1']
    #allocation5 [shape = 'u8[32768]{0}', space=vmem, size = 0x8000, scoped, tag = 'input window, operand 9, single buffered']
    #allocation6 [shape = 's32[1]{0}', space=sflag, size = 0x4, scoped, tag = 'scoped memory for _large_mlp_forward_impl.1']
    %16 = vsyncpa [#allocation4], 0
    %17 = vsyncpa [#allocation6], 0
    loop: start=0, step=1, limit=4
    $region2: #{_large_mlp_forward_impl.1} parent=1 // loop_pre_header
      _
    $region3: #{_large_mlp_forward_impl.1} parent=1 // loop_header
      %s19 = sphi 0, %s23
      %p20 = scmp.ge.s32.totalorder %s19, 4
      %s26 = sphi 0, %s38
      %s27 = sphi 0, %s34
      %s28 = sphi 0, %s26
      %s29 = sphi 0, %s27
      %s30 = sphi 0, %s28
      %s31 = sphi 0, %s29
      %s43 = sphi 0, %s45
      %s46 = sphi 0, %s43
      %s47 = sphi 0, %s46
      %s63 = sphi 0, %s47
      %s67 = sphi 0, %s67
      %s69 = sphi 0, %s67
      %s70 = sphi 0, %s69
      %s84 = sphi 0, %s70
      %s88 = sphi 0, %s88
      %s90 = sphi 0, %s88
      %s91 = sphi 0, %s90
      %s105 = sphi 0, %s91
      %s109 = sphi 0, %s109
      %s111 = sphi 0, %s109
      %s112 = sphi 0, %s111
      %s126 = sphi 0, %s112
      %s130 = sphi 0, %s130
      %s132 = sphi 0, %s130
      %s133 = sphi 0, %s132
      %s147 = sphi 0, %s133
      %s151 = sphi 0, %s151
      %s153 = sphi 0, %s151
      %s154 = sphi 0, %s153
      %s168 = sphi 0, %s154
      %s172 = sphi 0, %s172
      %s174 = sphi 0, %s172
      %s175 = sphi 0, %s174
      %s189 = sphi 0, %s175
      %s193 = sphi 0, %s193
      %s195 = sphi 0, %s193
      %s196 = sphi 0, %s195
      %s210 = sphi 0, %s196
      %s214 = sphi 0, %s214
      %s216 = sphi 0, %s214
      %s217 = sphi 0, %s216
      %s231 = sphi 0, %s217
      %s235 = sphi 0, %s235
      %s237 = sphi 0, %s235
      %s238 = sphi 0, %s237
      %s252 = sphi 0, %s238
      %s256 = sphi 0, %s256
      %s258 = sphi 0, %s256
      %s259 = sphi 0, %s258
      %s273 = sphi 0, %s259
      %s279 = sphi 0, %s281
      %s282 = sphi 0, %s279
      %s283 = sphi 0, %s282
      %s299 = sphi 0, %s283
    $region4: #{_large_mlp_forward_impl.1} parent=1 // loop_header_branch
      %22 = sbr.rel (%p20) target = $region8
    $region5: #{_large_mlp_forward_impl.1} parent=1 // loop_body
      %s24 = ssub.s32 %s19, 1
      %s25 = ssub.s32 %s19, 2
      %s32 = sadd.s32 1, %s27
      %p33 = scmp.ge.s32.totalorder %s32, 1
      %s34 = scalar_select %p33, 0, %s32
      %s35 = sadd.s32 1, %s26
      %s36 = scalar_select %p33, %s35, %s26
      %p37 = scmp.ge.s32.totalorder %s36, 2
      %s38 = scalar_select %p37, 0, %s36
      %s39 = ssub.s32 %s26, %s38
      %s40 = ssub.s32 %s27, %s34
      %s41 = sor.u32 %s39, %s40
      %p42 = scmp.eq.s32.totalorder %s41, 0
      %s44 = sadd.s32 %s43, 1
      %s45 = scalar_select %p42, %s43, %s44
      %p48 = pneg %p42
      %p49 = scmp.eq.s32.totalorder %s19, 1
      %p50 = por %p48, %p49
      %p51 = scmp.ne.s32.totalorder %s43, %s46
      %p52 = scmp.eq.s32.totalorder %s19, 0
      %p53 = por %p51, %p52
      %p54 = scmp.ne.s32.totalorder %s43, %s46
      %p55 = scmp.eq.s32.totalorder %s24, 1
      %p56 = por %p54, %p55
      %p57 = scmp.ne.s32.totalorder %s46, %s47
      %p58 = scmp.eq.s32.totalorder %s24, 0
      %p59 = por %p57, %p58
      %p60 = scmp.ne.s32.totalorder %s46, %s47
      %p61 = scmp.eq.s32.totalorder %s25, 1
      %p62 = por %p60, %p61
      %p64 = scmp.ne.s32.totalorder %s47, %s63
      %p65 = scmp.eq.s32.totalorder %s25, 0
      %p66 = por %p64, %p65
      %s68 = sadd.s32 %s67, 1
      %p71 = scmp.eq.s32.totalorder %s19, 1
      %p72 = scmp.ne.s32.totalorder %s67, %s69
      %p73 = scmp.eq.s32.totalorder %s19, 0
      %p74 = por %p72, %p73
      %p75 = scmp.ne.s32.totalorder %s67, %s69
      %p76 = scmp.eq.s32.totalorder %s24, 1
      %p77 = por %p75, %p76
      %p78 = scmp.ne.s32.totalorder %s69, %s70
      %p79 = scmp.eq.s32.totalorder %s24, 0
      %p80 = por %p78, %p79
      %p81 = scmp.ne.s32.totalorder %s69, %s70
      %p82 = scmp.eq.s32.totalorder %s25, 1
      %p83 = por %p81, %p82
      %p85 = scmp.ne.s32.totalorder %s70, %s84
      %p86 = scmp.eq.s32.totalorder %s25, 0
      %p87 = por %p85, %p86
      %s89 = sadd.s32 %s88, 1
      %p92 = scmp.eq.s32.totalorder %s19, 1
      %p93 = scmp.ne.s32.totalorder %s88, %s90
      %p94 = scmp.eq.s32.totalorder %s19, 0
      %p95 = por %p93, %p94
      %p96 = scmp.ne.s32.totalorder %s88, %s90
      %p97 = scmp.eq.s32.totalorder %s24, 1
      %p98 = por %p96, %p97
      %p99 = scmp.ne.s32.totalorder %s90, %s91
      %p100 = scmp.eq.s32.totalorder %s24, 0
      %p101 = por %p99, %p100
      %p102 = scmp.ne.s32.totalorder %s90, %s91
      %p103 = scmp.eq.s32.totalorder %s25, 1
      %p104 = por %p102, %p103
      %p106 = scmp.ne.s32.totalorder %s91, %s105
      %p107 = scmp.eq.s32.totalorder %s25, 0
      %p108 = por %p106, %p107
      %s110 = sadd.s32 %s109, 1
      %p113 = scmp.eq.s32.totalorder %s19, 1
      %p114 = scmp.ne.s32.totalorder %s109, %s111
      %p115 = scmp.eq.s32.totalorder %s19, 0
      %p116 = por %p114, %p115
      %p117 = scmp.ne.s32.totalorder %s109, %s111
      %p118 = scmp.eq.s32.totalorder %s24, 1
      %p119 = por %p117, %p118
      %p120 = scmp.ne.s32.totalorder %s111, %s112
      %p121 = scmp.eq.s32.totalorder %s24, 0
      %p122 = por %p120, %p121
      %p123 = scmp.ne.s32.totalorder %s111, %s112
      %p124 = scmp.eq.s32.totalorder %s25, 1
      %p125 = por %p123, %p124
      %p127 = scmp.ne.s32.totalorder %s112, %s126
      %p128 = scmp.eq.s32.totalorder %s25, 0
      %p129 = por %p127, %p128
      %s131 = sadd.s32 %s130, 1
      %p134 = scmp.eq.s32.totalorder %s19, 1
      %p135 = scmp.ne.s32.totalorder %s130, %s132
      %p136 = scmp.eq.s32.totalorder %s19, 0
      %p137 = por %p135, %p136
      %p138 = scmp.ne.s32.totalorder %s130, %s132
      %p139 = scmp.eq.s32.totalorder %s24, 1
      %p140 = por %p138, %p139
      %p141 = scmp.ne.s32.totalorder %s132, %s133
      %p142 = scmp.eq.s32.totalorder %s24, 0
      %p143 = por %p141, %p142
      %p144 = scmp.ne.s32.totalorder %s132, %s133
      %p145 = scmp.eq.s32.totalorder %s25, 1
      %p146 = por %p144, %p145
      %p148 = scmp.ne.s32.totalorder %s133, %s147
      %p149 = scmp.eq.s32.totalorder %s25, 0
      %p150 = por %p148, %p149
      %s152 = sadd.s32 %s151, 1
      %p155 = scmp.eq.s32.totalorder %s19, 1
      %p156 = scmp.ne.s32.totalorder %s151, %s153
      %p157 = scmp.eq.s32.totalorder %s19, 0
      %p158 = por %p156, %p157
      %p159 = scmp.ne.s32.totalorder %s151, %s153
      %p160 = scmp.eq.s32.totalorder %s24, 1
      %p161 = por %p159, %p160
      %p162 = scmp.ne.s32.totalorder %s153, %s154
      %p163 = scmp.eq.s32.totalorder %s24, 0
      %p164 = por %p162, %p163
      %p165 = scmp.ne.s32.totalorder %s153, %s154
      %p166 = scmp.eq.s32.totalorder %s25, 1
      %p167 = por %p165, %p166
      %p169 = scmp.ne.s32.totalorder %s154, %s168
      %p170 = scmp.eq.s32.totalorder %s25, 0
      %p171 = por %p169, %p170
      %s173 = sadd.s32 %s172, 1
      %p176 = scmp.eq.s32.totalorder %s19, 1
      %p177 = scmp.ne.s32.totalorder %s172, %s174
      %p178 = scmp.eq.s32.totalorder %s19, 0
      %p179 = por %p177, %p178
      %p180 = scmp.ne.s32.totalorder %s172, %s174
      %p181 = scmp.eq.s32.totalorder %s24, 1
      %p182 = por %p180, %p181
      %p183 = scmp.ne.s32.totalorder %s174, %s175
      %p184 = scmp.eq.s32.totalorder %s24, 0
      %p185 = por %p183, %p184
      %p186 = scmp.ne.s32.totalorder %s174, %s175
      %p187 = scmp.eq.s32.totalorder %s25, 1
      %p188 = por %p186, %p187
      %p190 = scmp.ne.s32.totalorder %s175, %s189
      %p191 = scmp.eq.s32.totalorder %s25, 0
      %p192 = por %p190, %p191
      %s194 = sadd.s32 %s193, 1
      %p197 = scmp.eq.s32.totalorder %s19, 1
      %p198 = scmp.ne.s32.totalorder %s193, %s195
      %p199 = scmp.eq.s32.totalorder %s19, 0
      %p200 = por %p198, %p199
      %p201 = scmp.ne.s32.totalorder %s193, %s195
      %p202 = scmp.eq.s32.totalorder %s24, 1
      %p203 = por %p201, %p202
      %p204 = scmp.ne.s32.totalorder %s195, %s196
      %p205 = scmp.eq.s32.totalorder %s24, 0
      %p206 = por %p204, %p205
      %p207 = scmp.ne.s32.totalorder %s195, %s196
      %p208 = scmp.eq.s32.totalorder %s25, 1
      %p209 = por %p207, %p208
      %p211 = scmp.ne.s32.totalorder %s196, %s210
      %p212 = scmp.eq.s32.totalorder %s25, 0
      %p213 = por %p211, %p212
      %s215 = sadd.s32 %s214, 1
      %p218 = scmp.eq.s32.totalorder %s19, 1
      %p219 = scmp.ne.s32.totalorder %s214, %s216
      %p220 = scmp.eq.s32.totalorder %s19, 0
      %p221 = por %p219, %p220
      %p222 = scmp.ne.s32.totalorder %s214, %s216
      %p223 = scmp.eq.s32.totalorder %s24, 1
      %p224 = por %p222, %p223
      %p225 = scmp.ne.s32.totalorder %s216, %s217
      %p226 = scmp.eq.s32.totalorder %s24, 0
      %p227 = por %p225, %p226
      %p228 = scmp.ne.s32.totalorder %s216, %s217
      %p229 = scmp.eq.s32.totalorder %s25, 1
      %p230 = por %p228, %p229
      %p232 = scmp.ne.s32.totalorder %s217, %s231
      %p233 = scmp.eq.s32.totalorder %s25, 0
      %p234 = por %p232, %p233
      %s236 = sadd.s32 %s235, 1
      %p239 = scmp.eq.s32.totalorder %s19, 1
      %p240 = scmp.ne.s32.totalorder %s235, %s237
      %p241 = scmp.eq.s32.totalorder %s19, 0
      %p242 = por %p240, %p241
      %p243 = scmp.ne.s32.totalorder %s235, %s237
      %p244 = scmp.eq.s32.totalorder %s24, 1
      %p245 = por %p243, %p244
      %p246 = scmp.ne.s32.totalorder %s237, %s238
      %p247 = scmp.eq.s32.totalorder %s24, 0
      %p248 = por %p246, %p247
      %p249 = scmp.ne.s32.totalorder %s237, %s238
      %p250 = scmp.eq.s32.totalorder %s25, 1
      %p251 = por %p249, %p250
      %p253 = scmp.ne.s32.totalorder %s238, %s252
      %p254 = scmp.eq.s32.totalorder %s25, 0
      %p255 = por %p253, %p254
      %s257 = sadd.s32 %s256, 1
      %p260 = scmp.eq.s32.totalorder %s19, 1
      %p261 = scmp.ne.s32.totalorder %s256, %s258
      %p262 = scmp.eq.s32.totalorder %s19, 0
      %p263 = por %p261, %p262
      %p264 = scmp.ne.s32.totalorder %s256, %s258
      %p265 = scmp.eq.s32.totalorder %s24, 1
      %p266 = por %p264, %p265
      %p267 = scmp.ne.s32.totalorder %s258, %s259
      %p268 = scmp.eq.s32.totalorder %s24, 0
      %p269 = por %p267, %p268
      %p270 = scmp.ne.s32.totalorder %s258, %s259
      %p271 = scmp.eq.s32.totalorder %s25, 1
      %p272 = por %p270, %p271
      %p274 = scmp.ne.s32.totalorder %s259, %s273
      %p275 = scmp.eq.s32.totalorder %s25, 0
      %p276 = por %p274, %p275
      %s277 = ssub.s32 %s26, %s38
      %p278 = scmp.eq.s32.totalorder %s277, 0
      %s280 = sadd.s32 %s279, 1
      %s281 = scalar_select %p278, %s279, %s280
      %p284 = pneg %p278
      %p285 = scmp.eq.s32.totalorder %s19, 1
      %p286 = por %p284, %p285
      %p287 = scmp.ne.s32.totalorder %s279, %s282
      %p288 = scmp.eq.s32.totalorder %s19, 0
      %p289 = por %p287, %p288
      %p290 = scmp.ne.s32.totalorder %s279, %s282
      %p291 = scmp.eq.s32.totalorder %s24, 1
      %p292 = por %p290, %p291
      %p293 = scmp.ne.s32.totalorder %s282, %s283
      %p294 = scmp.eq.s32.totalorder %s24, 0
      %p295 = por %p293, %p294
      %p296 = scmp.ne.s32.totalorder %s282, %s283
      %p297 = scmp.eq.s32.totalorder %s25, 1
      %p298 = por %p296, %p297
      %p300 = scmp.ne.s32.totalorder %s283, %s299
      %p301 = scmp.eq.s32.totalorder %s25, 0
      %p302 = por %p300, %p301
      %p303 = scmp.le.s32.totalorder 1, %s19
      %p304 = scmp.lt.s32.totalorder %s19, 3
      %p305 = pnand %p303, %p304
      %p306 = pneg %p305
      // Predicated region
      $region9: #{_large_mlp_forward_impl.1} parent=5 // pred_check
        _
      $region10: #{_large_mlp_forward_impl.1} parent=5 // pred_check_branch
        %308 = sbr.rel (%p305) target = $region12
      $region11: #{_large_mlp_forward_impl.1} parent=5 // pred_region
        %s309 = ssub.s32 %s19, 1
        // Predicated region
        $region13: #{_large_mlp_forward_impl.1} parent=11 // pred_check
          %p310 = pneg %p80
        $region14: #{_large_mlp_forward_impl.1} parent=11 // pred_check_branch
          %312 = sbr.rel (%p310) target = $region16
        $region15: #{_large_mlp_forward_impl.1} parent=11 // pred_region
          _
        $region16: #{_large_mlp_forward_impl.1} parent=11 // pred_fallthru
          _
        // Predicated region
        $region17: #{_large_mlp_forward_impl.1} parent=11 // pred_check
          %p313 = pneg %p101
        $region18: #{_large_mlp_forward_impl.1} parent=11 // pred_check_branch
          %315 = sbr.rel (%p313) target = $region20
        $region19: #{_large_mlp_forward_impl.1} parent=11 // pred_region
          _
        $region20: #{_large_mlp_forward_impl.1} parent=11 // pred_fallthru
          _
        // Predicated region
        $region21: #{_large_mlp_forward_impl.1} parent=11 // pred_check
          %p316 = pneg %p122
        $region22: #{_large_mlp_forward_impl.1} parent=11 // pred_check_branch
          %318 = sbr.rel (%p316) target = $region24
        $region23: #{_large_mlp_forward_impl.1} parent=11 // pred_region
          _
        $region24: #{_large_mlp_forward_impl.1} parent=11 // pred_fallthru
          _
        // Predicated region
        $region25: #{_large_mlp_forward_impl.1} parent=11 // pred_check
          %p319 = pneg %p143
        $region26: #{_large_mlp_forward_impl.1} parent=11 // pred_check_branch
          %321 = sbr.rel (%p319) target = $region28
        $region27: #{_large_mlp_forward_impl.1} parent=11 // pred_region
          _
        $region28: #{_large_mlp_forward_impl.1} parent=11 // pred_fallthru
          _
        // Predicated region
        $region29: #{_large_mlp_forward_impl.1} parent=11 // pred_check
          %p322 = pneg %p164
        $region30: #{_large_mlp_forward_impl.1} parent=11 // pred_check_branch
          %324 = sbr.rel (%p322) target = $region32
        $region31: #{_large_mlp_forward_impl.1} parent=11 // pred_region
          _
        $region32: #{_large_mlp_forward_impl.1} parent=11 // pred_fallthru
          _
        // Predicated region
        $region33: #{_large_mlp_forward_impl.1} parent=11 // pred_check
          %p325 = pneg %p185
        $region34: #{_large_mlp_forward_impl.1} parent=11 // pred_check_branch
          %327 = sbr.rel (%p325) target = $region36
        $region35: #{_large_mlp_forward_impl.1} parent=11 // pred_region
          _
        $region36: #{_large_mlp_forward_impl.1} parent=11 // pred_fallthru
          _
        // Predicated region
        $region37: #{_large_mlp_forward_impl.1} parent=11 // pred_check
          %p328 = pneg %p206
        $region38: #{_large_mlp_forward_impl.1} parent=11 // pred_check_branch
          %330 = sbr.rel (%p328) target = $region40
        $region39: #{_large_mlp_forward_impl.1} parent=11 // pred_region
          %s332 = ssub.s32 1024, 1024
          %333 = vsyncadd [#allocation4], %s332
          %s334 = sshll.u32 [#allocation3], 4
          %s335 = int_to_ptr.vmem [resolvable:$true] %s334
          %340 = dma.hbm_to_vmem [thread:$0]  %s7, 1024, %s335, [#allocation4], 64, 64, 4
        $region40: #{_large_mlp_forward_impl.1} parent=11 // pred_fallthru
          _
        // Predicated region
        $region41: #{_large_mlp_forward_impl.1} parent=11 // pred_check
          %p341 = pneg %p227
        $region42: #{_large_mlp_forward_impl.1} parent=11 // pred_check_branch
          %343 = sbr.rel (%p341) target = $region44
        $region43: #{_large_mlp_forward_impl.1} parent=11 // pred_region
          _
        $region44: #{_large_mlp_forward_impl.1} parent=11 // pred_fallthru
          _
        // Predicated region
        $region45: #{_large_mlp_forward_impl.1} parent=11 // pred_check
          %p344 = pneg %p248
        $region46: #{_large_mlp_forward_impl.1} parent=11 // pred_check_branch
          %346 = sbr.rel (%p344) target = $region48
        $region47: #{_large_mlp_forward_impl.1} parent=11 // pred_region
          %s348 = ssub.s32 1024, 1024
          %349 = vsyncadd [#allocation6], %s348
          %s350 = sshll.u32 [#allocation5], 4
          %s351 = int_to_ptr.vmem [resolvable:$true] %s350
          %356 = dma.hbm_to_vmem [thread:$0]  %s9, 1024, %s351, [#allocation6], 64, 64, 4
        $region48: #{_large_mlp_forward_impl.1} parent=11 // pred_fallthru
          _
        // Predicated region
        $region49: #{_large_mlp_forward_impl.1} parent=11 // pred_check
          %p357 = pneg %p269
        $region50: #{_large_mlp_forward_impl.1} parent=11 // pred_check_branch
          %359 = sbr.rel (%p357) target = $region52
        $region51: #{_large_mlp_forward_impl.1} parent=11 // pred_region
          _
        $region52: #{_large_mlp_forward_impl.1} parent=11 // pred_fallthru
          _
      $region12: #{_large_mlp_forward_impl.1} parent=5 // pred_fallthru
        _
      %p360 = scmp.lt.s32.totalorder %s19, 2
      // Predicated region
      $region53: #{_large_mlp_forward_impl.1} parent=5 // pred_check
        %p361 = pneg %p360
      $region54: #{_large_mlp_forward_impl.1} parent=5 // pred_check_branch
        %363 = sbr.rel (%p361) target = $region56
      $region55: #{_large_mlp_forward_impl.1} parent=5 // pred_region
        // Predicated region
        $region57: #{_large_mlp_forward_impl.1} parent=55 // pred_check
          %p364 = pneg %p53
        $region58: #{_large_mlp_forward_impl.1} parent=55 // pred_check_branch
          %366 = sbr.rel (%p364) target = $region60
        $region59: #{_large_mlp_forward_impl.1} parent=55 // pred_region
          %s367 = smul.u32 32, %s26
          %p368 = scmp.lt.s32.totalorder %s367, 63
          %s369 = scalar_select %p368, %s367, 63
          %p370 = scmp.lt.s32.totalorder %s27, 0
          %s371 = scalar_select %p370, %s27, 0
          %s372 = sadd.s32 %s371, %s369
          %s373 = smul.addr %s372, 4
          %s374 = scalar_lea.vmem %s0, %s373
          %s375 = smul.u32 32, %s26
        $region60: #{_large_mlp_forward_impl.1} parent=55 // pred_fallthru
          _
      $region56: #{_large_mlp_forward_impl.1} parent=5 // pred_fallthru
        _
      %p376 = scmp.le.s32.totalorder 1, %s19
      %p377 = scmp.lt.s32.totalorder %s19, 3
      %p378 = pnand %p376, %p377
      %p379 = pneg %p378
      // Predicated region
      $region61: #{_large_mlp_forward_impl.1} parent=5 // pred_check
        _
      $region62: #{_large_mlp_forward_impl.1} parent=5 // pred_check_branch
        %381 = sbr.rel (%p378) target = $region64
      $region63: #{_large_mlp_forward_impl.1} parent=5 // pred_region
        %s382 = ssub.s32 %s19, 1
        // Predicated region
        $region65: #{_large_mlp_forward_impl.1} parent=63 // pred_check
          %p383 = pneg %p206
        $region66: #{_large_mlp_forward_impl.1} parent=63 // pred_check_branch
          %385 = sbr.rel (%p383) target = $region68
        $region67: #{_large_mlp_forward_impl.1} parent=63 // pred_region
          %386 = dma.done [#allocation4], 1024
        $region68: #{_large_mlp_forward_impl.1} parent=63 // pred_fallthru
          _
        // Predicated region
        $region69: #{_large_mlp_forward_impl.1} parent=63 // pred_check
          %p387 = pneg %p248
        $region70: #{_large_mlp_forward_impl.1} parent=63 // pred_check_branch
          %389 = sbr.rel (%p387) target = $region72
        $region71: #{_large_mlp_forward_impl.1} parent=63 // pred_region
          %390 = dma.done [#allocation6], 1024
        $region72: #{_large_mlp_forward_impl.1} parent=63 // pred_fallthru
          _
        %s391 = smul.u32 32, %s28
        %p392 = scmp.lt.s32.totalorder %s391, 63
        %s393 = scalar_select %p392, %s391, 63
        %p394 = scmp.lt.s32.totalorder %s29, 0
        %s395 = scalar_select %p394, %s29, 0
        %s396 = sadd.s32 %s395, %s393
        %s397 = smul.addr %s396, 4
        %s398 = scalar_lea.vmem %s0, %s397
        %p399 = pneg %p59
        %p400 = pneg %p56
        %p401 = pneg %p80
        %p402 = pneg %p77
        %p403 = pneg %p101
        %p404 = pneg %p98
        %p405 = pneg %p122
        %p406 = pneg %p119
        %p407 = pneg %p143
        %p408 = pneg %p140
        %p409 = pneg %p164
        %p410 = pneg %p161
        %p411 = pneg %p185
        %p412 = pneg %p182
        %p413 = pneg %p206
        %p414 = pneg %p203
        %p415 = pneg %p227
        %p416 = pneg %p224
        %p417 = pneg %p248
        %p418 = pneg %p245
        %p419 = pneg %p269
        %p420 = pneg %p266
        %p421 = pneg %p295
        %p422 = pneg %p292
        %s423 = smul.u32 32, %s28
        %p424 = scmp.lt.s32.totalorder %s423, 63
        %s425 = scalar_select %p424, %s423, 63
        %s426 = smul.addr %s425, 4
        %s427 = scalar_lea.vmem %s11, %s426
        %s428 = smul.u32 32, %s28
        %p429 = scmp.lt.s32.totalorder %s428, 63
        %s430 = scalar_select %p429, %s428, 63
        %p431 = scmp.lt.s32.totalorder %s29, 0
        %s432 = scalar_select %p431, %s29, 0
        %s433 = sadd.s32 %s432, %s430
        %s434 = smul.addr %s433, 4
        %s435 = scalar_lea.vmem %s0, %s434
        %s436 = smul.u32 32, %s28
        %s437 = smul.u32 32, %s28
        %p438 = scmp.lt.s32.totalorder %s437, 63
        %s439 = scalar_select %p438, %s437, 63
        %s440 = smul.addr %s439, 4
        %s441 = scalar_lea.vmem %s11, %s440
        %s442 = smul.u32 32, %s28
        %p444 = scmp.eq.s32.totalorder %s29, 0
        // Predicated region
        $region73: #{_large_mlp_forward_impl.1} parent=63 // pred_check
          %p445 = pneg %p444
        $region74: #{_large_mlp_forward_impl.1} parent=63 // pred_check_branch
          %447 = sbr.rel (%p445) target = $region76
        $region75: #{_large_mlp_forward_impl.1} parent=63 // pred_region
          %448 = vst [vmem:[#allocation2] sm:$0xff] 0.0
          %449 = vst [vmem:[#allocation2 + $0x8] sm:$0xff] 0.0
          %450 = vst [vmem:[#allocation2 + $0x10] sm:$0xff] 0.0
          %451 = vst [vmem:[#allocation2 + $0x18] sm:$0xff] 0.0
          %452 = vst [vmem:[#allocation2 + $0x20] sm:$0xff] 0.0
          %453 = vst [vmem:[#allocation2 + $0x28] sm:$0xff] 0.0
          %454 = vst [vmem:[#allocation2 + $0x30] sm:$0xff] 0.0
          %455 = vst [vmem:[#allocation2 + $0x38] sm:$0xff] 0.0
          %456 = vst [vmem:[#allocation2 + $0x40] sm:$0xff] 0.0
          %457 = vst [vmem:[#allocation2 + $0x48] sm:$0xff] 0.0
          %458 = vst [vmem:[#allocation2 + $0x50] sm:$0xff] 0.0
          %459 = vst [vmem:[#allocation2 + $0x58] sm:$0xff] 0.0
          %460 = vst [vmem:[#allocation2 + $0x60] sm:$0xff] 0.0
          %461 = vst [vmem:[#allocation2 + $0x68] sm:$0xff] 0.0
          %462 = vst [vmem:[#allocation2 + $0x70] sm:$0xff] 0.0
          %463 = vst [vmem:[#allocation2 + $0x78] sm:$0xff] 0.0
          %464 = vst [vmem:[#allocation2 + $0x80] sm:$0xff] 0.0
          %465 = vst [vmem:[#allocation2 + $0x88] sm:$0xff] 0.0
          %466 = vst [vmem:[#allocation2 + $0x90] sm:$0xff] 0.0
          %467 = vst [vmem:[#allocation2 + $0x98] sm:$0xff] 0.0
          %468 = vst [vmem:[#allocation2 + $0xa0] sm:$0xff] 0.0
          %469 = vst [vmem:[#allocation2 + $0xa8] sm:$0xff] 0.0
          %470 = vst [vmem:[#allocation2 + $0xb0] sm:$0xff] 0.0
          %471 = vst [vmem:[#allocation2 + $0xb8] sm:$0xff] 0.0
          %472 = vst [vmem:[#allocation2 + $0xc0] sm:$0xff] 0.0
          %473 = vst [vmem:[#allocation2 + $0xc8] sm:$0xff] 0.0
          %474 = vst [vmem:[#allocation2 + $0xd0] sm:$0xff] 0.0
          %475 = vst [vmem:[#allocation2 + $0xd8] sm:$0xff] 0.0
          %476 = vst [vmem:[#allocation2 + $0xe0] sm:$0xff] 0.0
          %477 = vst [vmem:[#allocation2 + $0xe8] sm:$0xff] 0.0
          %478 = vst [vmem:[#allocation2 + $0xf0] sm:$0xff] 0.0
          %479 = vst [vmem:[#allocation2 + $0xf8] sm:$0xff] 0.0
          %480 = vst [vmem:[#allocation2 + $0x100] sm:$0xff] 0.0
          %481 = vst [vmem:[#allocation2 + $0x108] sm:$0xff] 0.0
          %482 = vst [vmem:[#allocation2 + $0x110] sm:$0xff] 0.0
          %483 = vst [vmem:[#allocation2 + $0x118] sm:$0xff] 0.0
          %484 = vst [vmem:[#allocation2 + $0x120] sm:$0xff] 0.0
          %485 = vst [vmem:[#allocation2 + $0x128] sm:$0xff] 0.0
          %486 = vst [vmem:[#allocation2 + $0x130] sm:$0xff] 0.0
          %487 = vst [vmem:[#allocation2 + $0x138] sm:$0xff] 0.0
          %488 = vst [vmem:[#allocation2 + $0x140] sm:$0xff] 0.0
          %489 = vst [vmem:[#allocation2 + $0x148] sm:$0xff] 0.0
          %490 = vst [vmem:[#allocation2 + $0x150] sm:$0xff] 0.0
          %491 = vst [vmem:[#allocation2 + $0x158] sm:$0xff] 0.0
          %492 = vst [vmem:[#allocation2 + $0x160] sm:$0xff] 0.0
          %493 = vst [vmem:[#allocation2 + $0x168] sm:$0xff] 0.0
          %494 = vst [vmem:[#allocation2 + $0x170] sm:$0xff] 0.0
          %495 = vst [vmem:[#allocation2 + $0x178] sm:$0xff] 0.0
          %496 = vst [vmem:[#allocation2 + $0x180] sm:$0xff] 0.0
          %497 = vst [vmem:[#allocation2 + $0x188] sm:$0xff] 0.0
          %498 = vst [vmem:[#allocation2 + $0x190] sm:$0xff] 0.0
          %499 = vst [vmem:[#allocation2 + $0x198] sm:$0xff] 0.0
          %500 = vst [vmem:[#allocation2 + $0x1a0] sm:$0xff] 0.0
          %501 = vst [vmem:[#allocation2 + $0x1a8] sm:$0xff] 0.0
          %502 = vst [vmem:[#allocation2 + $0x1b0] sm:$0xff] 0.0
          %503 = vst [vmem:[#allocation2 + $0x1b8] sm:$0xff] 0.0
          %504 = vst [vmem:[#allocation2 + $0x1c0] sm:$0xff] 0.0
          %505 = vst [vmem:[#allocation2 + $0x1c8] sm:$0xff] 0.0
          %506 = vst [vmem:[#allocation2 + $0x1d0] sm:$0xff] 0.0
          %507 = vst [vmem:[#allocation2 + $0x1d8] sm:$0xff] 0.0
          %508 = vst [vmem:[#allocation2 + $0x1e0] sm:$0xff] 0.0
          %509 = vst [vmem:[#allocation2 + $0x1e8] sm:$0xff] 0.0
          %510 = vst [vmem:[#allocation2 + $0x1f0] sm:$0xff] 0.0
          %511 = vst [vmem:[#allocation2 + $0x1f8] sm:$0xff] 0.0
          %512 = vst [vmem:[#allocation2 + $0x200] sm:$0xff] 0.0
          %513 = vst [vmem:[#allocation2 + $0x208] sm:$0xff] 0.0
          %514 = vst [vmem:[#allocation2 + $0x210] sm:$0xff] 0.0
          %515 = vst [vmem:[#allocation2 + $0x218] sm:$0xff] 0.0
          %516 = vst [vmem:[#allocation2 + $0x220] sm:$0xff] 0.0
          %517 = vst [vmem:[#allocation2 + $0x228] sm:$0xff] 0.0
          %518 = vst [vmem:[#allocation2 + $0x230] sm:$0xff] 0.0
          %519 = vst [vmem:[#allocation2 + $0x238] sm:$0xff] 0.0
          %520 = vst [vmem:[#allocation2 + $0x240] sm:$0xff] 0.0
          %521 = vst [vmem:[#allocation2 + $0x248] sm:$0xff] 0.0
          %522 = vst [vmem:[#allocation2 + $0x250] sm:$0xff] 0.0
          %523 = vst [vmem:[#allocation2 + $0x258] sm:$0xff] 0.0
          %524 = vst [vmem:[#allocation2 + $0x260] sm:$0xff] 0.0
          %525 = vst [vmem:[#allocation2 + $0x268] sm:$0xff] 0.0
          %526 = vst [vmem:[#allocation2 + $0x270] sm:$0xff] 0.0
          %527 = vst [vmem:[#allocation2 + $0x278] sm:$0xff] 0.0
          %528 = vst [vmem:[#allocation2 + $0x280] sm:$0xff] 0.0
          %529 = vst [vmem:[#allocation2 + $0x288] sm:$0xff] 0.0
          %530 = vst [vmem:[#allocation2 + $0x290] sm:$0xff] 0.0
          %531 = vst [vmem:[#allocation2 + $0x298] sm:$0xff] 0.0
          %532 = vst [vmem:[#allocation2 + $0x2a0] sm:$0xff] 0.0
          %533 = vst [vmem:[#allocation2 + $0x2a8] sm:$0xff] 0.0
          %534 = vst [vmem:[#allocation2 + $0x2b0] sm:$0xff] 0.0
          %535 = vst [vmem:[#allocation2 + $0x2b8] sm:$0xff] 0.0
          %536 = vst [vmem:[#allocation2 + $0x2c0] sm:$0xff] 0.0
          %537 = vst [vmem:[#allocation2 + $0x2c8] sm:$0xff] 0.0
          %538 = vst [vmem:[#allocation2 + $0x2d0] sm:$0xff] 0.0
          %539 = vst [vmem:[#allocation2 + $0x2d8] sm:$0xff] 0.0
          %540 = vst [vmem:[#allocation2 + $0x2e0] sm:$0xff] 0.0
          %541 = vst [vmem:[#allocation2 + $0x2e8] sm:$0xff] 0.0
          %542 = vst [vmem:[#allocation2 + $0x2f0] sm:$0xff] 0.0
          %543 = vst [vmem:[#allocation2 + $0x2f8] sm:$0xff] 0.0
          %544 = vst [vmem:[#allocation2 + $0x300] sm:$0xff] 0.0
          %545 = vst [vmem:[#allocation2 + $0x308] sm:$0xff] 0.0
          %546 = vst [vmem:[#allocation2 + $0x310] sm:$0xff] 0.0
          %547 = vst [vmem:[#allocation2 + $0x318] sm:$0xff] 0.0
          %548 = vst [vmem:[#allocation2 + $0x320] sm:$0xff] 0.0
          %549 = vst [vmem:[#allocation2 + $0x328] sm:$0xff] 0.0
          %550 = vst [vmem:[#allocation2 + $0x330] sm:$0xff] 0.0
          %551 = vst [vmem:[#allocation2 + $0x338] sm:$0xff] 0.0
          %552 = vst [vmem:[#allocation2 + $0x340] sm:$0xff] 0.0
          %553 = vst [vmem:[#allocation2 + $0x348] sm:$0xff] 0.0
          %554 = vst [vmem:[#allocation2 + $0x350] sm:$0xff] 0.0
          %555 = vst [vmem:[#allocation2 + $0x358] sm:$0xff] 0.0
          %556 = vst [vmem:[#allocation2 + $0x360] sm:$0xff] 0.0
          %557 = vst [vmem:[#allocation2 + $0x368] sm:$0xff] 0.0
          %558 = vst [vmem:[#allocation2 + $0x370] sm:$0xff] 0.0
          %559 = vst [vmem:[#allocation2 + $0x378] sm:$0xff] 0.0
          %560 = vst [vmem:[#allocation2 + $0x380] sm:$0xff] 0.0
          %561 = vst [vmem:[#allocation2 + $0x388] sm:$0xff] 0.0
          %562 = vst [vmem:[#allocation2 + $0x390] sm:$0xff] 0.0
          %563 = vst [vmem:[#allocation2 + $0x398] sm:$0xff] 0.0
          %564 = vst [vmem:[#allocation2 + $0x3a0] sm:$0xff] 0.0
          %565 = vst [vmem:[#allocation2 + $0x3a8] sm:$0xff] 0.0
          %566 = vst [vmem:[#allocation2 + $0x3b0] sm:$0xff] 0.0
          %567 = vst [vmem:[#allocation2 + $0x3b8] sm:$0xff] 0.0
          %568 = vst [vmem:[#allocation2 + $0x3c0] sm:$0xff] 0.0
          %569 = vst [vmem:[#allocation2 + $0x3c8] sm:$0xff] 0.0
          %570 = vst [vmem:[#allocation2 + $0x3d0] sm:$0xff] 0.0
          %571 = vst [vmem:[#allocation2 + $0x3d8] sm:$0xff] 0.0
          %572 = vst [vmem:[#allocation2 + $0x3e0] sm:$0xff] 0.0
          %573 = vst [vmem:[#allocation2 + $0x3e8] sm:$0xff] 0.0
          %574 = vst [vmem:[#allocation2 + $0x3f0] sm:$0xff] 0.0
          %575 = vst [vmem:[#allocation2 + $0x3f8] sm:$0xff] 0.0
        $region76: #{_large_mlp_forward_impl.1} parent=63 // pred_fallthru
          _
        %v576 = vld [vmem:[#allocation2] sm:$0xff]
        %v577 = vld [vmem:[#allocation2 + $0x8] sm:$0xff]
        %v578 = vld [vmem:[#allocation2 + $0x10] sm:$0xff]
        %v579 = vld [vmem:[#allocation2 + $0x18] sm:$0xff]
        %v580 = vld [vmem:[#allocation2 + $0x20] sm:$0xff]
        %v581 = vld [vmem:[#allocation2 + $0x28] sm:$0xff]
        %v582 = vld [vmem:[#allocation2 + $0x30] sm:$0xff]
        %v583 = vld [vmem:[#allocation2 + $0x38] sm:$0xff]
        %v584 = vld [vmem:[#allocation2 + $0x40] sm:$0xff]
        %v585 = vld [vmem:[#allocation2 + $0x48] sm:$0xff]
        %v586 = vld [vmem:[#allocation2 + $0x50] sm:$0xff]
        %v587 = vld [vmem:[#allocation2 + $0x58] sm:$0xff]
        %v588 = vld [vmem:[#allocation2 + $0x60] sm:$0xff]
        %v589 = vld [vmem:[#allocation2 + $0x68] sm:$0xff]
        %v590 = vld [vmem:[#allocation2 + $0x70] sm:$0xff]
        %v591 = vld [vmem:[#allocation2 + $0x78] sm:$0xff]
        %v592 = vld [vmem:[#allocation2 + $0x80] sm:$0xff]
        %v593 = vld [vmem:[#allocation2 + $0x88] sm:$0xff]
        %v594 = vld [vmem:[#allocation2 + $0x90] sm:$0xff]
        %v595 = vld [vmem:[#allocation2 + $0x98] sm:$0xff]
        %v596 = vld [vmem:[#allocation2 + $0xa0] sm:$0xff]
        %v597 = vld [vmem:[#allocation2 + $0xa8] sm:$0xff]
        %v598 = vld [vmem:[#allocation2 + $0xb0] sm:$0xff]
        %v599 = vld [vmem:[#allocation2 + $0xb8] sm:$0xff]
        %v600 = vld [vmem:[#allocation2 + $0xc0] sm:$0xff]
        %v601 = vld [vmem:[#allocation2 + $0xc8] sm:$0xff]
        %v602 = vld [vmem:[#allocation2 + $0xd0] sm:$0xff]
        %v603 = vld [vmem:[#allocation2 + $0xd8] sm:$0xff]
        %v604 = vld [vmem:[#allocation2 + $0xe0] sm:$0xff]
        %v605 = vld [vmem:[#allocation2 + $0xe8] sm:$0xff]
        %v606 = vld [vmem:[#allocation2 + $0xf0] sm:$0xff]
        %v607 = vld [vmem:[#allocation2 + $0xf8] sm:$0xff]
        %v608 = vld [vmem:[#allocation2 + $0x100] sm:$0xff]
        %v609 = vld [vmem:[#allocation2 + $0x108] sm:$0xff]
        %v610 = vld [vmem:[#allocation2 + $0x110] sm:$0xff]
        %v611 = vld [vmem:[#allocation2 + $0x118] sm:$0xff]
        %v612 = vld [vmem:[#allocation2 + $0x120] sm:$0xff]
        %v613 = vld [vmem:[#allocation2 + $0x128] sm:$0xff]
        %v614 = vld [vmem:[#allocation2 + $0x130] sm:$0xff]
        %v615 = vld [vmem:[#allocation2 + $0x138] sm:$0xff]
        %v616 = vld [vmem:[#allocation2 + $0x140] sm:$0xff]
        %v617 = vld [vmem:[#allocation2 + $0x148] sm:$0xff]
        %v618 = vld [vmem:[#allocation2 + $0x150] sm:$0xff]
        %v619 = vld [vmem:[#allocation2 + $0x158] sm:$0xff]
        %v620 = vld [vmem:[#allocation2 + $0x160] sm:$0xff]
        %v621 = vld [vmem:[#allocation2 + $0x168] sm:$0xff]
        %v622 = vld [vmem:[#allocation2 + $0x170] sm:$0xff]
        %v623 = vld [vmem:[#allocation2 + $0x178] sm:$0xff]
        %v624 = vld [vmem:[#allocation2 + $0x180] sm:$0xff]
        %v625 = vld [vmem:[#allocation2 + $0x188] sm:$0xff]
        %v626 = vld [vmem:[#allocation2 + $0x190] sm:$0xff]
        %v627 = vld [vmem:[#allocation2 + $0x198] sm:$0xff]
        %v628 = vld [vmem:[#allocation2 + $0x1a0] sm:$0xff]
        %v629 = vld [vmem:[#allocation2 + $0x1a8] sm:$0xff]
        %v630 = vld [vmem:[#allocation2 + $0x1b0] sm:$0xff]
        %v631 = vld [vmem:[#allocation2 + $0x1b8] sm:$0xff]
        %v632 = vld [vmem:[#allocation2 + $0x1c0] sm:$0xff]
        %v633 = vld [vmem:[#allocation2 + $0x1c8] sm:$0xff]
        %v634 = vld [vmem:[#allocation2 + $0x1d0] sm:$0xff]
        %v635 = vld [vmem:[#allocation2 + $0x1d8] sm:$0xff]
        %v636 = vld [vmem:[#allocation2 + $0x1e0] sm:$0xff]
        %v637 = vld [vmem:[#allocation2 + $0x1e8] sm:$0xff]
        %v638 = vld [vmem:[#allocation2 + $0x1f0] sm:$0xff]
        %v639 = vld [vmem:[#allocation2 + $0x1f8] sm:$0xff]
        %v640 = vld [vmem:[#allocation2 + $0x200] sm:$0xff]
        %v641 = vld [vmem:[#allocation2 + $0x208] sm:$0xff]
        %v642 = vld [vmem:[#allocation2 + $0x210] sm:$0xff]
        %v643 = vld [vmem:[#allocation2 + $0x218] sm:$0xff]
        %v644 = vld [vmem:[#allocation2 + $0x220] sm:$0xff]
        %v645 = vld [vmem:[#allocation2 + $0x228] sm:$0xff]
        %v646 = vld [vmem:[#allocation2 + $0x230] sm:$0xff]
        %v647 = vld [vmem:[#allocation2 + $0x238] sm:$0xff]
        %v648 = vld [vmem:[#allocation2 + $0x240] sm:$0xff]
        %v649 = vld [vmem:[#allocation2 + $0x248] sm:$0xff]
        %v650 = vld [vmem:[#allocation2 + $0x250] sm:$0xff]
        %v651 = vld [vmem:[#allocation2 + $0x258] sm:$0xff]
        %v652 = vld [vmem:[#allocation2 + $0x260] sm:$0xff]
        %v653 = vld [vmem:[#allocation2 + $0x268] sm:$0xff]
        %v654 = vld [vmem:[#allocation2 + $0x270] sm:$0xff]
        %v655 = vld [vmem:[#allocation2 + $0x278] sm:$0xff]
        %v656 = vld [vmem:[#allocation2 + $0x280] sm:$0xff]
        %v657 = vld [vmem:[#allocation2 + $0x288] sm:$0xff]
        %v658 = vld [vmem:[#allocation2 + $0x290] sm:$0xff]
        %v659 = vld [vmem:[#allocation2 + $0x298] sm:$0xff]
        %v660 = vld [vmem:[#allocation2 + $0x2a0] sm:$0xff]
        %v661 = vld [vmem:[#allocation2 + $0x2a8] sm:$0xff]
        %v662 = vld [vmem:[#allocation2 + $0x2b0] sm:$0xff]
        %v663 = vld [vmem:[#allocation2 + $0x2b8] sm:$0xff]
        %v664 = vld [vmem:[#allocation2 + $0x2c0] sm:$0xff]
        %v665 = vld [vmem:[#allocation2 + $0x2c8] sm:$0xff]
        %v666 = vld [vmem:[#allocation2 + $0x2d0] sm:$0xff]
        %v667 = vld [vmem:[#allocation2 + $0x2d8] sm:$0xff]
        %v668 = vld [vmem:[#allocation2 + $0x2e0] sm:$0xff]
        %v669 = vld [vmem:[#allocation2 + $0x2e8] sm:$0xff]
        %v670 = vld [vmem:[#allocation2 + $0x2f0] sm:$0xff]
        %v671 = vld [vmem:[#allocation2 + $0x2f8] sm:$0xff]
        %v672 = vld [vmem:[#allocation2 + $0x300] sm:$0xff]
        %v673 = vld [vmem:[#allocation2 + $0x308] sm:$0xff]
        %v674 = vld [vmem:[#allocation2 + $0x310] sm:$0xff]
        %v675 = vld [vmem:[#allocation2 + $0x318] sm:$0xff]
        %v676 = vld [vmem:[#allocation2 + $0x320] sm:$0xff]
        %v677 = vld [vmem:[#allocation2 + $0x328] sm:$0xff]
        %v678 = vld [vmem:[#allocation2 + $0x330] sm:$0xff]
        %v679 = vld [vmem:[#allocation2 + $0x338] sm:$0xff]
        %v680 = vld [vmem:[#allocation2 + $0x340] sm:$0xff]
        %v681 = vld [vmem:[#allocation2 + $0x348] sm:$0xff]
        %v682 = vld [vmem:[#allocation2 + $0x350] sm:$0xff]
        %v683 = vld [vmem:[#allocation2 + $0x358] sm:$0xff]
        %v684 = vld [vmem:[#allocation2 + $0x360] sm:$0xff]
        %v685 = vld [vmem:[#allocation2 + $0x368] sm:$0xff]
        %v686 = vld [vmem:[#allocation2 + $0x370] sm:$0xff]
        %v687 = vld [vmem:[#allocation2 + $0x378] sm:$0xff]
        %v688 = vld [vmem:[#allocation2 + $0x380] sm:$0xff]
        %v689 = vld [vmem:[#allocation2 + $0x388] sm:$0xff]
        %v690 = vld [vmem:[#allocation2 + $0x390] sm:$0xff]
        %v691 = vld [vmem:[#allocation2 + $0x398] sm:$0xff]
        %v692 = vld [vmem:[#allocation2 + $0x3a0] sm:$0xff]
        %v693 = vld [vmem:[#allocation2 + $0x3a8] sm:$0xff]
        %v694 = vld [vmem:[#allocation2 + $0x3b0] sm:$0xff]
        %v695 = vld [vmem:[#allocation2 + $0x3b8] sm:$0xff]
        %v696 = vld [vmem:[#allocation2 + $0x3c0] sm:$0xff]
        %v697 = vld [vmem:[#allocation2 + $0x3c8] sm:$0xff]
        %v698 = vld [vmem:[#allocation2 + $0x3d0] sm:$0xff]
        %v699 = vld [vmem:[#allocation2 + $0x3d8] sm:$0xff]
        %v700 = vld [vmem:[#allocation2 + $0x3e0] sm:$0xff]
        %v701 = vld [vmem:[#allocation2 + $0x3e8] sm:$0xff]
        %v702 = vld [vmem:[#allocation2 + $0x3f0] sm:$0xff]
        %v703 = vld [vmem:[#allocation2 + $0x3f8] sm:$0xff]
        %v704 = vld [vmem:[%s435] sm:$0xf]
        %v705 = vld [vmem:[%s435 + $0x4] sm:$0xf]
        %v706 = vld [vmem:[%s435 + $0x8] sm:$0xf]
        %v707 = vld [vmem:[%s435 + $0xc] sm:$0xf]
        %v708 = vld [vmem:[%s435 + $0x10] sm:$0xf]
        %v709 = vld [vmem:[%s435 + $0x14] sm:$0xf]
        %v710 = vld [vmem:[%s435 + $0x18] sm:$0xf]
        %v711 = vld [vmem:[%s435 + $0x1c] sm:$0xf]
        %v712 = vld [vmem:[%s435 + $0x20] sm:$0xf]
        %v713 = vld [vmem:[%s435 + $0x24] sm:$0xf]
        %v714 = vld [vmem:[%s435 + $0x28] sm:$0xf]
        %v715 = vld [vmem:[%s435 + $0x2c] sm:$0xf]
        %v716 = vld [vmem:[%s435 + $0x30] sm:$0xf]
        %v717 = vld [vmem:[%s435 + $0x34] sm:$0xf]
        %v718 = vld [vmem:[%s435 + $0x38] sm:$0xf]
        %v719 = vld [vmem:[%s435 + $0x3c] sm:$0xf]
        %v720 = vld [vmem:[%s435 + $0x40] sm:$0xf]
        %v721 = vld [vmem:[%s435 + $0x44] sm:$0xf]
        %v722 = vld [vmem:[%s435 + $0x48] sm:$0xf]
        %v723 = vld [vmem:[%s435 + $0x4c] sm:$0xf]
        %v724 = vld [vmem:[%s435 + $0x50] sm:$0xf]
        %v725 = vld [vmem:[%s435 + $0x54] sm:$0xf]
        %v726 = vld [vmem:[%s435 + $0x58] sm:$0xf]
        %v727 = vld [vmem:[%s435 + $0x5c] sm:$0xf]
        %v728 = vld [vmem:[%s435 + $0x60] sm:$0xf]
        %v729 = vld [vmem:[%s435 + $0x64] sm:$0xf]
        %v730 = vld [vmem:[%s435 + $0x68] sm:$0xf]
        %v731 = vld [vmem:[%s435 + $0x6c] sm:$0xf]
        %v732 = vld [vmem:[%s435 + $0x70] sm:$0xf]
        %v733 = vld [vmem:[%s435 + $0x74] sm:$0xf]
        %v734 = vld [vmem:[%s435 + $0x78] sm:$0xf]
        %v735 = vld [vmem:[%s435 + $0x7c] sm:$0xf]
        %v736 = vld [vmem:[%s1] sm:$0xff]
        %v737 = vld [vmem:[%s1 + $0x8] sm:$0xff]
        %v738 = vld [vmem:[%s1 + $0x10] sm:$0xff]
        %v739 = vld [vmem:[%s1 + $0x18] sm:$0xff]
        %v740 = vld [vmem:[%s1 + $0x20] sm:$0xff]
        %v741 = vld [vmem:[%s1 + $0x28] sm:$0xff]
        %v742 = vld [vmem:[%s1 + $0x30] sm:$0xff]
        %v743 = vld [vmem:[%s1 + $0x38] sm:$0xff]
        %v744 = vld [vmem:[%s1 + $0x40] sm:$0xff]
        %v745 = vld [vmem:[%s1 + $0x48] sm:$0xff]
        %v746 = vld [vmem:[%s1 + $0x50] sm:$0xff]
        %v747 = vld [vmem:[%s1 + $0x58] sm:$0xff]
        %v748 = vld [vmem:[%s1 + $0x60] sm:$0xff]
        %v749 = vld [vmem:[%s1 + $0x68] sm:$0xff]
        %v750 = vld [vmem:[%s1 + $0x70] sm:$0xff]
        %v751 = vld [vmem:[%s1 + $0x78] sm:$0xff]
        %v784 = vunpack.c.l.b16 %v704
        %v785 = vunpack.c.l.b16 %v705
        %v786 = vunpack.c.l.b16 %v706
        %v787 = vunpack.c.l.b16 %v707
        %v788 = vunpack.c.l.b16 %v708
        %v789 = vunpack.c.l.b16 %v709
        %v790 = vunpack.c.l.b16 %v710
        %v791 = vunpack.c.l.b16 %v711
        %v792 = vunpack.c.l.b16 %v712
        %v793 = vunpack.c.l.b16 %v713
        %v794 = vunpack.c.l.b16 %v714
        %v795 = vunpack.c.l.b16 %v715
        %v796 = vunpack.c.l.b16 %v716
        %v797 = vunpack.c.l.b16 %v717
        %v798 = vunpack.c.l.b16 %v718
        %v799 = vunpack.c.l.b16 %v719
        %v800 = vunpack.c.l.b16 %v720
        %v801 = vunpack.c.l.b16 %v721
        %v802 = vunpack.c.l.b16 %v722
        %v803 = vunpack.c.l.b16 %v723
        %v804 = vunpack.c.l.b16 %v724
        %v805 = vunpack.c.l.b16 %v725
        %v806 = vunpack.c.l.b16 %v726
        %v807 = vunpack.c.l.b16 %v727
        %v808 = vunpack.c.l.b16 %v728
        %v809 = vunpack.c.l.b16 %v729
        %v810 = vunpack.c.l.b16 %v730
        %v811 = vunpack.c.l.b16 %v731
        %v812 = vunpack.c.l.b16 %v732
        %v813 = vunpack.c.l.b16 %v733
        %v814 = vunpack.c.l.b16 %v734
        %v815 = vunpack.c.l.b16 %v735
        %v816 = vpack.c.b16 %v785, %v784
        %v817 = vpack.c.b16 %v787, %v786
        %v818 = vpack.c.b16 %v789, %v788
        %v819 = vpack.c.b16 %v791, %v790
        %v820 = vpack.c.b16 %v793, %v792
        %v821 = vpack.c.b16 %v795, %v794
        %v822 = vpack.c.b16 %v797, %v796
        %v823 = vpack.c.b16 %v799, %v798
        %v824 = vpack.c.b16 %v801, %v800
        %v825 = vpack.c.b16 %v803, %v802
        %v826 = vpack.c.b16 %v805, %v804
        %v827 = vpack.c.b16 %v807, %v806
        %v828 = vpack.c.b16 %v809, %v808
        %v829 = vpack.c.b16 %v811, %v810
        %v830 = vpack.c.b16 %v813, %v812
        %v831 = vpack.c.b16 %v815, %v814
        %v848 = vunpack.c.l.b16 %v736
        %v849 = vunpack.c.h.b16 %v736
        %v850 = vunpack.c.l.b16 %v737
        %v851 = vunpack.c.h.b16 %v737
        %v852 = vunpack.c.l.b16 %v738
        %v853 = vunpack.c.h.b16 %v738
        %v854 = vunpack.c.l.b16 %v739
        %v855 = vunpack.c.h.b16 %v739
        %v856 = vunpack.c.l.b16 %v740
        %v857 = vunpack.c.h.b16 %v740
        %v858 = vunpack.c.l.b16 %v741
        %v859 = vunpack.c.h.b16 %v741
        %v860 = vunpack.c.l.b16 %v742
        %v861 = vunpack.c.h.b16 %v742
        %v862 = vunpack.c.l.b16 %v743
        %v863 = vunpack.c.h.b16 %v743
        %v864 = vunpack.c.l.b16 %v744
        %v865 = vunpack.c.h.b16 %v744
        %v866 = vunpack.c.l.b16 %v745
        %v867 = vunpack.c.h.b16 %v745
        %v868 = vunpack.c.l.b16 %v746
        %v869 = vunpack.c.h.b16 %v746
        %v870 = vunpack.c.l.b16 %v747
        %v871 = vunpack.c.h.b16 %v747
        %v872 = vunpack.c.l.b16 %v748
        %v873 = vunpack.c.h.b16 %v748
        %v874 = vunpack.c.l.b16 %v749
        %v875 = vunpack.c.h.b16 %v749
        %v876 = vunpack.c.l.b16 %v750
        %v877 = vunpack.c.h.b16 %v750
        %v878 = vunpack.c.l.b16 %v751
        %v879 = vunpack.c.h.b16 %v751
        %v880 = vpack.c.b16 %v852, %v848
        %v881 = vpack.c.b16 %v853, %v849
        %v882 = vpack.c.b16 %v854, %v850
        %v883 = vpack.c.b16 %v855, %v851
        %v884 = vpack.c.b16 %v860, %v856
        %v885 = vpack.c.b16 %v861, %v857
        %v886 = vpack.c.b16 %v862, %v858
        %v887 = vpack.c.b16 %v863, %v859
        %v888 = vpack.c.b16 %v868, %v864
        %v889 = vpack.c.b16 %v869, %v865
        %v890 = vpack.c.b16 %v870, %v866
        %v891 = vpack.c.b16 %v871, %v867
        %v892 = vpack.c.b16 %v876, %v872
        %v893 = vpack.c.b16 %v877, %v873
        %v894 = vpack.c.b16 %v878, %v874
        %v895 = vpack.c.b16 %v879, %v875
        %vm912 = vcmask 523264
        %v914 = vsel %vm912, %v816, 0
        %v917 = vsel %vm912, %v817, 0
        %v920 = vsel %vm912, %v818, 0
        %v923 = vsel %vm912, %v819, 0
        %v926 = vsel %vm912, %v820, 0
        %v929 = vsel %vm912, %v821, 0
        %v932 = vsel %vm912, %v822, 0
        %v935 = vsel %vm912, %v823, 0
        %v938 = vsel %vm912, %v824, 0
        %v941 = vsel %vm912, %v825, 0
        %v944 = vsel %vm912, %v826, 0
        %v947 = vsel %vm912, %v827, 0
        %v950 = vsel %vm912, %v828, 0
        %v953 = vsel %vm912, %v829, 0
        %v956 = vsel %vm912, %v830, 0
        %v959 = vsel %vm912, %v831, 0
        %961 = vmatprep.subr.bf16.mxu0 %v881
        %962 = vmatpush1.bf16.msra.mxu0 %v880
        %963 = vmatprep.subr.bf16.mxu0 %v885
        %964 = vmatpush1.bf16.msra.mxu0 %v884
        %965 = vmatprep.subr.bf16.mxu0 %v889
        %966 = vmatpush1.bf16.msra.mxu0 %v888
        %967 = vmatprep.subr.bf16.mxu0 %v893
        %968 = vmatpush1.bf16.msra.mxu0 %v892
        %969 = vmatprep.subr.bf16.mxu0 0
        %970 = vmatpush1.bf16.msra.mxu0 0
        %971 = vmatprep.subr.bf16.mxu0 0
        %972 = vmatpush1.bf16.msra.mxu0 0
        %973 = vmatprep.subr.bf16.mxu0 0
        %974 = vmatpush1.bf16.msra.mxu0 0
        %975 = vmatprep.subr.bf16.mxu0 0
        %976 = vmatpush1.bf16.msra.mxu0 0
        %977 = vmatprep.subr.bf16.mxu0 0
        %978 = vmatpush1.bf16.msra.mxu0 0
        %979 = vmatprep.subr.bf16.mxu0 0
        %980 = vmatpush1.bf16.msra.mxu0 0
        %981 = vmatprep.subr.bf16.mxu0 0
        %982 = vmatpush1.bf16.msra.mxu0 0
        %983 = vmatprep.subr.bf16.mxu0 0
        %984 = vmatpush1.bf16.msra.mxu0 0
        %985 = vmatprep.subr.bf16.mxu0 0
        %986 = vmatpush1.bf16.msra.mxu0 0
        %987 = vmatprep.subr.bf16.mxu0 0
        %988 = vmatpush1.bf16.msra.mxu0 0
        %989 = vmatprep.subr.bf16.mxu0 0
        %990 = vmatpush1.bf16.msra.mxu0 0
        %991 = vmatprep.subr.bf16.mxu0 0
        %992 = vmatpush1.bf16.msra.mxu0 0
        %993 = vmatprep.mubr.bf16.mxu0 0
        %994 = vmatmul.mubr.bf16.gmra.mrb[0].mxu0 %v914
        %v995 = vpop.f32.mrb[0].mxu0
        %v996 = vadd.f32 0.0, %v995
        %v997 = vpop.f32.mrb[0].mxu0
        %v998 = vadd.f32 0.0, %v997
        %v999 = vpop.f32.mrb[0].mxu0
        %v1000 = vadd.f32 0.0, %v999
        %v1001 = vpop.f32.mrb[0].mxu0
        %v1002 = vadd.f32 0.0, %v1001
        %1003 = vmatprep.mubr.bf16.mxu0 0
        %1004 = vmatmul.mubr.bf16.gmra.mrb[0].mxu0 %v917
        %v1005 = vpop.f32.mrb[0].mxu0
        %v1006 = vadd.f32 0.0, %v1005
        %v1007 = vpop.f32.mrb[0].mxu0
        %v1008 = vadd.f32 0.0, %v1007
        %v1009 = vpop.f32.mrb[0].mxu0
        %v1010 = vadd.f32 0.0, %v1009
        %v1011 = vpop.f32.mrb[0].mxu0
        %v1012 = vadd.f32 0.0, %v1011
        %1013 = vmatprep.mubr.bf16.mxu0 0
        %1014 = vmatmul.mubr.bf16.gmra.mrb[0].mxu0 %v920
        %v1015 = vpop.f32.mrb[0].mxu0
        %v1016 = vadd.f32 0.0, %v1015
        %v1017 = vpop.f32.mrb[0].mxu0
        %v1018 = vadd.f32 0.0, %v1017
        %v1019 = vpop.f32.mrb[0].mxu0
        %v1020 = vadd.f32 0.0, %v1019
        %v1021 = vpop.f32.mrb[0].mxu0
        %v1022 = vadd.f32 0.0, %v1021
        %1023 = vmatprep.mubr.bf16.mxu0 0
        %1024 = vmatmul.mubr.bf16.gmra.mrb[0].mxu0 %v923
        %v1025 = vpop.f32.mrb[0].mxu0
        %v1026 = vadd.f32 0.0, %v1025
        %v1027 = vpop.f32.mrb[0].mxu0
        %v1028 = vadd.f32 0.0, %v1027
        %v1029 = vpop.f32.mrb[0].mxu0
        %v1030 = vadd.f32 0.0, %v1029
        %v1031 = vpop.f32.mrb[0].mxu0
        %v1032 = vadd.f32 0.0, %v1031
        %1033 = vmatprep.mubr.bf16.mxu0 0
        %1034 = vmatmul.mubr.bf16.gmra.mrb[0].mxu0 %v926
        %v1035 = vpop.f32.mrb[0].mxu0
        %v1036 = vadd.f32 0.0, %v1035
        %v1037 = vpop.f32.mrb[0].mxu0
        %v1038 = vadd.f32 0.0, %v1037
        %v1039 = vpop.f32.mrb[0].mxu0
        %v1040 = vadd.f32 0.0, %v1039
        %v1041 = vpop.f32.mrb[0].mxu0
        %v1042 = vadd.f32 0.0, %v1041
        %1043 = vmatprep.mubr.bf16.mxu0 0
        %1044 = vmatmul.mubr.bf16.gmra.mrb[0].mxu0 %v929
        %v1045 = vpop.f32.mrb[0].mxu0
        %v1046 = vadd.f32 0.0, %v1045
        %v1047 = vpop.f32.mrb[0].mxu0
        %v1048 = vadd.f32 0.0, %v1047
        %v1049 = vpop.f32.mrb[0].mxu0
        %v1050 = vadd.f32 0.0, %v1049
        %v1051 = vpop.f32.mrb[0].mxu0
        %v1052 = vadd.f32 0.0, %v1051
        %1053 = vmatprep.mubr.bf16.mxu0 0
        %1054 = vmatmul.mubr.bf16.gmra.mrb[0].mxu0 %v932
        %v1055 = vpop.f32.mrb[0].mxu0
        %v1056 = vadd.f32 0.0, %v1055
        %v1057 = vpop.f32.mrb[0].mxu0
        %v1058 = vadd.f32 0.0, %v1057
        %v1059 = vpop.f32.mrb[0].mxu0
        %v1060 = vadd.f32 0.0, %v1059
        %v1061 = vpop.f32.mrb[0].mxu0
        %v1062 = vadd.f32 0.0, %v1061
        %1063 = vmatprep.mubr.bf16.mxu0 0
        %1064 = vmatmul.mubr.bf16.gmra.mrb[0].mxu0 %v935
        %v1065 = vpop.f32.mrb[0].mxu0
        %v1066 = vadd.f32 0.0, %v1065
        %v1067 = vpop.f32.mrb[0].mxu0
        %v1068 = vadd.f32 0.0, %v1067
        %v1069 = vpop.f32.mrb[0].mxu0
        %v1070 = vadd.f32 0.0, %v1069
        %v1071 = vpop.f32.mrb[0].mxu0
        %v1072 = vadd.f32 0.0, %v1071
        %1073 = vmatprep.mubr.bf16.mxu0 0
        %1074 = vmatmul.mubr.bf16.gmra.mrb[0].mxu0 %v938
        %v1075 = vpop.f32.mrb[0].mxu0
        %v1076 = vadd.f32 0.0, %v1075
        %v1077 = vpop.f32.mrb[0].mxu0
        %v1078 = vadd.f32 0.0, %v1077
        %v1079 = vpop.f32.mrb[0].mxu0
        %v1080 = vadd.f32 0.0, %v1079
        %v1081 = vpop.f32.mrb[0].mxu0
        %v1082 = vadd.f32 0.0, %v1081
        %1083 = vmatprep.mubr.bf16.mxu0 0
        %1084 = vmatmul.mubr.bf16.gmra.mrb[0].mxu0 %v941
        %v1085 = vpop.f32.mrb[0].mxu0
        %v1086 = vadd.f32 0.0, %v1085
        %v1087 = vpop.f32.mrb[0].mxu0
        %v1088 = vadd.f32 0.0, %v1087
        %v1089 = vpop.f32.mrb[0].mxu0
        %v1090 = vadd.f32 0.0, %v1089
        %v1091 = vpop.f32.mrb[0].mxu0
        %v1092 = vadd.f32 0.0, %v1091
        %1093 = vmatprep.mubr.bf16.mxu0 0
        %1094 = vmatmul.mubr.bf16.gmra.mrb[0].mxu0 %v944
        %v1095 = vpop.f32.mrb[0].mxu0
        %v1096 = vadd.f32 0.0, %v1095
        %v1097 = vpop.f32.mrb[0].mxu0
        %v1098 = vadd.f32 0.0, %v1097
        %v1099 = vpop.f32.mrb[0].mxu0
        %v1100 = vadd.f32 0.0, %v1099
        %v1101 = vpop.f32.mrb[0].mxu0
        %v1102 = vadd.f32 0.0, %v1101
        %1103 = vmatprep.mubr.bf16.mxu0 0
        %1104 = vmatmul.mubr.bf16.gmra.mrb[0].mxu0 %v947
        %v1105 = vpop.f32.mrb[0].mxu0
        %v1106 = vadd.f32 0.0, %v1105
        %v1107 = vpop.f32.mrb[0].mxu0
        %v1108 = vadd.f32 0.0, %v1107
        %v1109 = vpop.f32.mrb[0].mxu0
        %v1110 = vadd.f32 0.0, %v1109
        %v1111 = vpop.f32.mrb[0].mxu0
        %v1112 = vadd.f32 0.0, %v1111
        %1113 = vmatprep.mubr.bf16.mxu0 0
        %1114 = vmatmul.mubr.bf16.gmra.mrb[0].mxu0 %v950
        %v1115 = vpop.f32.mrb[0].mxu0
        %v1116 = vadd.f32 0.0, %v1115
        %v1117 = vpop.f32.mrb[0].mxu0
        %v1118 = vadd.f32 0.0, %v1117
        %v1119 = vpop.f32.mrb[0].mxu0
        %v1120 = vadd.f32 0.0, %v1119
        %v1121 = vpop.f32.mrb[0].mxu0
        %v1122 = vadd.f32 0.0, %v1121
        %1123 = vmatprep.mubr.bf16.mxu0 0
        %1124 = vmatmul.mubr.bf16.gmra.mrb[0].mxu0 %v953
        %v1125 = vpop.f32.mrb[0].mxu0
        %v1126 = vadd.f32 0.0, %v1125
        %v1127 = vpop.f32.mrb[0].mxu0
        %v1128 = vadd.f32 0.0, %v1127
        %v1129 = vpop.f32.mrb[0].mxu0
        %v1130 = vadd.f32 0.0, %v1129
        %v1131 = vpop.f32.mrb[0].mxu0
        %v1132 = vadd.f32 0.0, %v1131
        %1133 = vmatprep.mubr.bf16.mxu0 0
        %1134 = vmatmul.mubr.bf16.gmra.mrb[0].mxu0 %v956
        %v1135 = vpop.f32.mrb[0].mxu0
        %v1136 = vadd.f32 0.0, %v1135
        %v1137 = vpop.f32.mrb[0].mxu0
        %v1138 = vadd.f32 0.0, %v1137
        %v1139 = vpop.f32.mrb[0].mxu0
        %v1140 = vadd.f32 0.0, %v1139
        %v1141 = vpop.f32.mrb[0].mxu0
        %v1142 = vadd.f32 0.0, %v1141
        %1143 = vmatprep.mubr.bf16.mxu0 0
        %1144 = vmatmul.mubr.bf16.gmra.mrb[0].mxu0 %v959
        %v1145 = vpop.f32.mrb[0].mxu0
        %v1146 = vadd.f32 0.0, %v1145
        %v1147 = vpop.f32.mrb[0].mxu0
        %v1148 = vadd.f32 0.0, %v1147
        %v1149 = vpop.f32.mrb[0].mxu0
        %v1150 = vadd.f32 0.0, %v1149
        %v1151 = vpop.f32.mrb[0].mxu0
        %v1152 = vadd.f32 0.0, %v1151
        %1153 = vdwg.mxu0
        %1154 = vmatprep.subr.bf16.mxu0 %v883
        %1155 = vmatpush1.bf16.msra.mxu0 %v882
        %1156 = vmatprep.subr.bf16.mxu0 %v887
        %1157 = vmatpush1.bf16.msra.mxu0 %v886
        %1158 = vmatprep.subr.bf16.mxu0 %v891
        %1159 = vmatpush1.bf16.msra.mxu0 %v890
        %1160 = vmatprep.subr.bf16.mxu0 %v895
        %1161 = vmatpush1.bf16.msra.mxu0 %v894
        %1162 = vmatprep.subr.bf16.mxu0 0
        %1163 = vmatpush1.bf16.msra.mxu0 0
        %1164 = vmatprep.subr.bf16.mxu0 0
        %1165 = vmatpush1.bf16.msra.mxu0 0
        %1166 = vmatprep.subr.bf16.mxu0 0
        %1167 = vmatpush1.bf16.msra.mxu0 0
        %1168 = vmatprep.subr.bf16.mxu0 0
        %1169 = vmatpush1.bf16.msra.mxu0 0
        %1170 = vmatprep.subr.bf16.mxu0 0
        %1171 = vmatpush1.bf16.msra.mxu0 0
        %1172 = vmatprep.subr.bf16.mxu0 0
        %1173 = vmatpush1.bf16.msra.mxu0 0
        %1174 = vmatprep.subr.bf16.mxu0 0
        %1175 = vmatpush1.bf16.msra.mxu0 0
        %1176 = vmatprep.subr.bf16.mxu0 0
        %1177 = vmatpush1.bf16.msra.mxu0 0
        %1178 = vmatprep.subr.bf16.mxu0 0
        %1179 = vmatpush1.bf16.msra.mxu0 0
        %1180 = vmatprep.subr.bf16.mxu0 0
        %1181 = vmatpush1.bf16.msra.mxu0 0
        %1182 = vmatprep.subr.bf16.mxu0 0
        %1183 = vmatpush1.bf16.msra.mxu0 0
        %1184 = vmatprep.subr.bf16.mxu0 0
        %1185 = vmatpush1.bf16.msra.mxu0 0
        %1186 = vmatprep.mubr.bf16.mxu0 0
        %1187 = vmatmul.mubr.bf16.gmra.mrb[0].mxu0 %v914
        %v1188 = vpop.f32.mrb[0].mxu0
        %v1189 = vadd.f32 0.0, %v1188
        %v1190 = vpop.f32.mrb[0].mxu0
        %v1191 = vadd.f32 0.0, %v1190
        %v1192 = vpop.f32.mrb[0].mxu0
        %v1193 = vadd.f32 0.0, %v1192
        %v1194 = vpop.f32.mrb[0].mxu0
        %v1195 = vadd.f32 0.0, %v1194
        %1196 = vmatprep.mubr.bf16.mxu0 0
        %1197 = vmatmul.mubr.bf16.gmra.mrb[0].mxu0 %v917
        %v1198 = vpop.f32.mrb[0].mxu0
        %v1199 = vadd.f32 0.0, %v1198
        %v1200 = vpop.f32.mrb[0].mxu0
        %v1201 = vadd.f32 0.0, %v1200
        %v1202 = vpop.f32.mrb[0].mxu0
        %v1203 = vadd.f32 0.0, %v1202
        %v1204 = vpop.f32.mrb[0].mxu0
        %v1205 = vadd.f32 0.0, %v1204
        %1206 = vmatprep.mubr.bf16.mxu0 0
        %1207 = vmatmul.mubr.bf16.gmra.mrb[0].mxu0 %v920
        %v1208 = vpop.f32.mrb[0].mxu0
        %v1209 = vadd.f32 0.0, %v1208
        %v1210 = vpop.f32.mrb[0].mxu0
        %v1211 = vadd.f32 0.0, %v1210
        %v1212 = vpop.f32.mrb[0].mxu0
        %v1213 = vadd.f32 0.0, %v1212
        %v1214 = vpop.f32.mrb[0].mxu0
        %v1215 = vadd.f32 0.0, %v1214
        %1216 = vmatprep.mubr.bf16.mxu0 0
        %1217 = vmatmul.mubr.bf16.gmra.mrb[0].mxu0 %v923
        %v1218 = vpop.f32.mrb[0].mxu0
        %v1219 = vadd.f32 0.0, %v1218
        %v1220 = vpop.f32.mrb[0].mxu0
        %v1221 = vadd.f32 0.0, %v1220
        %v1222 = vpop.f32.mrb[0].mxu0
        %v1223 = vadd.f32 0.0, %v1222
        %v1224 = vpop.f32.mrb[0].mxu0
        %v1225 = vadd.f32 0.0, %v1224
        %1226 = vmatprep.mubr.bf16.mxu0 0
        %1227 = vmatmul.mubr.bf16.gmra.mrb[0].mxu0 %v926
        %v1228 = vpop.f32.mrb[0].mxu0
        %v1229 = vadd.f32 0.0, %v1228
        %v1230 = vpop.f32.mrb[0].mxu0
        %v1231 = vadd.f32 0.0, %v1230
        %v1232 = vpop.f32.mrb[0].mxu0
        %v1233 = vadd.f32 0.0, %v1232
        %v1234 = vpop.f32.mrb[0].mxu0
        %v1235 = vadd.f32 0.0, %v1234
        %1236 = vmatprep.mubr.bf16.mxu0 0
        %1237 = vmatmul.mubr.bf16.gmra.mrb[0].mxu0 %v929
        %v1238 = vpop.f32.mrb[0].mxu0
        %v1239 = vadd.f32 0.0, %v1238
        %v1240 = vpop.f32.mrb[0].mxu0
        %v1241 = vadd.f32 0.0, %v1240
        %v1242 = vpop.f32.mrb[0].mxu0
        %v1243 = vadd.f32 0.0, %v1242
        %v1244 = vpop.f32.mrb[0].mxu0
        %v1245 = vadd.f32 0.0, %v1244
        %1246 = vmatprep.mubr.bf16.mxu0 0
        %1247 = vmatmul.mubr.bf16.gmra.mrb[0].mxu0 %v932
        %v1248 = vpop.f32.mrb[0].mxu0
        %v1249 = vadd.f32 0.0, %v1248
        %v1250 = vpop.f32.mrb[0].mxu0
        %v1251 = vadd.f32 0.0, %v1250
        %v1252 = vpop.f32.mrb[0].mxu0
        %v1253 = vadd.f32 0.0, %v1252
        %v1254 = vpop.f32.mrb[0].mxu0
        %v1255 = vadd.f32 0.0, %v1254
        %1256 = vmatprep.mubr.bf16.mxu0 0
        %1257 = vmatmul.mubr.bf16.gmra.mrb[0].mxu0 %v935
        %v1258 = vpop.f32.mrb[0].mxu0
        %v1259 = vadd.f32 0.0, %v1258
        %v1260 = vpop.f32.mrb[0].mxu0
        %v1261 = vadd.f32 0.0, %v1260
        %v1262 = vpop.f32.mrb[0].mxu0
        %v1263 = vadd.f32 0.0, %v1262
        %v1264 = vpop.f32.mrb[0].mxu0
        %v1265 = vadd.f32 0.0, %v1264
        %1266 = vmatprep.mubr.bf16.mxu0 0
        %1267 = vmatmul.mubr.bf16.gmra.mrb[0].mxu0 %v938
        %v1268 = vpop.f32.mrb[0].mxu0
        %v1269 = vadd.f32 0.0, %v1268
        %v1270 = vpop.f32.mrb[0].mxu0
        %v1271 = vadd.f32 0.0, %v1270
        %v1272 = vpop.f32.mrb[0].mxu0
        %v1273 = vadd.f32 0.0, %v1272
        %v1274 = vpop.f32.mrb[0].mxu0
        %v1275 = vadd.f32 0.0, %v1274
        %1276 = vmatprep.mubr.bf16.mxu0 0
        %1277 = vmatmul.mubr.bf16.gmra.mrb[0].mxu0 %v941
        %v1278 = vpop.f32.mrb[0].mxu0
        %v1279 = vadd.f32 0.0, %v1278
        %v1280 = vpop.f32.mrb[0].mxu0
        %v1281 = vadd.f32 0.0, %v1280
        %v1282 = vpop.f32.mrb[0].mxu0
        %v1283 = vadd.f32 0.0, %v1282
        %v1284 = vpop.f32.mrb[0].mxu0
        %v1285 = vadd.f32 0.0, %v1284
        %1286 = vmatprep.mubr.bf16.mxu0 0
        %1287 = vmatmul.mubr.bf16.gmra.mrb[0].mxu0 %v944
        %v1288 = vpop.f32.mrb[0].mxu0
        %v1289 = vadd.f32 0.0, %v1288
        %v1290 = vpop.f32.mrb[0].mxu0
        %v1291 = vadd.f32 0.0, %v1290
        %v1292 = vpop.f32.mrb[0].mxu0
        %v1293 = vadd.f32 0.0, %v1292
        %v1294 = vpop.f32.mrb[0].mxu0
        %v1295 = vadd.f32 0.0, %v1294
        %1296 = vmatprep.mubr.bf16.mxu0 0
        %1297 = vmatmul.mubr.bf16.gmra.mrb[0].mxu0 %v947
        %v1298 = vpop.f32.mrb[0].mxu0
        %v1299 = vadd.f32 0.0, %v1298
        %v1300 = vpop.f32.mrb[0].mxu0
        %v1301 = vadd.f32 0.0, %v1300
        %v1302 = vpop.f32.mrb[0].mxu0
        %v1303 = vadd.f32 0.0, %v1302
        %v1304 = vpop.f32.mrb[0].mxu0
        %v1305 = vadd.f32 0.0, %v1304
        %1306 = vmatprep.mubr.bf16.mxu0 0
        %1307 = vmatmul.mubr.bf16.gmra.mrb[0].mxu0 %v950
        %v1308 = vpop.f32.mrb[0].mxu0
        %v1309 = vadd.f32 0.0, %v1308
        %v1310 = vpop.f32.mrb[0].mxu0
        %v1311 = vadd.f32 0.0, %v1310
        %v1312 = vpop.f32.mrb[0].mxu0
        %v1313 = vadd.f32 0.0, %v1312
        %v1314 = vpop.f32.mrb[0].mxu0
        %v1315 = vadd.f32 0.0, %v1314
        %1316 = vmatprep.mubr.bf16.mxu0 0
        %1317 = vmatmul.mubr.bf16.gmra.mrb[0].mxu0 %v953
        %v1318 = vpop.f32.mrb[0].mxu0
        %v1319 = vadd.f32 0.0, %v1318
        %v1320 = vpop.f32.mrb[0].mxu0
        %v1321 = vadd.f32 0.0, %v1320
        %v1322 = vpop.f32.mrb[0].mxu0
        %v1323 = vadd.f32 0.0, %v1322
        %v1324 = vpop.f32.mrb[0].mxu0
        %v1325 = vadd.f32 0.0, %v1324
        %1326 = vmatprep.mubr.bf16.mxu0 0
        %1327 = vmatmul.mubr.bf16.gmra.mrb[0].mxu0 %v956
        %v1328 = vpop.f32.mrb[0].mxu0
        %v1329 = vadd.f32 0.0, %v1328
        %v1330 = vpop.f32.mrb[0].mxu0
        %v1331 = vadd.f32 0.0, %v1330
        %v1332 = vpop.f32.mrb[0].mxu0
        %v1333 = vadd.f32 0.0, %v1332
        %v1334 = vpop.f32.mrb[0].mxu0
        %v1335 = vadd.f32 0.0, %v1334
        %1336 = vmatprep.mubr.bf16.mxu0 0
        %1337 = vmatmul.mubr.bf16.gmra.mrb[0].mxu0 %v959
        %v1338 = vpop.f32.mrb[0].mxu0
        %v1339 = vadd.f32 0.0, %v1338
        %v1340 = vpop.f32.mrb[0].mxu0
        %v1341 = vadd.f32 0.0, %v1340
        %v1342 = vpop.f32.mrb[0].mxu0
        %v1343 = vadd.f32 0.0, %v1342
        %v1344 = vpop.f32.mrb[0].mxu0
        %v1345 = vadd.f32 0.0, %v1344
        %1346 = vdwg.mxu0
        %v1347 = vadd.f32 %v576, %v996
        %v1348 = vadd.f32 %v577, %v998
        %v1349 = vadd.f32 %v578, %v1189
        %v1350 = vadd.f32 %v579, %v1191
        %v1351 = vadd.f32 %v580, %v1000
        %v1352 = vadd.f32 %v581, %v1002
        %v1353 = vadd.f32 %v582, %v1193
        %v1354 = vadd.f32 %v583, %v1195
        %v1355 = vadd.f32 %v584, %v1006
        %v1356 = vadd.f32 %v585, %v1008
        %v1357 = vadd.f32 %v586, %v1199
        %v1358 = vadd.f32 %v587, %v1201
        %v1359 = vadd.f32 %v588, %v1010
        %v1360 = vadd.f32 %v589, %v1012
        %v1361 = vadd.f32 %v590, %v1203
        %v1362 = vadd.f32 %v591, %v1205
        %v1363 = vadd.f32 %v592, %v1016
        %v1364 = vadd.f32 %v593, %v1018
        %v1365 = vadd.f32 %v594, %v1209
        %v1366 = vadd.f32 %v595, %v1211
        %v1367 = vadd.f32 %v596, %v1020
        %v1368 = vadd.f32 %v597, %v1022
        %v1369 = vadd.f32 %v598, %v1213
        %v1370 = vadd.f32 %v599, %v1215
        %v1371 = vadd.f32 %v600, %v1026
        %v1372 = vadd.f32 %v601, %v1028
        %v1373 = vadd.f32 %v602, %v1219
        %v1374 = vadd.f32 %v603, %v1221
        %v1375 = vadd.f32 %v604, %v1030
        %v1376 = vadd.f32 %v605, %v1032
        %v1377 = vadd.f32 %v606, %v1223
        %v1378 = vadd.f32 %v607, %v1225
        %v1379 = vadd.f32 %v608, %v1036
        %v1380 = vadd.f32 %v609, %v1038
        %v1381 = vadd.f32 %v610, %v1229
        %v1382 = vadd.f32 %v611, %v1231
        %v1383 = vadd.f32 %v612, %v1040
        %v1384 = vadd.f32 %v613, %v1042
        %v1385 = vadd.f32 %v614, %v1233
        %v1386 = vadd.f32 %v615, %v1235
        %v1387 = vadd.f32 %v616, %v1046
        %v1388 = vadd.f32 %v617, %v1048
        %v1389 = vadd.f32 %v618, %v1239
        %v1390 = vadd.f32 %v619, %v1241
        %v1391 = vadd.f32 %v620, %v1050
        %v1392 = vadd.f32 %v621, %v1052
        %v1393 = vadd.f32 %v622, %v1243
        %v1394 = vadd.f32 %v623, %v1245
        %v1395 = vadd.f32 %v624, %v1056
        %v1396 = vadd.f32 %v625, %v1058
        %v1397 = vadd.f32 %v626, %v1249
        %v1398 = vadd.f32 %v627, %v1251
        %v1399 = vadd.f32 %v628, %v1060
        %v1400 = vadd.f32 %v629, %v1062
        %v1401 = vadd.f32 %v630, %v1253
        %v1402 = vadd.f32 %v631, %v1255
        %v1403 = vadd.f32 %v632, %v1066
        %v1404 = vadd.f32 %v633, %v1068
        %v1405 = vadd.f32 %v634, %v1259
        %v1406 = vadd.f32 %v635, %v1261
        %v1407 = vadd.f32 %v636, %v1070
        %v1408 = vadd.f32 %v637, %v1072
        %v1409 = vadd.f32 %v638, %v1263
        %v1410 = vadd.f32 %v639, %v1265
        %v1411 = vadd.f32 %v640, %v1076
        %v1412 = vadd.f32 %v641, %v1078
        %v1413 = vadd.f32 %v642, %v1269
        %v1414 = vadd.f32 %v643, %v1271
        %v1415 = vadd.f32 %v644, %v1080
        %v1416 = vadd.f32 %v645, %v1082
        %v1417 = vadd.f32 %v646, %v1273
        %v1418 = vadd.f32 %v647, %v1275
        %v1419 = vadd.f32 %v648, %v1086
        %v1420 = vadd.f32 %v649, %v1088
        %v1421 = vadd.f32 %v650, %v1279
        %v1422 = vadd.f32 %v651, %v1281
        %v1423 = vadd.f32 %v652, %v1090
        %v1424 = vadd.f32 %v653, %v1092
        %v1425 = vadd.f32 %v654, %v1283
        %v1426 = vadd.f32 %v655, %v1285
        %v1427 = vadd.f32 %v656, %v1096
        %v1428 = vadd.f32 %v657, %v1098
        %v1429 = vadd.f32 %v658, %v1289
        %v1430 = vadd.f32 %v659, %v1291
        %v1431 = vadd.f32 %v660, %v1100
        %v1432 = vadd.f32 %v661, %v1102
        %v1433 = vadd.f32 %v662, %v1293
        %v1434 = vadd.f32 %v663, %v1295
        %v1435 = vadd.f32 %v664, %v1106
        %v1436 = vadd.f32 %v665, %v1108
        %v1437 = vadd.f32 %v666, %v1299
        %v1438 = vadd.f32 %v667, %v1301
        %v1439 = vadd.f32 %v668, %v1110
        %v1440 = vadd.f32 %v669, %v1112
        %v1441 = vadd.f32 %v670, %v1303
        %v1442 = vadd.f32 %v671, %v1305
        %v1443 = vadd.f32 %v672, %v1116
        %v1444 = vadd.f32 %v673, %v1118
        %v1445 = vadd.f32 %v674, %v1309
        %v1446 = vadd.f32 %v675, %v1311
        %v1447 = vadd.f32 %v676, %v1120
        %v1448 = vadd.f32 %v677, %v1122
        %v1449 = vadd.f32 %v678, %v1313
        %v1450 = vadd.f32 %v679, %v1315
        %v1451 = vadd.f32 %v680, %v1126
        %v1452 = vadd.f32 %v681, %v1128
        %v1453 = vadd.f32 %v682, %v1319
        %v1454 = vadd.f32 %v683, %v1321
        %v1455 = vadd.f32 %v684, %v1130
        %v1456 = vadd.f32 %v685, %v1132
        %v1457 = vadd.f32 %v686, %v1323
        %v1458 = vadd.f32 %v687, %v1325
        %v1459 = vadd.f32 %v688, %v1136
        %v1460 = vadd.f32 %v689, %v1138
        %v1461 = vadd.f32 %v690, %v1329
        %v1462 = vadd.f32 %v691, %v1331
        %v1463 = vadd.f32 %v692, %v1140
        %v1464 = vadd.f32 %v693, %v1142
        %v1465 = vadd.f32 %v694, %v1333
        %v1466 = vadd.f32 %v695, %v1335
        %v1467 = vadd.f32 %v696, %v1146
        %v1468 = vadd.f32 %v697, %v1148
        %v1469 = vadd.f32 %v698, %v1339
        %v1470 = vadd.f32 %v699, %v1341
        %v1471 = vadd.f32 %v700, %v1150
        %v1472 = vadd.f32 %v701, %v1152
        %v1473 = vadd.f32 %v702, %v1343
        %v1474 = vadd.f32 %v703, %v1345
        %1475 = vst [vmem:[#allocation2] sm:$0xff] %v1347
        %1476 = vst [vmem:[#allocation2 + $0x8] sm:$0xff] %v1348
        %1477 = vst [vmem:[#allocation2 + $0x10] sm:$0xff] %v1349
        %1478 = vst [vmem:[#allocation2 + $0x18] sm:$0xff] %v1350
        %1479 = vst [vmem:[#allocation2 + $0x20] sm:$0xff] %v1351
        %1480 = vst [vmem:[#allocation2 + $0x28] sm:$0xff] %v1352
        %1481 = vst [vmem:[#allocation2 + $0x30] sm:$0xff] %v1353
        %1482 = vst [vmem:[#allocation2 + $0x38] sm:$0xff] %v1354
        %1483 = vst [vmem:[#allocation2 + $0x40] sm:$0xff] %v1355
        %1484 = vst [vmem:[#allocation2 + $0x48] sm:$0xff] %v1356
        %1485 = vst [vmem:[#allocation2 + $0x50] sm:$0xff] %v1357
        %1486 = vst [vmem:[#allocation2 + $0x58] sm:$0xff] %v1358
        %1487 = vst [vmem:[#allocation2 + $0x60] sm:$0xff] %v1359
        %1488 = vst [vmem:[#allocation2 + $0x68] sm:$0xff] %v1360
        %1489 = vst [vmem:[#allocation2 + $0x70] sm:$0xff] %v1361
        %1490 = vst [vmem:[#allocation2 + $0x78] sm:$0xff] %v1362
        %1491 = vst [vmem:[#allocation2 + $0x80] sm:$0xff] %v1363
        %1492 = vst [vmem:[#allocation2 + $0x88] sm:$0xff] %v1364
        %1493 = vst [vmem:[#allocation2 + $0x90] sm:$0xff] %v1365
        %1494 = vst [vmem:[#allocation2 + $0x98] sm:$0xff] %v1366
        %1495 = vst [vmem:[#allocation2 + $0xa0] sm:$0xff] %v1367
        %1496 = vst [vmem:[#allocation2 + $0xa8] sm:$0xff] %v1368
        %1497 = vst [vmem:[#allocation2 + $0xb0] sm:$0xff] %v1369
        %1498 = vst [vmem:[#allocation2 + $0xb8] sm:$0xff] %v1370
        %1499 = vst [vmem:[#allocation2 + $0xc0] sm:$0xff] %v1371
        %1500 = vst [vmem:[#allocation2 + $0xc8] sm:$0xff] %v1372
        %1501 = vst [vmem:[#allocation2 + $0xd0] sm:$0xff] %v1373
        %1502 = vst [vmem:[#allocation2 + $0xd8] sm:$0xff] %v1374
        %1503 = vst [vmem:[#allocation2 + $0xe0] sm:$0xff] %v1375
        %1504 = vst [vmem:[#allocation2 + $0xe8] sm:$0xff] %v1376
        %1505 = vst [vmem:[#allocation2 + $0xf0] sm:$0xff] %v1377
        %1506 = vst [vmem:[#allocation2 + $0xf8] sm:$0xff] %v1378
        %1507 = vst [vmem:[#allocation2 + $0x100] sm:$0xff] %v1379
        %1508 = vst [vmem:[#allocation2 + $0x108] sm:$0xff] %v1380
        %1509 = vst [vmem:[#allocation2 + $0x110] sm:$0xff] %v1381
        %1510 = vst [vmem:[#allocation2 + $0x118] sm:$0xff] %v1382
        %1511 = vst [vmem:[#allocation2 + $0x120] sm:$0xff] %v1383
        %1512 = vst [vmem:[#allocation2 + $0x128] sm:$0xff] %v1384
        %1513 = vst [vmem:[#allocation2 + $0x130] sm:$0xff] %v1385
        %1514 = vst [vmem:[#allocation2 + $0x138] sm:$0xff] %v1386
        %1515 = vst [vmem:[#allocation2 + $0x140] sm:$0xff] %v1387
        %1516 = vst [vmem:[#allocation2 + $0x148] sm:$0xff] %v1388
        %1517 = vst [vmem:[#allocation2 + $0x150] sm:$0xff] %v1389
        %1518 = vst [vmem:[#allocation2 + $0x158] sm:$0xff] %v1390
        %1519 = vst [vmem:[#allocation2 + $0x160] sm:$0xff] %v1391
        %1520 = vst [vmem:[#allocation2 + $0x168] sm:$0xff] %v1392
        %1521 = vst [vmem:[#allocation2 + $0x170] sm:$0xff] %v1393
        %1522 = vst [vmem:[#allocation2 + $0x178] sm:$0xff] %v1394
        %1523 = vst [vmem:[#allocation2 + $0x180] sm:$0xff] %v1395
        %1524 = vst [vmem:[#allocation2 + $0x188] sm:$0xff] %v1396
        %1525 = vst [vmem:[#allocation2 + $0x190] sm:$0xff] %v1397
        %1526 = vst [vmem:[#allocation2 + $0x198] sm:$0xff] %v1398
        %1527 = vst [vmem:[#allocation2 + $0x1a0] sm:$0xff] %v1399
        %1528 = vst [vmem:[#allocation2 + $0x1a8] sm:$0xff] %v1400
        %1529 = vst [vmem:[#allocation2 + $0x1b0] sm:$0xff] %v1401
        %1530 = vst [vmem:[#allocation2 + $0x1b8] sm:$0xff] %v1402
        %1531 = vst [vmem:[#allocation2 + $0x1c0] sm:$0xff] %v1403
        %1532 = vst [vmem:[#allocation2 + $0x1c8] sm:$0xff] %v1404
        %1533 = vst [vmem:[#allocation2 + $0x1d0] sm:$0xff] %v1405
        %1534 = vst [vmem:[#allocation2 + $0x1d8] sm:$0xff] %v1406
        %1535 = vst [vmem:[#allocation2 + $0x1e0] sm:$0xff] %v1407
        %1536 = vst [vmem:[#allocation2 + $0x1e8] sm:$0xff] %v1408
        %1537 = vst [vmem:[#allocation2 + $0x1f0] sm:$0xff] %v1409
        %1538 = vst [vmem:[#allocation2 + $0x1f8] sm:$0xff] %v1410
        %1539 = vst [vmem:[#allocation2 + $0x200] sm:$0xff] %v1411
        %1540 = vst [vmem:[#allocation2 + $0x208] sm:$0xff] %v1412
        %1541 = vst [vmem:[#allocation2 + $0x210] sm:$0xff] %v1413
        %1542 = vst [vmem:[#allocation2 + $0x218] sm:$0xff] %v1414
        %1543 = vst [vmem:[#allocation2 + $0x220] sm:$0xff] %v1415
        %1544 = vst [vmem:[#allocation2 + $0x228] sm:$0xff] %v1416
        %1545 = vst [vmem:[#allocation2 + $0x230] sm:$0xff] %v1417
        %1546 = vst [vmem:[#allocation2 + $0x238] sm:$0xff] %v1418
        %1547 = vst [vmem:[#allocation2 + $0x240] sm:$0xff] %v1419
        %1548 = vst [vmem:[#allocation2 + $0x248] sm:$0xff] %v1420
        %1549 = vst [vmem:[#allocation2 + $0x250] sm:$0xff] %v1421
        %1550 = vst [vmem:[#allocation2 + $0x258] sm:$0xff] %v1422
        %1551 = vst [vmem:[#allocation2 + $0x260] sm:$0xff] %v1423
        %1552 = vst [vmem:[#allocation2 + $0x268] sm:$0xff] %v1424
        %1553 = vst [vmem:[#allocation2 + $0x270] sm:$0xff] %v1425
        %1554 = vst [vmem:[#allocation2 + $0x278] sm:$0xff] %v1426
        %1555 = vst [vmem:[#allocation2 + $0x280] sm:$0xff] %v1427
        %1556 = vst [vmem:[#allocation2 + $0x288] sm:$0xff] %v1428
        %1557 = vst [vmem:[#allocation2 + $0x290] sm:$0xff] %v1429
        %1558 = vst [vmem:[#allocation2 + $0x298] sm:$0xff] %v1430
        %1559 = vst [vmem:[#allocation2 + $0x2a0] sm:$0xff] %v1431
        %1560 = vst [vmem:[#allocation2 + $0x2a8] sm:$0xff] %v1432
        %1561 = vst [vmem:[#allocation2 + $0x2b0] sm:$0xff] %v1433
        %1562 = vst [vmem:[#allocation2 + $0x2b8] sm:$0xff] %v1434
        %1563 = vst [vmem:[#allocation2 + $0x2c0] sm:$0xff] %v1435
        %1564 = vst [vmem:[#allocation2 + $0x2c8] sm:$0xff] %v1436
        %1565 = vst [vmem:[#allocation2 + $0x2d0] sm:$0xff] %v1437
        %1566 = vst [vmem:[#allocation2 + $0x2d8] sm:$0xff] %v1438
        %1567 = vst [vmem:[#allocation2 + $0x2e0] sm:$0xff] %v1439
        %1568 = vst [vmem:[#allocation2 + $0x2e8] sm:$0xff] %v1440
        %1569 = vst [vmem:[#allocation2 + $0x2f0] sm:$0xff] %v1441
        %1570 = vst [vmem:[#allocation2 + $0x2f8] sm:$0xff] %v1442
        %1571 = vst [vmem:[#allocation2 + $0x300] sm:$0xff] %v1443
        %1572 = vst [vmem:[#allocation2 + $0x308] sm:$0xff] %v1444
        %1573 = vst [vmem:[#allocation2 + $0x310] sm:$0xff] %v1445
        %1574 = vst [vmem:[#allocation2 + $0x318] sm:$0xff] %v1446
        %1575 = vst [vmem:[#allocation2 + $0x320] sm:$0xff] %v1447
        %1576 = vst [vmem:[#allocation2 + $0x328] sm:$0xff] %v1448
        %1577 = vst [vmem:[#allocation2 + $0x330] sm:$0xff] %v1449
        %1578 = vst [vmem:[#allocation2 + $0x338] sm:$0xff] %v1450
        %1579 = vst [vmem:[#allocation2 + $0x340] sm:$0xff] %v1451
        %1580 = vst [vmem:[#allocation2 + $0x348] sm:$0xff] %v1452
        %1581 = vst [vmem:[#allocation2 + $0x350] sm:$0xff] %v1453
        %1582 = vst [vmem:[#allocation2 + $0x358] sm:$0xff] %v1454
        %1583 = vst [vmem:[#allocation2 + $0x360] sm:$0xff] %v1455
        %1584 = vst [vmem:[#allocation2 + $0x368] sm:$0xff] %v1456
        %1585 = vst [vmem:[#allocation2 + $0x370] sm:$0xff] %v1457
        %1586 = vst [vmem:[#allocation2 + $0x378] sm:$0xff] %v1458
        %1587 = vst [vmem:[#allocation2 + $0x380] sm:$0xff] %v1459
        %1588 = vst [vmem:[#allocation2 + $0x388] sm:$0xff] %v1460
        %1589 = vst [vmem:[#allocation2 + $0x390] sm:$0xff] %v1461
        %1590 = vst [vmem:[#allocation2 + $0x398] sm:$0xff] %v1462
        %1591 = vst [vmem:[#allocation2 + $0x3a0] sm:$0xff] %v1463
        %1592 = vst [vmem:[#allocation2 + $0x3a8] sm:$0xff] %v1464
        %1593 = vst [vmem:[#allocation2 + $0x3b0] sm:$0xff] %v1465
        %1594 = vst [vmem:[#allocation2 + $0x3b8] sm:$0xff] %v1466
        %1595 = vst [vmem:[#allocation2 + $0x3c0] sm:$0xff] %v1467
        %1596 = vst [vmem:[#allocation2 + $0x3c8] sm:$0xff] %v1468
        %1597 = vst [vmem:[#allocation2 + $0x3d0] sm:$0xff] %v1469
        %1598 = vst [vmem:[#allocation2 + $0x3d8] sm:$0xff] %v1470
        %1599 = vst [vmem:[#allocation2 + $0x3e0] sm:$0xff] %v1471
        %1600 = vst [vmem:[#allocation2 + $0x3e8] sm:$0xff] %v1472
        %1601 = vst [vmem:[#allocation2 + $0x3f0] sm:$0xff] %v1473
        %1602 = vst [vmem:[#allocation2 + $0x3f8] sm:$0xff] %v1474
        // Predicated region
        $region77: #{_large_mlp_forward_impl.1} parent=63 // pred_check
          %p1603 = pneg %p444
        $region78: #{_large_mlp_forward_impl.1} parent=63 // pred_check_branch
          %1605 = sbr.rel (%p1603) target = $region80
        $region79: #{_large_mlp_forward_impl.1} parent=63 // pred_region
          %v1606 = vld [vmem:[#allocation2] sm:$0xff]
          %v1607 = vld [vmem:[#allocation2 + $0x8] sm:$0xff]
          %v1608 = vld [vmem:[#allocation2 + $0x10] sm:$0xff]
          %v1609 = vld [vmem:[#allocation2 + $0x18] sm:$0xff]
          %v1610 = vld [vmem:[#allocation2 + $0x20] sm:$0xff]
          %v1611 = vld [vmem:[#allocation2 + $0x28] sm:$0xff]
          %v1612 = vld [vmem:[#allocation2 + $0x30] sm:$0xff]
          %v1613 = vld [vmem:[#allocation2 + $0x38] sm:$0xff]
          %v1614 = vld [vmem:[#allocation2 + $0x40] sm:$0xff]
          %v1615 = vld [vmem:[#allocation2 + $0x48] sm:$0xff]
          %v1616 = vld [vmem:[#allocation2 + $0x50] sm:$0xff]
          %v1617 = vld [vmem:[#allocation2 + $0x58] sm:$0xff]
          %v1618 = vld [vmem:[#allocation2 + $0x60] sm:$0xff]
          %v1619 = vld [vmem:[#allocation2 + $0x68] sm:$0xff]
          %v1620 = vld [vmem:[#allocation2 + $0x70] sm:$0xff]
          %v1621 = vld [vmem:[#allocation2 + $0x78] sm:$0xff]
          %v1622 = vld [vmem:[#allocation2 + $0x80] sm:$0xff]
          %v1623 = vld [vmem:[#allocation2 + $0x88] sm:$0xff]
          %v1624 = vld [vmem:[#allocation2 + $0x90] sm:$0xff]
          %v1625 = vld [vmem:[#allocation2 + $0x98] sm:$0xff]
          %v1626 = vld [vmem:[#allocation2 + $0xa0] sm:$0xff]
          %v1627 = vld [vmem:[#allocation2 + $0xa8] sm:$0xff]
          %v1628 = vld [vmem:[#allocation2 + $0xb0] sm:$0xff]
          %v1629 = vld [vmem:[#allocation2 + $0xb8] sm:$0xff]
          %v1630 = vld [vmem:[#allocation2 + $0xc0] sm:$0xff]
          %v1631 = vld [vmem:[#allocation2 + $0xc8] sm:$0xff]
          %v1632 = vld [vmem:[#allocation2 + $0xd0] sm:$0xff]
          %v1633 = vld [vmem:[#allocation2 + $0xd8] sm:$0xff]
          %v1634 = vld [vmem:[#allocation2 + $0xe0] sm:$0xff]
          %v1635 = vld [vmem:[#allocation2 + $0xe8] sm:$0xff]
          %v1636 = vld [vmem:[#allocation2 + $0xf0] sm:$0xff]
          %v1637 = vld [vmem:[#allocation2 + $0xf8] sm:$0xff]
          %v1638 = vld [vmem:[#allocation2 + $0x100] sm:$0xff]
          %v1639 = vld [vmem:[#allocation2 + $0x108] sm:$0xff]
          %v1640 = vld [vmem:[#allocation2 + $0x110] sm:$0xff]
          %v1641 = vld [vmem:[#allocation2 + $0x118] sm:$0xff]
          %v1642 = vld [vmem:[#allocation2 + $0x120] sm:$0xff]
          %v1643 = vld [vmem:[#allocation2 + $0x128] sm:$0xff]
          %v1644 = vld [vmem:[#allocation2 + $0x130] sm:$0xff]
          %v1645 = vld [vmem:[#allocation2 + $0x138] sm:$0xff]
          %v1646 = vld [vmem:[#allocation2 + $0x140] sm:$0xff]
          %v1647 = vld [vmem:[#allocation2 + $0x148] sm:$0xff]
          %v1648 = vld [vmem:[#allocation2 + $0x150] sm:$0xff]
          %v1649 = vld [vmem:[#allocation2 + $0x158] sm:$0xff]
          %v1650 = vld [vmem:[#allocation2 + $0x160] sm:$0xff]
          %v1651 = vld [vmem:[#allocation2 + $0x168] sm:$0xff]
          %v1652 = vld [vmem:[#allocation2 + $0x170] sm:$0xff]
          %v1653 = vld [vmem:[#allocation2 + $0x178] sm:$0xff]
          %v1654 = vld [vmem:[#allocation2 + $0x180] sm:$0xff]
          %v1655 = vld [vmem:[#allocation2 + $0x188] sm:$0xff]
          %v1656 = vld [vmem:[#allocation2 + $0x190] sm:$0xff]
          %v1657 = vld [vmem:[#allocation2 + $0x198] sm:$0xff]
          %v1658 = vld [vmem:[#allocation2 + $0x1a0] sm:$0xff]
          %v1659 = vld [vmem:[#allocation2 + $0x1a8] sm:$0xff]
          %v1660 = vld [vmem:[#allocation2 + $0x1b0] sm:$0xff]
          %v1661 = vld [vmem:[#allocation2 + $0x1b8] sm:$0xff]
          %v1662 = vld [vmem:[#allocation2 + $0x1c0] sm:$0xff]
          %v1663 = vld [vmem:[#allocation2 + $0x1c8] sm:$0xff]
          %v1664 = vld [vmem:[#allocation2 + $0x1d0] sm:$0xff]
          %v1665 = vld [vmem:[#allocation2 + $0x1d8] sm:$0xff]
          %v1666 = vld [vmem:[#allocation2 + $0x1e0] sm:$0xff]
          %v1667 = vld [vmem:[#allocation2 + $0x1e8] sm:$0xff]
          %v1668 = vld [vmem:[#allocation2 + $0x1f0] sm:$0xff]
          %v1669 = vld [vmem:[#allocation2 + $0x1f8] sm:$0xff]
          %v1670 = vld [vmem:[#allocation2 + $0x200] sm:$0xff]
          %v1671 = vld [vmem:[#allocation2 + $0x208] sm:$0xff]
          %v1672 = vld [vmem:[#allocation2 + $0x210] sm:$0xff]
          %v1673 = vld [vmem:[#allocation2 + $0x218] sm:$0xff]
          %v1674 = vld [vmem:[#allocation2 + $0x220] sm:$0xff]
          %v1675 = vld [vmem:[#allocation2 + $0x228] sm:$0xff]
          %v1676 = vld [vmem:[#allocation2 + $0x230] sm:$0xff]
          %v1677 = vld [vmem:[#allocation2 + $0x238] sm:$0xff]
          %v1678 = vld [vmem:[#allocation2 + $0x240] sm:$0xff]
          %v1679 = vld [vmem:[#allocation2 + $0x248] sm:$0xff]
          %v1680 = vld [vmem:[#allocation2 + $0x250] sm:$0xff]
          %v1681 = vld [vmem:[#allocation2 + $0x258] sm:$0xff]
          %v1682 = vld [vmem:[#allocation2 + $0x260] sm:$0xff]
          %v1683 = vld [vmem:[#allocation2 + $0x268] sm:$0xff]
          %v1684 = vld [vmem:[#allocation2 + $0x270] sm:$0xff]
          %v1685 = vld [vmem:[#allocation2 + $0x278] sm:$0xff]
          %v1686 = vld [vmem:[#allocation2 + $0x280] sm:$0xff]
          %v1687 = vld [vmem:[#allocation2 + $0x288] sm:$0xff]
          %v1688 = vld [vmem:[#allocation2 + $0x290] sm:$0xff]
          %v1689 = vld [vmem:[#allocation2 + $0x298] sm:$0xff]
          %v1690 = vld [vmem:[#allocation2 + $0x2a0] sm:$0xff]
          %v1691 = vld [vmem:[#allocation2 + $0x2a8] sm:$0xff]
          %v1692 = vld [vmem:[#allocation2 + $0x2b0] sm:$0xff]
          %v1693 = vld [vmem:[#allocation2 + $0x2b8] sm:$0xff]
          %v1694 = vld [vmem:[#allocation2 + $0x2c0] sm:$0xff]
          %v1695 = vld [vmem:[#allocation2 + $0x2c8] sm:$0xff]
          %v1696 = vld [vmem:[#allocation2 + $0x2d0] sm:$0xff]
          %v1697 = vld [vmem:[#allocation2 + $0x2d8] sm:$0xff]
          %v1698 = vld [vmem:[#allocation2 + $0x2e0] sm:$0xff]
          %v1699 = vld [vmem:[#allocation2 + $0x2e8] sm:$0xff]
          %v1700 = vld [vmem:[#allocation2 + $0x2f0] sm:$0xff]
          %v1701 = vld [vmem:[#allocation2 + $0x2f8] sm:$0xff]
          %v1702 = vld [vmem:[#allocation2 + $0x300] sm:$0xff]
          %v1703 = vld [vmem:[#allocation2 + $0x308] sm:$0xff]
          %v1704 = vld [vmem:[#allocation2 + $0x310] sm:$0xff]
          %v1705 = vld [vmem:[#allocation2 + $0x318] sm:$0xff]
          %v1706 = vld [vmem:[#allocation2 + $0x320] sm:$0xff]
          %v1707 = vld [vmem:[#allocation2 + $0x328] sm:$0xff]
          %v1708 = vld [vmem:[#allocation2 + $0x330] sm:$0xff]
          %v1709 = vld [vmem:[#allocation2 + $0x338] sm:$0xff]
          %v1710 = vld [vmem:[#allocation2 + $0x340] sm:$0xff]
          %v1711 = vld [vmem:[#allocation2 + $0x348] sm:$0xff]
          %v1712 = vld [vmem:[#allocation2 + $0x350] sm:$0xff]
          %v1713 = vld [vmem:[#allocation2 + $0x358] sm:$0xff]
          %v1714 = vld [vmem:[#allocation2 + $0x360] sm:$0xff]
          %v1715 = vld [vmem:[#allocation2 + $0x368] sm:$0xff]
          %v1716 = vld [vmem:[#allocation2 + $0x370] sm:$0xff]
          %v1717 = vld [vmem:[#allocation2 + $0x378] sm:$0xff]
          %v1718 = vld [vmem:[#allocation2 + $0x380] sm:$0xff]
          %v1719 = vld [vmem:[#allocation2 + $0x388] sm:$0xff]
          %v1720 = vld [vmem:[#allocation2 + $0x390] sm:$0xff]
          %v1721 = vld [vmem:[#allocation2 + $0x398] sm:$0xff]
          %v1722 = vld [vmem:[#allocation2 + $0x3a0] sm:$0xff]
          %v1723 = vld [vmem:[#allocation2 + $0x3a8] sm:$0xff]
          %v1724 = vld [vmem:[#allocation2 + $0x3b0] sm:$0xff]
          %v1725 = vld [vmem:[#allocation2 + $0x3b8] sm:$0xff]
          %v1726 = vld [vmem:[#allocation2 + $0x3c0] sm:$0xff]
          %v1727 = vld [vmem:[#allocation2 + $0x3c8] sm:$0xff]
          %v1728 = vld [vmem:[#allocation2 + $0x3d0] sm:$0xff]
          %v1729 = vld [vmem:[#allocation2 + $0x3d8] sm:$0xff]
          %v1730 = vld [vmem:[#allocation2 + $0x3e0] sm:$0xff]
          %v1731 = vld [vmem:[#allocation2 + $0x3e8] sm:$0xff]
          %v1732 = vld [vmem:[#allocation2 + $0x3f0] sm:$0xff]
          %v1733 = vld [vmem:[#allocation2 + $0x3f8] sm:$0xff]
          %v1734 = vld [vmem:[%s2] sm:$0xf]
          %v1736 = vlaneseq
          %v1737 = vshrl.u32 %v1736, 7
          %v1738 = vsub.s32 0, %v1737
          %v1739 = vrot.slane %v1734, %v1738
          %v1740 = vlaneseq
          %v1741 = vshrl.u32 %v1740, 7
          %v1742 = vsub.s32 1, %v1741
          %v1743 = vrot.slane %v1734, %v1742
          %v1744 = vlaneseq
          %v1745 = vshrl.u32 %v1744, 7
          %v1746 = vsub.s32 2, %v1745
          %v1747 = vrot.slane %v1734, %v1746
          %v1748 = vlaneseq
          %v1749 = vshrl.u32 %v1748, 7
          %v1750 = vsub.s32 3, %v1749
          %v1751 = vrot.slane %v1734, %v1750
          %v1756 = vadd.f32 %v1606, %v1739
          %v1757 = vadd.f32 %v1607, %v1743
          %v1758 = vadd.f32 %v1608, %v1747
          %v1759 = vadd.f32 %v1609, %v1751
          %v1760 = vadd.f32 %v1610, %v1739
          %v1761 = vadd.f32 %v1611, %v1743
          %v1762 = vadd.f32 %v1612, %v1747
          %v1763 = vadd.f32 %v1613, %v1751
          %v1764 = vadd.f32 %v1614, %v1739
          %v1765 = vadd.f32 %v1615, %v1743
          %v1766 = vadd.f32 %v1616, %v1747
          %v1767 = vadd.f32 %v1617, %v1751
          %v1768 = vadd.f32 %v1618, %v1739
          %v1769 = vadd.f32 %v1619, %v1743
          %v1770 = vadd.f32 %v1620, %v1747
          %v1771 = vadd.f32 %v1621, %v1751
          %v1772 = vadd.f32 %v1622, %v1739
          %v1773 = vadd.f32 %v1623, %v1743
          %v1774 = vadd.f32 %v1624, %v1747
          %v1775 = vadd.f32 %v1625, %v1751
          %v1776 = vadd.f32 %v1626, %v1739
          %v1777 = vadd.f32 %v1627, %v1743
          %v1778 = vadd.f32 %v1628, %v1747
          %v1779 = vadd.f32 %v1629, %v1751
          %v1780 = vadd.f32 %v1630, %v1739
          %v1781 = vadd.f32 %v1631, %v1743
          %v1782 = vadd.f32 %v1632, %v1747
          %v1783 = vadd.f32 %v1633, %v1751
          %v1784 = vadd.f32 %v1634, %v1739
          %v1785 = vadd.f32 %v1635, %v1743
          %v1786 = vadd.f32 %v1636, %v1747
          %v1787 = vadd.f32 %v1637, %v1751
          %v1788 = vadd.f32 %v1638, %v1739
          %v1789 = vadd.f32 %v1639, %v1743
          %v1790 = vadd.f32 %v1640, %v1747
          %v1791 = vadd.f32 %v1641, %v1751
          %v1792 = vadd.f32 %v1642, %v1739
          %v1793 = vadd.f32 %v1643, %v1743
          %v1794 = vadd.f32 %v1644, %v1747
          %v1795 = vadd.f32 %v1645, %v1751
          %v1796 = vadd.f32 %v1646, %v1739
          %v1797 = vadd.f32 %v1647, %v1743
          %v1798 = vadd.f32 %v1648, %v1747
          %v1799 = vadd.f32 %v1649, %v1751
          %v1800 = vadd.f32 %v1650, %v1739
          %v1801 = vadd.f32 %v1651, %v1743
          %v1802 = vadd.f32 %v1652, %v1747
          %v1803 = vadd.f32 %v1653, %v1751
          %v1804 = vadd.f32 %v1654, %v1739
          %v1805 = vadd.f32 %v1655, %v1743
          %v1806 = vadd.f32 %v1656, %v1747
          %v1807 = vadd.f32 %v1657, %v1751
          %v1808 = vadd.f32 %v1658, %v1739
          %v1809 = vadd.f32 %v1659, %v1743
          %v1810 = vadd.f32 %v1660, %v1747
          %v1811 = vadd.f32 %v1661, %v1751
          %v1812 = vadd.f32 %v1662, %v1739
          %v1813 = vadd.f32 %v1663, %v1743
          %v1814 = vadd.f32 %v1664, %v1747
          %v1815 = vadd.f32 %v1665, %v1751
          %v1816 = vadd.f32 %v1666, %v1739
          %v1817 = vadd.f32 %v1667, %v1743
          %v1818 = vadd.f32 %v1668, %v1747
          %v1819 = vadd.f32 %v1669, %v1751
          %v1820 = vadd.f32 %v1670, %v1739
          %v1821 = vadd.f32 %v1671, %v1743
          %v1822 = vadd.f32 %v1672, %v1747
          %v1823 = vadd.f32 %v1673, %v1751
          %v1824 = vadd.f32 %v1674, %v1739
          %v1825 = vadd.f32 %v1675, %v1743
          %v1826 = vadd.f32 %v1676, %v1747
          %v1827 = vadd.f32 %v1677, %v1751
          %v1828 = vadd.f32 %v1678, %v1739
          %v1829 = vadd.f32 %v1679, %v1743
          %v1830 = vadd.f32 %v1680, %v1747
          %v1831 = vadd.f32 %v1681, %v1751
          %v1832 = vadd.f32 %v1682, %v1739
          %v1833 = vadd.f32 %v1683, %v1743
          %v1834 = vadd.f32 %v1684, %v1747
          %v1835 = vadd.f32 %v1685, %v1751
          %v1836 = vadd.f32 %v1686, %v1739
          %v1837 = vadd.f32 %v1687, %v1743
          %v1838 = vadd.f32 %v1688, %v1747
          %v1839 = vadd.f32 %v1689, %v1751
          %v1840 = vadd.f32 %v1690, %v1739
          %v1841 = vadd.f32 %v1691, %v1743
          %v1842 = vadd.f32 %v1692, %v1747
          %v1843 = vadd.f32 %v1693, %v1751
          %v1844 = vadd.f32 %v1694, %v1739
          %v1845 = vadd.f32 %v1695, %v1743
          %v1846 = vadd.f32 %v1696, %v1747
          %v1847 = vadd.f32 %v1697, %v1751
          %v1848 = vadd.f32 %v1698, %v1739
          %v1849 = vadd.f32 %v1699, %v1743
          %v1850 = vadd.f32 %v1700, %v1747
          %v1851 = vadd.f32 %v1701, %v1751
          %v1852 = vadd.f32 %v1702, %v1739
          %v1853 = vadd.f32 %v1703, %v1743
          %v1854 = vadd.f32 %v1704, %v1747
          %v1855 = vadd.f32 %v1705, %v1751
          %v1856 = vadd.f32 %v1706, %v1739
          %v1857 = vadd.f32 %v1707, %v1743
          %v1858 = vadd.f32 %v1708, %v1747
          %v1859 = vadd.f32 %v1709, %v1751
          %v1860 = vadd.f32 %v1710, %v1739
          %v1861 = vadd.f32 %v1711, %v1743
          %v1862 = vadd.f32 %v1712, %v1747
          %v1863 = vadd.f32 %v1713, %v1751
          %v1864 = vadd.f32 %v1714, %v1739
          %v1865 = vadd.f32 %v1715, %v1743
          %v1866 = vadd.f32 %v1716, %v1747
          %v1867 = vadd.f32 %v1717, %v1751
          %v1868 = vadd.f32 %v1718, %v1739
          %v1869 = vadd.f32 %v1719, %v1743
          %v1870 = vadd.f32 %v1720, %v1747
          %v1871 = vadd.f32 %v1721, %v1751
          %v1872 = vadd.f32 %v1722, %v1739
          %v1873 = vadd.f32 %v1723, %v1743
          %v1874 = vadd.f32 %v1724, %v1747
          %v1875 = vadd.f32 %v1725, %v1751
          %v1876 = vadd.f32 %v1726, %v1739
          %v1877 = vadd.f32 %v1727, %v1743
          %v1878 = vadd.f32 %v1728, %v1747
          %v1879 = vadd.f32 %v1729, %v1751
          %v1880 = vadd.f32 %v1730, %v1739
          %v1881 = vadd.f32 %v1731, %v1743
          %v1882 = vadd.f32 %v1732, %v1747
          %v1883 = vadd.f32 %v1733, %v1751
          %v1884 = vmax.f32 %v1756, 0.0
          %v1885 = vmax.f32 %v1757, 0.0
          %v1886 = vmax.f32 %v1758, 0.0
          %v1887 = vmax.f32 %v1759, 0.0
          %v1888 = vmax.f32 %v1760, 0.0
          %v1889 = vmax.f32 %v1761, 0.0
          %v1890 = vmax.f32 %v1762, 0.0
          %v1891 = vmax.f32 %v1763, 0.0
          %v1892 = vmax.f32 %v1764, 0.0
          %v1893 = vmax.f32 %v1765, 0.0
          %v1894 = vmax.f32 %v1766, 0.0
          %v1895 = vmax.f32 %v1767, 0.0
          %v1896 = vmax.f32 %v1768, 0.0
          %v1897 = vmax.f32 %v1769, 0.0
          %v1898 = vmax.f32 %v1770, 0.0
          %v1899 = vmax.f32 %v1771, 0.0
          %v1900 = vmax.f32 %v1772, 0.0
          %v1901 = vmax.f32 %v1773, 0.0
          %v1902 = vmax.f32 %v1774, 0.0
          %v1903 = vmax.f32 %v1775, 0.0
          %v1904 = vmax.f32 %v1776, 0.0
          %v1905 = vmax.f32 %v1777, 0.0
          %v1906 = vmax.f32 %v1778, 0.0
          %v1907 = vmax.f32 %v1779, 0.0
          %v1908 = vmax.f32 %v1780, 0.0
          %v1909 = vmax.f32 %v1781, 0.0
          %v1910 = vmax.f32 %v1782, 0.0
          %v1911 = vmax.f32 %v1783, 0.0
          %v1912 = vmax.f32 %v1784, 0.0
          %v1913 = vmax.f32 %v1785, 0.0
          %v1914 = vmax.f32 %v1786, 0.0
          %v1915 = vmax.f32 %v1787, 0.0
          %v1916 = vmax.f32 %v1788, 0.0
          %v1917 = vmax.f32 %v1789, 0.0
          %v1918 = vmax.f32 %v1790, 0.0
          %v1919 = vmax.f32 %v1791, 0.0
          %v1920 = vmax.f32 %v1792, 0.0
          %v1921 = vmax.f32 %v1793, 0.0
          %v1922 = vmax.f32 %v1794, 0.0
          %v1923 = vmax.f32 %v1795, 0.0
          %v1924 = vmax.f32 %v1796, 0.0
          %v1925 = vmax.f32 %v1797, 0.0
          %v1926 = vmax.f32 %v1798, 0.0
          %v1927 = vmax.f32 %v1799, 0.0
          %v1928 = vmax.f32 %v1800, 0.0
          %v1929 = vmax.f32 %v1801, 0.0
          %v1930 = vmax.f32 %v1802, 0.0
          %v1931 = vmax.f32 %v1803, 0.0
          %v1932 = vmax.f32 %v1804, 0.0
          %v1933 = vmax.f32 %v1805, 0.0
          %v1934 = vmax.f32 %v1806, 0.0
          %v1935 = vmax.f32 %v1807, 0.0
          %v1936 = vmax.f32 %v1808, 0.0
          %v1937 = vmax.f32 %v1809, 0.0
          %v1938 = vmax.f32 %v1810, 0.0
          %v1939 = vmax.f32 %v1811, 0.0
          %v1940 = vmax.f32 %v1812, 0.0
          %v1941 = vmax.f32 %v1813, 0.0
          %v1942 = vmax.f32 %v1814, 0.0
          %v1943 = vmax.f32 %v1815, 0.0
          %v1944 = vmax.f32 %v1816, 0.0
          %v1945 = vmax.f32 %v1817, 0.0
          %v1946 = vmax.f32 %v1818, 0.0
          %v1947 = vmax.f32 %v1819, 0.0
          %v1948 = vmax.f32 %v1820, 0.0
          %v1949 = vmax.f32 %v1821, 0.0
          %v1950 = vmax.f32 %v1822, 0.0
          %v1951 = vmax.f32 %v1823, 0.0
          %v1952 = vmax.f32 %v1824, 0.0
          %v1953 = vmax.f32 %v1825, 0.0
          %v1954 = vmax.f32 %v1826, 0.0
          %v1955 = vmax.f32 %v1827, 0.0
          %v1956 = vmax.f32 %v1828, 0.0
          %v1957 = vmax.f32 %v1829, 0.0
          %v1958 = vmax.f32 %v1830, 0.0
          %v1959 = vmax.f32 %v1831, 0.0
          %v1960 = vmax.f32 %v1832, 0.0
          %v1961 = vmax.f32 %v1833, 0.0
          %v1962 = vmax.f32 %v1834, 0.0
          %v1963 = vmax.f32 %v1835, 0.0
          %v1964 = vmax.f32 %v1836, 0.0
          %v1965 = vmax.f32 %v1837, 0.0
          %v1966 = vmax.f32 %v1838, 0.0
          %v1967 = vmax.f32 %v1839, 0.0
          %v1968 = vmax.f32 %v1840, 0.0
          %v1969 = vmax.f32 %v1841, 0.0
          %v1970 = vmax.f32 %v1842, 0.0
          %v1971 = vmax.f32 %v1843, 0.0
          %v1972 = vmax.f32 %v1844, 0.0
          %v1973 = vmax.f32 %v1845, 0.0
          %v1974 = vmax.f32 %v1846, 0.0
          %v1975 = vmax.f32 %v1847, 0.0
          %v1976 = vmax.f32 %v1848, 0.0
          %v1977 = vmax.f32 %v1849, 0.0
          %v1978 = vmax.f32 %v1850, 0.0
          %v1979 = vmax.f32 %v1851, 0.0
          %v1980 = vmax.f32 %v1852, 0.0
          %v1981 = vmax.f32 %v1853, 0.0
          %v1982 = vmax.f32 %v1854, 0.0
          %v1983 = vmax.f32 %v1855, 0.0
          %v1984 = vmax.f32 %v1856, 0.0
          %v1985 = vmax.f32 %v1857, 0.0
          %v1986 = vmax.f32 %v1858, 0.0
          %v1987 = vmax.f32 %v1859, 0.0
          %v1988 = vmax.f32 %v1860, 0.0
          %v1989 = vmax.f32 %v1861, 0.0
          %v1990 = vmax.f32 %v1862, 0.0
          %v1991 = vmax.f32 %v1863, 0.0
          %v1992 = vmax.f32 %v1864, 0.0
          %v1993 = vmax.f32 %v1865, 0.0
          %v1994 = vmax.f32 %v1866, 0.0
          %v1995 = vmax.f32 %v1867, 0.0
          %v1996 = vmax.f32 %v1868, 0.0
          %v1997 = vmax.f32 %v1869, 0.0
          %v1998 = vmax.f32 %v1870, 0.0
          %v1999 = vmax.f32 %v1871, 0.0
          %v2000 = vmax.f32 %v1872, 0.0
          %v2001 = vmax.f32 %v1873, 0.0
          %v2002 = vmax.f32 %v1874, 0.0
          %v2003 = vmax.f32 %v1875, 0.0
          %v2004 = vmax.f32 %v1876, 0.0
          %v2005 = vmax.f32 %v1877, 0.0
          %v2006 = vmax.f32 %v1878, 0.0
          %v2007 = vmax.f32 %v1879, 0.0
          %v2008 = vmax.f32 %v1880, 0.0
          %v2009 = vmax.f32 %v1881, 0.0
          %v2010 = vmax.f32 %v1882, 0.0
          %v2011 = vmax.f32 %v1883, 0.0
          %v2012 = vpack.c.bf16 %v1888, %v1884
          %v2013 = vpack.c.bf16 %v1889, %v1885
          %v2014 = vpack.c.bf16 %v1890, %v1886
          %v2015 = vpack.c.bf16 %v1891, %v1887
          %v2016 = vpack.c.bf16 %v1896, %v1892
          %v2017 = vpack.c.bf16 %v1897, %v1893
          %v2018 = vpack.c.bf16 %v1898, %v1894
          %v2019 = vpack.c.bf16 %v1899, %v1895
          %v2020 = vpack.c.bf16 %v1904, %v1900
          %v2021 = vpack.c.bf16 %v1905, %v1901
          %v2022 = vpack.c.bf16 %v1906, %v1902
          %v2023 = vpack.c.bf16 %v1907, %v1903
          %v2024 = vpack.c.bf16 %v1912, %v1908
          %v2025 = vpack.c.bf16 %v1913, %v1909
          %v2026 = vpack.c.bf16 %v1914, %v1910
          %v2027 = vpack.c.bf16 %v1915, %v1911
          %v2028 = vpack.c.bf16 %v1920, %v1916
          %v2029 = vpack.c.bf16 %v1921, %v1917
          %v2030 = vpack.c.bf16 %v1922, %v1918
          %v2031 = vpack.c.bf16 %v1923, %v1919
          %v2032 = vpack.c.bf16 %v1928, %v1924
          %v2033 = vpack.c.bf16 %v1929, %v1925
          %v2034 = vpack.c.bf16 %v1930, %v1926
          %v2035 = vpack.c.bf16 %v1931, %v1927
          %v2036 = vpack.c.bf16 %v1936, %v1932
          %v2037 = vpack.c.bf16 %v1937, %v1933
          %v2038 = vpack.c.bf16 %v1938, %v1934
          %v2039 = vpack.c.bf16 %v1939, %v1935
          %v2040 = vpack.c.bf16 %v1944, %v1940
          %v2041 = vpack.c.bf16 %v1945, %v1941
          %v2042 = vpack.c.bf16 %v1946, %v1942
          %v2043 = vpack.c.bf16 %v1947, %v1943
          %v2044 = vpack.c.bf16 %v1952, %v1948
          %v2045 = vpack.c.bf16 %v1953, %v1949
          %v2046 = vpack.c.bf16 %v1954, %v1950
          %v2047 = vpack.c.bf16 %v1955, %v1951
          %v2048 = vpack.c.bf16 %v1960, %v1956
          %v2049 = vpack.c.bf16 %v1961, %v1957
          %v2050 = vpack.c.bf16 %v1962, %v1958
          %v2051 = vpack.c.bf16 %v1963, %v1959
          %v2052 = vpack.c.bf16 %v1968, %v1964
          %v2053 = vpack.c.bf16 %v1969, %v1965
          %v2054 = vpack.c.bf16 %v1970, %v1966
          %v2055 = vpack.c.bf16 %v1971, %v1967
          %v2056 = vpack.c.bf16 %v1976, %v1972
          %v2057 = vpack.c.bf16 %v1977, %v1973
          %v2058 = vpack.c.bf16 %v1978, %v1974
          %v2059 = vpack.c.bf16 %v1979, %v1975
          %v2060 = vpack.c.bf16 %v1984, %v1980
          %v2061 = vpack.c.bf16 %v1985, %v1981
          %v2062 = vpack.c.bf16 %v1986, %v1982
          %v2063 = vpack.c.bf16 %v1987, %v1983
          %v2064 = vpack.c.bf16 %v1992, %v1988
          %v2065 = vpack.c.bf16 %v1993, %v1989
          %v2066 = vpack.c.bf16 %v1994, %v1990
          %v2067 = vpack.c.bf16 %v1995, %v1991
          %v2068 = vpack.c.bf16 %v2000, %v1996
          %v2069 = vpack.c.bf16 %v2001, %v1997
          %v2070 = vpack.c.bf16 %v2002, %v1998
          %v2071 = vpack.c.bf16 %v2003, %v1999
          %v2072 = vpack.c.bf16 %v2008, %v2004
          %v2073 = vpack.c.bf16 %v2009, %v2005
          %v2074 = vpack.c.bf16 %v2010, %v2006
          %v2075 = vpack.c.bf16 %v2011, %v2007
          %v2076 = vld [vmem:[%s3] sm:$0xff]
          %v2077 = vld [vmem:[%s3 + $0x8] sm:$0xff]
          %v2078 = vld [vmem:[%s3 + $0x10] sm:$0xff]
          %v2079 = vld [vmem:[%s3 + $0x18] sm:$0xff]
          %v2080 = vld [vmem:[%s3 + $0x20] sm:$0xff]
          %v2081 = vld [vmem:[%s3 + $0x28] sm:$0xff]
          %v2082 = vld [vmem:[%s3 + $0x30] sm:$0xff]
          %v2083 = vld [vmem:[%s3 + $0x38] sm:$0xff]
          %v2084 = vld [vmem:[%s3 + $0x40] sm:$0xff]
          %v2085 = vld [vmem:[%s3 + $0x48] sm:$0xff]
          %v2086 = vld [vmem:[%s3 + $0x50] sm:$0xff]
          %v2087 = vld [vmem:[%s3 + $0x58] sm:$0xff]
          %v2088 = vld [vmem:[%s3 + $0x60] sm:$0xff]
          %v2089 = vld [vmem:[%s3 + $0x68] sm:$0xff]
          %v2090 = vld [vmem:[%s3 + $0x70] sm:$0xff]
          %v2091 = vld [vmem:[%s3 + $0x78] sm:$0xff]
          %v2092 = vld [vmem:[%s3 + $0x80] sm:$0xff]
          %v2093 = vld [vmem:[%s3 + $0x88] sm:$0xff]
          %v2094 = vld [vmem:[%s3 + $0x90] sm:$0xff]
          %v2095 = vld [vmem:[%s3 + $0x98] sm:$0xff]
          %v2096 = vld [vmem:[%s3 + $0xa0] sm:$0xff]
          %v2097 = vld [vmem:[%s3 + $0xa8] sm:$0xff]
          %v2098 = vld [vmem:[%s3 + $0xb0] sm:$0xff]
          %v2099 = vld [vmem:[%s3 + $0xb8] sm:$0xff]
          %v2100 = vld [vmem:[%s3 + $0xc0] sm:$0xff]
          %v2101 = vld [vmem:[%s3 + $0xc8] sm:$0xff]
          %v2102 = vld [vmem:[%s3 + $0xd0] sm:$0xff]
          %v2103 = vld [vmem:[%s3 + $0xd8] sm:$0xff]
          %v2104 = vld [vmem:[%s3 + $0xe0] sm:$0xff]
          %v2105 = vld [vmem:[%s3 + $0xe8] sm:$0xff]
          %v2106 = vld [vmem:[%s3 + $0xf0] sm:$0xff]
          %v2107 = vld [vmem:[%s3 + $0xf8] sm:$0xff]
          %v2108 = vld [vmem:[%s3 + $0x100] sm:$0xff]
          %v2109 = vld [vmem:[%s3 + $0x108] sm:$0xff]
          %v2110 = vld [vmem:[%s3 + $0x110] sm:$0xff]
          %v2111 = vld [vmem:[%s3 + $0x118] sm:$0xff]
          %v2112 = vld [vmem:[%s3 + $0x120] sm:$0xff]
          %v2113 = vld [vmem:[%s3 + $0x128] sm:$0xff]
          %v2114 = vld [vmem:[%s3 + $0x130] sm:$0xff]
          %v2115 = vld [vmem:[%s3 + $0x138] sm:$0xff]
          %v2116 = vld [vmem:[%s3 + $0x140] sm:$0xff]
          %v2117 = vld [vmem:[%s3 + $0x148] sm:$0xff]
          %v2118 = vld [vmem:[%s3 + $0x150] sm:$0xff]
          %v2119 = vld [vmem:[%s3 + $0x158] sm:$0xff]
          %v2120 = vld [vmem:[%s3 + $0x160] sm:$0xff]
          %v2121 = vld [vmem:[%s3 + $0x168] sm:$0xff]
          %v2122 = vld [vmem:[%s3 + $0x170] sm:$0xff]
          %v2123 = vld [vmem:[%s3 + $0x178] sm:$0xff]
          %v2124 = vld [vmem:[%s3 + $0x180] sm:$0xff]
          %v2125 = vld [vmem:[%s3 + $0x188] sm:$0xff]
          %v2126 = vld [vmem:[%s3 + $0x190] sm:$0xff]
          %v2127 = vld [vmem:[%s3 + $0x198] sm:$0xff]
          %v2128 = vld [vmem:[%s3 + $0x1a0] sm:$0xff]
          %v2129 = vld [vmem:[%s3 + $0x1a8] sm:$0xff]
          %v2130 = vld [vmem:[%s3 + $0x1b0] sm:$0xff]
          %v2131 = vld [vmem:[%s3 + $0x1b8] sm:$0xff]
          %v2132 = vld [vmem:[%s3 + $0x1c0] sm:$0xff]
          %v2133 = vld [vmem:[%s3 + $0x1c8] sm:$0xff]
          %v2134 = vld [vmem:[%s3 + $0x1d0] sm:$0xff]
          %v2135 = vld [vmem:[%s3 + $0x1d8] sm:$0xff]
          %v2136 = vld [vmem:[%s3 + $0x1e0] sm:$0xff]
          %v2137 = vld [vmem:[%s3 + $0x1e8] sm:$0xff]
          %v2138 = vld [vmem:[%s3 + $0x1f0] sm:$0xff]
          %v2139 = vld [vmem:[%s3 + $0x1f8] sm:$0xff]
          %v2140 = vld [vmem:[%s4] sm:$0x3]
          %v2142 = vlaneseq
          %v2143 = vshrl.u32 %v2142, 7
          %v2144 = vsub.s32 0, %v2143
          %v2145 = vrot.slane %v2140, %v2144
          %v2146 = vlaneseq
          %v2147 = vshrl.u32 %v2146, 7
          %v2148 = vsub.s32 1, %v2147
          %v2149 = vrot.slane %v2140, %v2148
          %v2216 = vunpack.c.l.b16 %v2076
          %v2217 = vunpack.c.h.b16 %v2076
          %v2218 = vunpack.c.l.b16 %v2077
          %v2219 = vunpack.c.h.b16 %v2077
          %v2220 = vunpack.c.l.b16 %v2078
          %v2221 = vunpack.c.h.b16 %v2078
          %v2222 = vunpack.c.l.b16 %v2079
          %v2223 = vunpack.c.h.b16 %v2079
          %v2224 = vunpack.c.l.b16 %v2080
          %v2225 = vunpack.c.h.b16 %v2080
          %v2226 = vunpack.c.l.b16 %v2081
          %v2227 = vunpack.c.h.b16 %v2081
          %v2228 = vunpack.c.l.b16 %v2082
          %v2229 = vunpack.c.h.b16 %v2082
          %v2230 = vunpack.c.l.b16 %v2083
          %v2231 = vunpack.c.h.b16 %v2083
          %v2232 = vunpack.c.l.b16 %v2084
          %v2233 = vunpack.c.h.b16 %v2084
          %v2234 = vunpack.c.l.b16 %v2085
          %v2235 = vunpack.c.h.b16 %v2085
          %v2236 = vunpack.c.l.b16 %v2086
          %v2237 = vunpack.c.h.b16 %v2086
          %v2238 = vunpack.c.l.b16 %v2087
          %v2239 = vunpack.c.h.b16 %v2087
          %v2240 = vunpack.c.l.b16 %v2088
          %v2241 = vunpack.c.h.b16 %v2088
          %v2242 = vunpack.c.l.b16 %v2089
          %v2243 = vunpack.c.h.b16 %v2089
          %v2244 = vunpack.c.l.b16 %v2090
          %v2245 = vunpack.c.h.b16 %v2090
          %v2246 = vunpack.c.l.b16 %v2091
          %v2247 = vunpack.c.h.b16 %v2091
          %v2248 = vunpack.c.l.b16 %v2092
          %v2249 = vunpack.c.h.b16 %v2092
          %v2250 = vunpack.c.l.b16 %v2093
          %v2251 = vunpack.c.h.b16 %v2093
          %v2252 = vunpack.c.l.b16 %v2094
          %v2253 = vunpack.c.h.b16 %v2094
          %v2254 = vunpack.c.l.b16 %v2095
          %v2255 = vunpack.c.h.b16 %v2095
          %v2256 = vunpack.c.l.b16 %v2096
          %v2257 = vunpack.c.h.b16 %v2096
          %v2258 = vunpack.c.l.b16 %v2097
          %v2259 = vunpack.c.h.b16 %v2097
          %v2260 = vunpack.c.l.b16 %v2098
          %v2261 = vunpack.c.h.b16 %v2098
          %v2262 = vunpack.c.l.b16 %v2099
          %v2263 = vunpack.c.h.b16 %v2099
          %v2264 = vunpack.c.l.b16 %v2100
          %v2265 = vunpack.c.h.b16 %v2100
          %v2266 = vunpack.c.l.b16 %v2101
          %v2267 = vunpack.c.h.b16 %v2101
          %v2268 = vunpack.c.l.b16 %v2102
          %v2269 = vunpack.c.h.b16 %v2102
          %v2270 = vunpack.c.l.b16 %v2103
          %v2271 = vunpack.c.h.b16 %v2103
          %v2272 = vunpack.c.l.b16 %v2104
          %v2273 = vunpack.c.h.b16 %v2104
          %v2274 = vunpack.c.l.b16 %v2105
          %v2275 = vunpack.c.h.b16 %v2105
          %v2276 = vunpack.c.l.b16 %v2106
          %v2277 = vunpack.c.h.b16 %v2106
          %v2278 = vunpack.c.l.b16 %v2107
          %v2279 = vunpack.c.h.b16 %v2107
          %v2280 = vunpack.c.l.b16 %v2108
          %v2281 = vunpack.c.h.b16 %v2108
          %v2282 = vunpack.c.l.b16 %v2109
          %v2283 = vunpack.c.h.b16 %v2109
          %v2284 = vunpack.c.l.b16 %v2110
          %v2285 = vunpack.c.h.b16 %v2110
          %v2286 = vunpack.c.l.b16 %v2111
          %v2287 = vunpack.c.h.b16 %v2111
          %v2288 = vunpack.c.l.b16 %v2112
          %v2289 = vunpack.c.h.b16 %v2112
          %v2290 = vunpack.c.l.b16 %v2113
          %v2291 = vunpack.c.h.b16 %v2113
          %v2292 = vunpack.c.l.b16 %v2114
          %v2293 = vunpack.c.h.b16 %v2114
          %v2294 = vunpack.c.l.b16 %v2115
          %v2295 = vunpack.c.h.b16 %v2115
          %v2296 = vunpack.c.l.b16 %v2116
          %v2297 = vunpack.c.h.b16 %v2116
          %v2298 = vunpack.c.l.b16 %v2117
          %v2299 = vunpack.c.h.b16 %v2117
          %v2300 = vunpack.c.l.b16 %v2118
          %v2301 = vunpack.c.h.b16 %v2118
          %v2302 = vunpack.c.l.b16 %v2119
          %v2303 = vunpack.c.h.b16 %v2119
          %v2304 = vunpack.c.l.b16 %v2120
          %v2305 = vunpack.c.h.b16 %v2120
          %v2306 = vunpack.c.l.b16 %v2121
          %v2307 = vunpack.c.h.b16 %v2121
          %v2308 = vunpack.c.l.b16 %v2122
          %v2309 = vunpack.c.h.b16 %v2122
          %v2310 = vunpack.c.l.b16 %v2123
          %v2311 = vunpack.c.h.b16 %v2123
          %v2312 = vunpack.c.l.b16 %v2124
          %v2313 = vunpack.c.h.b16 %v2124
          %v2314 = vunpack.c.l.b16 %v2125
          %v2315 = vunpack.c.h.b16 %v2125
          %v2316 = vunpack.c.l.b16 %v2126
          %v2317 = vunpack.c.h.b16 %v2126
          %v2318 = vunpack.c.l.b16 %v2127
          %v2319 = vunpack.c.h.b16 %v2127
          %v2320 = vunpack.c.l.b16 %v2128
          %v2321 = vunpack.c.h.b16 %v2128
          %v2322 = vunpack.c.l.b16 %v2129
          %v2323 = vunpack.c.h.b16 %v2129
          %v2324 = vunpack.c.l.b16 %v2130
          %v2325 = vunpack.c.h.b16 %v2130
          %v2326 = vunpack.c.l.b16 %v2131
          %v2327 = vunpack.c.h.b16 %v2131
          %v2328 = vunpack.c.l.b16 %v2132
          %v2329 = vunpack.c.h.b16 %v2132
          %v2330 = vunpack.c.l.b16 %v2133
          %v2331 = vunpack.c.h.b16 %v2133
          %v2332 = vunpack.c.l.b16 %v2134
          %v2333 = vunpack.c.h.b16 %v2134
          %v2334 = vunpack.c.l.b16 %v2135
          %v2335 = vunpack.c.h.b16 %v2135
          %v2336 = vunpack.c.l.b16 %v2136
          %v2337 = vunpack.c.h.b16 %v2136
          %v2338 = vunpack.c.l.b16 %v2137
          %v2339 = vunpack.c.h.b16 %v2137
          %v2340 = vunpack.c.l.b16 %v2138
          %v2341 = vunpack.c.h.b16 %v2138
          %v2342 = vunpack.c.l.b16 %v2139
          %v2343 = vunpack.c.h.b16 %v2139
          %v2344 = vpack.c.b16 %v2218, %v2216
          %v2345 = vpack.c.b16 %v2219, %v2217
          %v2346 = vpack.c.b16 %v2222, %v2220
          %v2347 = vpack.c.b16 %v2223, %v2221
          %v2348 = vpack.c.b16 %v2226, %v2224
          %v2349 = vpack.c.b16 %v2227, %v2225
          %v2350 = vpack.c.b16 %v2230, %v2228
          %v2351 = vpack.c.b16 %v2231, %v2229
          %v2352 = vpack.c.b16 %v2234, %v2232
          %v2353 = vpack.c.b16 %v2235, %v2233
          %v2354 = vpack.c.b16 %v2238, %v2236
          %v2355 = vpack.c.b16 %v2239, %v2237
          %v2356 = vpack.c.b16 %v2242, %v2240
          %v2357 = vpack.c.b16 %v2243, %v2241
          %v2358 = vpack.c.b16 %v2246, %v2244
          %v2359 = vpack.c.b16 %v2247, %v2245
          %v2360 = vpack.c.b16 %v2250, %v2248
          %v2361 = vpack.c.b16 %v2251, %v2249
          %v2362 = vpack.c.b16 %v2254, %v2252
          %v2363 = vpack.c.b16 %v2255, %v2253
          %v2364 = vpack.c.b16 %v2258, %v2256
          %v2365 = vpack.c.b16 %v2259, %v2257
          %v2366 = vpack.c.b16 %v2262, %v2260
          %v2367 = vpack.c.b16 %v2263, %v2261
          %v2368 = vpack.c.b16 %v2266, %v2264
          %v2369 = vpack.c.b16 %v2267, %v2265
          %v2370 = vpack.c.b16 %v2270, %v2268
          %v2371 = vpack.c.b16 %v2271, %v2269
          %v2372 = vpack.c.b16 %v2274, %v2272
          %v2373 = vpack.c.b16 %v2275, %v2273
          %v2374 = vpack.c.b16 %v2278, %v2276
          %v2375 = vpack.c.b16 %v2279, %v2277
          %v2376 = vpack.c.b16 %v2282, %v2280
          %v2377 = vpack.c.b16 %v2283, %v2281
          %v2378 = vpack.c.b16 %v2286, %v2284
          %v2379 = vpack.c.b16 %v2287, %v2285
          %v2380 = vpack.c.b16 %v2290, %v2288
          %v2381 = vpack.c.b16 %v2291, %v2289
          %v2382 = vpack.c.b16 %v2294, %v2292
          %v2383 = vpack.c.b16 %v2295, %v2293
          %v2384 = vpack.c.b16 %v2298, %v2296
          %v2385 = vpack.c.b16 %v2299, %v2297
          %v2386 = vpack.c.b16 %v2302, %v2300
          %v2387 = vpack.c.b16 %v2303, %v2301
          %v2388 = vpack.c.b16 %v2306, %v2304
          %v2389 = vpack.c.b16 %v2307, %v2305
          %v2390 = vpack.c.b16 %v2310, %v2308
          %v2391 = vpack.c.b16 %v2311, %v2309
          %v2392 = vpack.c.b16 %v2314, %v2312
          %v2393 = vpack.c.b16 %v2315, %v2313
          %v2394 = vpack.c.b16 %v2318, %v2316
          %v2395 = vpack.c.b16 %v2319, %v2317
          %v2396 = vpack.c.b16 %v2322, %v2320
          %v2397 = vpack.c.b16 %v2323, %v2321
          %v2398 = vpack.c.b16 %v2326, %v2324
          %v2399 = vpack.c.b16 %v2327, %v2325
          %v2400 = vpack.c.b16 %v2330, %v2328
          %v2401 = vpack.c.b16 %v2331, %v2329
          %v2402 = vpack.c.b16 %v2334, %v2332
          %v2403 = vpack.c.b16 %v2335, %v2333
          %v2404 = vpack.c.b16 %v2338, %v2336
          %v2405 = vpack.c.b16 %v2339, %v2337
          %v2406 = vpack.c.b16 %v2342, %v2340
          %v2407 = vpack.c.b16 %v2343, %v2341
          %2472 = vmatprep.subr.bf16.mxu0 %v2345
          %2473 = vmatpush1.bf16.msra.mxu0 %v2344
          %2474 = vmatprep.subr.bf16.mxu0 %v2347
          %2475 = vmatpush1.bf16.msra.mxu0 %v2346
          %2476 = vmatprep.subr.bf16.mxu0 %v2349
          %2477 = vmatpush1.bf16.msra.mxu0 %v2348
          %2478 = vmatprep.subr.bf16.mxu0 %v2351
          %2479 = vmatpush1.bf16.msra.mxu0 %v2350
          %2480 = vmatprep.subr.bf16.mxu0 %v2353
          %2481 = vmatpush1.bf16.msra.mxu0 %v2352
          %2482 = vmatprep.subr.bf16.mxu0 %v2355
          %2483 = vmatpush1.bf16.msra.mxu0 %v2354
          %2484 = vmatprep.subr.bf16.mxu0 %v2357
          %2485 = vmatpush1.bf16.msra.mxu0 %v2356
          %2486 = vmatprep.subr.bf16.mxu0 %v2359
          %2487 = vmatpush1.bf16.msra.mxu0 %v2358
          %2488 = vmatprep.subr.bf16.mxu0 %v2361
          %2489 = vmatpush1.bf16.msra.mxu0 %v2360
          %2490 = vmatprep.subr.bf16.mxu0 %v2363
          %2491 = vmatpush1.bf16.msra.mxu0 %v2362
          %2492 = vmatprep.subr.bf16.mxu0 %v2365
          %2493 = vmatpush1.bf16.msra.mxu0 %v2364
          %2494 = vmatprep.subr.bf16.mxu0 %v2367
          %2495 = vmatpush1.bf16.msra.mxu0 %v2366
          %2496 = vmatprep.subr.bf16.mxu0 %v2369
          %2497 = vmatpush1.bf16.msra.mxu0 %v2368
          %2498 = vmatprep.subr.bf16.mxu0 %v2371
          %2499 = vmatpush1.bf16.msra.mxu0 %v2370
          %2500 = vmatprep.subr.bf16.mxu0 %v2373
          %2501 = vmatpush1.bf16.msra.mxu0 %v2372
          %2502 = vmatprep.subr.bf16.mxu0 %v2375
          %2503 = vmatpush1.bf16.msra.mxu0 %v2374
          %2504 = vmatprep.mubr.bf16.mxu0 %v2013
          %2505 = vmatmul.mubr.bf16.gmra.mrb[0].mxu0 %v2012
          %v2506 = vpop.f32.mrb[0].mxu0
          %v2507 = vadd.f32 %v2145, %v2506
          %v2508 = vpop.f32.mrb[0].mxu0
          %v2509 = vadd.f32 %v2149, %v2508
          %v2510 = vpop.f32.mrb[0].mxu0
          %v2511 = vadd.f32 %v2145, %v2510
          %v2512 = vpop.f32.mrb[0].mxu0
          %v2513 = vadd.f32 %v2149, %v2512
          %2514 = vmatprep.mubr.bf16.mxu0 %v2017
          %2515 = vmatmul.mubr.bf16.gmra.mrb[0].mxu0 %v2016
          %v2516 = vpop.f32.mrb[0].mxu0
          %v2517 = vadd.f32 %v2145, %v2516
          %v2518 = vpop.f32.mrb[0].mxu0
          %v2519 = vadd.f32 %v2149, %v2518
          %v2520 = vpop.f32.mrb[0].mxu0
          %v2521 = vadd.f32 %v2145, %v2520
          %v2522 = vpop.f32.mrb[0].mxu0
          %v2523 = vadd.f32 %v2149, %v2522
          %2524 = vmatprep.mubr.bf16.mxu0 %v2021
          %2525 = vmatmul.mubr.bf16.gmra.mrb[0].mxu0 %v2020
          %v2526 = vpop.f32.mrb[0].mxu0
          %v2527 = vadd.f32 %v2145, %v2526
          %v2528 = vpop.f32.mrb[0].mxu0
          %v2529 = vadd.f32 %v2149, %v2528
          %v2530 = vpop.f32.mrb[0].mxu0
          %v2531 = vadd.f32 %v2145, %v2530
          %v2532 = vpop.f32.mrb[0].mxu0
          %v2533 = vadd.f32 %v2149, %v2532
          %2534 = vmatprep.mubr.bf16.mxu0 %v2025
          %2535 = vmatmul.mubr.bf16.gmra.mrb[0].mxu0 %v2024
          %v2536 = vpop.f32.mrb[0].mxu0
          %v2537 = vadd.f32 %v2145, %v2536
          %v2538 = vpop.f32.mrb[0].mxu0
          %v2539 = vadd.f32 %v2149, %v2538
          %v2540 = vpop.f32.mrb[0].mxu0
          %v2541 = vadd.f32 %v2145, %v2540
          %v2542 = vpop.f32.mrb[0].mxu0
          %v2543 = vadd.f32 %v2149, %v2542
          %2544 = vmatprep.mubr.bf16.mxu0 %v2029
          %2545 = vmatmul.mubr.bf16.gmra.mrb[0].mxu0 %v2028
          %v2546 = vpop.f32.mrb[0].mxu0
          %v2547 = vadd.f32 %v2145, %v2546
          %v2548 = vpop.f32.mrb[0].mxu0
          %v2549 = vadd.f32 %v2149, %v2548
          %v2550 = vpop.f32.mrb[0].mxu0
          %v2551 = vadd.f32 %v2145, %v2550
          %v2552 = vpop.f32.mrb[0].mxu0
          %v2553 = vadd.f32 %v2149, %v2552
          %2554 = vmatprep.mubr.bf16.mxu0 %v2033
          %2555 = vmatmul.mubr.bf16.gmra.mrb[0].mxu0 %v2032
          %v2556 = vpop.f32.mrb[0].mxu0
          %v2557 = vadd.f32 %v2145, %v2556
          %v2558 = vpop.f32.mrb[0].mxu0
          %v2559 = vadd.f32 %v2149, %v2558
          %v2560 = vpop.f32.mrb[0].mxu0
          %v2561 = vadd.f32 %v2145, %v2560
          %v2562 = vpop.f32.mrb[0].mxu0
          %v2563 = vadd.f32 %v2149, %v2562
          %2564 = vmatprep.mubr.bf16.mxu0 %v2037
          %2565 = vmatmul.mubr.bf16.gmra.mrb[0].mxu0 %v2036
          %v2566 = vpop.f32.mrb[0].mxu0
          %v2567 = vadd.f32 %v2145, %v2566
          %v2568 = vpop.f32.mrb[0].mxu0
          %v2569 = vadd.f32 %v2149, %v2568
          %v2570 = vpop.f32.mrb[0].mxu0
          %v2571 = vadd.f32 %v2145, %v2570
          %v2572 = vpop.f32.mrb[0].mxu0
          %v2573 = vadd.f32 %v2149, %v2572
          %2574 = vmatprep.mubr.bf16.mxu0 %v2041
          %2575 = vmatmul.mubr.bf16.gmra.mrb[0].mxu0 %v2040
          %v2576 = vpop.f32.mrb[0].mxu0
          %v2577 = vadd.f32 %v2145, %v2576
          %v2578 = vpop.f32.mrb[0].mxu0
          %v2579 = vadd.f32 %v2149, %v2578
          %v2580 = vpop.f32.mrb[0].mxu0
          %v2581 = vadd.f32 %v2145, %v2580
          %v2582 = vpop.f32.mrb[0].mxu0
          %v2583 = vadd.f32 %v2149, %v2582
          %2584 = vmatprep.mubr.bf16.mxu0 %v2045
          %2585 = vmatmul.mubr.bf16.gmra.mrb[0].mxu0 %v2044
          %v2586 = vpop.f32.mrb[0].mxu0
          %v2587 = vadd.f32 %v2145, %v2586
          %v2588 = vpop.f32.mrb[0].mxu0
          %v2589 = vadd.f32 %v2149, %v2588
          %v2590 = vpop.f32.mrb[0].mxu0
          %v2591 = vadd.f32 %v2145, %v2590
          %v2592 = vpop.f32.mrb[0].mxu0
          %v2593 = vadd.f32 %v2149, %v2592
          %2594 = vmatprep.mubr.bf16.mxu0 %v2049
          %2595 = vmatmul.mubr.bf16.gmra.mrb[0].mxu0 %v2048
          %v2596 = vpop.f32.mrb[0].mxu0
          %v2597 = vadd.f32 %v2145, %v2596
          %v2598 = vpop.f32.mrb[0].mxu0
          %v2599 = vadd.f32 %v2149, %v2598
          %v2600 = vpop.f32.mrb[0].mxu0
          %v2601 = vadd.f32 %v2145, %v2600
          %v2602 = vpop.f32.mrb[0].mxu0
          %v2603 = vadd.f32 %v2149, %v2602
          %2604 = vmatprep.mubr.bf16.mxu0 %v2053
          %2605 = vmatmul.mubr.bf16.gmra.mrb[0].mxu0 %v2052
          %v2606 = vpop.f32.mrb[0].mxu0
          %v2607 = vadd.f32 %v2145, %v2606
          %v2608 = vpop.f32.mrb[0].mxu0
          %v2609 = vadd.f32 %v2149, %v2608
          %v2610 = vpop.f32.mrb[0].mxu0
          %v2611 = vadd.f32 %v2145, %v2610
          %v2612 = vpop.f32.mrb[0].mxu0
          %v2613 = vadd.f32 %v2149, %v2612
          %2614 = vmatprep.mubr.bf16.mxu0 %v2057
          %2615 = vmatmul.mubr.bf16.gmra.mrb[0].mxu0 %v2056
          %v2616 = vpop.f32.mrb[0].mxu0
          %v2617 = vadd.f32 %v2145, %v2616
          %v2618 = vpop.f32.mrb[0].mxu0
          %v2619 = vadd.f32 %v2149, %v2618
          %v2620 = vpop.f32.mrb[0].mxu0
          %v2621 = vadd.f32 %v2145, %v2620
          %v2622 = vpop.f32.mrb[0].mxu0
          %v2623 = vadd.f32 %v2149, %v2622
          %2624 = vmatprep.mubr.bf16.mxu0 %v2061
          %2625 = vmatmul.mubr.bf16.gmra.mrb[0].mxu0 %v2060
          %v2626 = vpop.f32.mrb[0].mxu0
          %v2627 = vadd.f32 %v2145, %v2626
          %v2628 = vpop.f32.mrb[0].mxu0
          %v2629 = vadd.f32 %v2149, %v2628
          %v2630 = vpop.f32.mrb[0].mxu0
          %v2631 = vadd.f32 %v2145, %v2630
          %v2632 = vpop.f32.mrb[0].mxu0
          %v2633 = vadd.f32 %v2149, %v2632
          %2634 = vmatprep.mubr.bf16.mxu0 %v2065
          %2635 = vmatmul.mubr.bf16.gmra.mrb[0].mxu0 %v2064
          %v2636 = vpop.f32.mrb[0].mxu0
          %v2637 = vadd.f32 %v2145, %v2636
          %v2638 = vpop.f32.mrb[0].mxu0
          %v2639 = vadd.f32 %v2149, %v2638
          %v2640 = vpop.f32.mrb[0].mxu0
          %v2641 = vadd.f32 %v2145, %v2640
          %v2642 = vpop.f32.mrb[0].mxu0
          %v2643 = vadd.f32 %v2149, %v2642
          %2644 = vmatprep.mubr.bf16.mxu0 %v2069
          %2645 = vmatmul.mubr.bf16.gmra.mrb[0].mxu0 %v2068
          %v2646 = vpop.f32.mrb[0].mxu0
          %v2647 = vadd.f32 %v2145, %v2646
          %v2648 = vpop.f32.mrb[0].mxu0
          %v2649 = vadd.f32 %v2149, %v2648
          %v2650 = vpop.f32.mrb[0].mxu0
          %v2651 = vadd.f32 %v2145, %v2650
          %v2652 = vpop.f32.mrb[0].mxu0
          %v2653 = vadd.f32 %v2149, %v2652
          %2654 = vmatprep.mubr.bf16.mxu0 %v2073
          %2655 = vmatmul.mubr.bf16.gmra.mrb[0].mxu0 %v2072
          %v2656 = vpop.f32.mrb[0].mxu0
          %v2657 = vadd.f32 %v2145, %v2656
          %v2658 = vpop.f32.mrb[0].mxu0
          %v2659 = vadd.f32 %v2149, %v2658
          %v2660 = vpop.f32.mrb[0].mxu0
          %v2661 = vadd.f32 %v2145, %v2660
          %v2662 = vpop.f32.mrb[0].mxu0
          %v2663 = vadd.f32 %v2149, %v2662
          %2664 = vdwg.mxu0
          %2665 = vmatprep.subr.bf16.mxu0 %v2377
          %2666 = vmatpush1.bf16.msra.mxu0 %v2376
          %2667 = vmatprep.subr.bf16.mxu0 %v2379
          %2668 = vmatpush1.bf16.msra.mxu0 %v2378
          %2669 = vmatprep.subr.bf16.mxu0 %v2381
          %2670 = vmatpush1.bf16.msra.mxu0 %v2380
          %2671 = vmatprep.subr.bf16.mxu0 %v2383
          %2672 = vmatpush1.bf16.msra.mxu0 %v2382
          %2673 = vmatprep.subr.bf16.mxu0 %v2385
          %2674 = vmatpush1.bf16.msra.mxu0 %v2384
          %2675 = vmatprep.subr.bf16.mxu0 %v2387
          %2676 = vmatpush1.bf16.msra.mxu0 %v2386
          %2677 = vmatprep.subr.bf16.mxu0 %v2389
          %2678 = vmatpush1.bf16.msra.mxu0 %v2388
          %2679 = vmatprep.subr.bf16.mxu0 %v2391
          %2680 = vmatpush1.bf16.msra.mxu0 %v2390
          %2681 = vmatprep.subr.bf16.mxu0 %v2393
          %2682 = vmatpush1.bf16.msra.mxu0 %v2392
          %2683 = vmatprep.subr.bf16.mxu0 %v2395
          %2684 = vmatpush1.bf16.msra.mxu0 %v2394
          %2685 = vmatprep.subr.bf16.mxu0 %v2397
          %2686 = vmatpush1.bf16.msra.mxu0 %v2396
          %2687 = vmatprep.subr.bf16.mxu0 %v2399
          %2688 = vmatpush1.bf16.msra.mxu0 %v2398
          %2689 = vmatprep.subr.bf16.mxu0 %v2401
          %2690 = vmatpush1.bf16.msra.mxu0 %v2400
          %2691 = vmatprep.subr.bf16.mxu0 %v2403
          %2692 = vmatpush1.bf16.msra.mxu0 %v2402
          %2693 = vmatprep.subr.bf16.mxu0 %v2405
          %2694 = vmatpush1.bf16.msra.mxu0 %v2404
          %2695 = vmatprep.subr.bf16.mxu0 %v2407
          %2696 = vmatpush1.bf16.msra.mxu0 %v2406
          %2697 = vmatprep.mubr.bf16.mxu0 %v2015
          %2698 = vmatmul.mubr.bf16.gmra.mrb[0].mxu0 %v2014
          %v2699 = vpop.f32.mrb[0].mxu0
          %v2700 = vadd.f32 %v2507, %v2699
          %v2701 = vpop.f32.mrb[0].mxu0
          %v2702 = vadd.f32 %v2509, %v2701
          %v2703 = vpop.f32.mrb[0].mxu0
          %v2704 = vadd.f32 %v2511, %v2703
          %v2705 = vpop.f32.mrb[0].mxu0
          %v2706 = vadd.f32 %v2513, %v2705
          %2707 = vmatprep.mubr.bf16.mxu0 %v2019
          %2708 = vmatmul.mubr.bf16.gmra.mrb[0].mxu0 %v2018
          %v2709 = vpop.f32.mrb[0].mxu0
          %v2710 = vadd.f32 %v2517, %v2709
          %v2711 = vpop.f32.mrb[0].mxu0
          %v2712 = vadd.f32 %v2519, %v2711
          %v2713 = vpop.f32.mrb[0].mxu0
          %v2714 = vadd.f32 %v2521, %v2713
          %v2715 = vpop.f32.mrb[0].mxu0
          %v2716 = vadd.f32 %v2523, %v2715
          %2717 = vmatprep.mubr.bf16.mxu0 %v2023
          %2718 = vmatmul.mubr.bf16.gmra.mrb[0].mxu0 %v2022
          %v2719 = vpop.f32.mrb[0].mxu0
          %v2720 = vadd.f32 %v2527, %v2719
          %v2721 = vpop.f32.mrb[0].mxu0
          %v2722 = vadd.f32 %v2529, %v2721
          %v2723 = vpop.f32.mrb[0].mxu0
          %v2724 = vadd.f32 %v2531, %v2723
          %v2725 = vpop.f32.mrb[0].mxu0
          %v2726 = vadd.f32 %v2533, %v2725
          %2727 = vmatprep.mubr.bf16.mxu0 %v2027
          %2728 = vmatmul.mubr.bf16.gmra.mrb[0].mxu0 %v2026
          %v2729 = vpop.f32.mrb[0].mxu0
          %v2730 = vadd.f32 %v2537, %v2729
          %v2731 = vpop.f32.mrb[0].mxu0
          %v2732 = vadd.f32 %v2539, %v2731
          %v2733 = vpop.f32.mrb[0].mxu0
          %v2734 = vadd.f32 %v2541, %v2733
          %v2735 = vpop.f32.mrb[0].mxu0
          %v2736 = vadd.f32 %v2543, %v2735
          %2737 = vmatprep.mubr.bf16.mxu0 %v2031
          %2738 = vmatmul.mubr.bf16.gmra.mrb[0].mxu0 %v2030
          %v2739 = vpop.f32.mrb[0].mxu0
          %v2740 = vadd.f32 %v2547, %v2739
          %v2741 = vpop.f32.mrb[0].mxu0
          %v2742 = vadd.f32 %v2549, %v2741
          %v2743 = vpop.f32.mrb[0].mxu0
          %v2744 = vadd.f32 %v2551, %v2743
          %v2745 = vpop.f32.mrb[0].mxu0
          %v2746 = vadd.f32 %v2553, %v2745
          %2747 = vmatprep.mubr.bf16.mxu0 %v2035
          %2748 = vmatmul.mubr.bf16.gmra.mrb[0].mxu0 %v2034
          %v2749 = vpop.f32.mrb[0].mxu0
          %v2750 = vadd.f32 %v2557, %v2749
          %v2751 = vpop.f32.mrb[0].mxu0
          %v2752 = vadd.f32 %v2559, %v2751
          %v2753 = vpop.f32.mrb[0].mxu0
          %v2754 = vadd.f32 %v2561, %v2753
          %v2755 = vpop.f32.mrb[0].mxu0
          %v2756 = vadd.f32 %v2563, %v2755
          %2757 = vmatprep.mubr.bf16.mxu0 %v2039
          %2758 = vmatmul.mubr.bf16.gmra.mrb[0].mxu0 %v2038
          %v2759 = vpop.f32.mrb[0].mxu0
          %v2760 = vadd.f32 %v2567, %v2759
          %v2761 = vpop.f32.mrb[0].mxu0
          %v2762 = vadd.f32 %v2569, %v2761
          %v2763 = vpop.f32.mrb[0].mxu0
          %v2764 = vadd.f32 %v2571, %v2763
          %v2765 = vpop.f32.mrb[0].mxu0
          %v2766 = vadd.f32 %v2573, %v2765
          %2767 = vmatprep.mubr.bf16.mxu0 %v2043
          %2768 = vmatmul.mubr.bf16.gmra.mrb[0].mxu0 %v2042
          %v2769 = vpop.f32.mrb[0].mxu0
          %v2770 = vadd.f32 %v2577, %v2769
          %v2771 = vpop.f32.mrb[0].mxu0
          %v2772 = vadd.f32 %v2579, %v2771
          %v2773 = vpop.f32.mrb[0].mxu0
          %v2774 = vadd.f32 %v2581, %v2773
          %v2775 = vpop.f32.mrb[0].mxu0
          %v2776 = vadd.f32 %v2583, %v2775
          %2777 = vmatprep.mubr.bf16.mxu0 %v2047
          %2778 = vmatmul.mubr.bf16.gmra.mrb[0].mxu0 %v2046
          %v2779 = vpop.f32.mrb[0].mxu0
          %v2780 = vadd.f32 %v2587, %v2779
          %v2781 = vpop.f32.mrb[0].mxu0
          %v2782 = vadd.f32 %v2589, %v2781
          %v2783 = vpop.f32.mrb[0].mxu0
          %v2784 = vadd.f32 %v2591, %v2783
          %v2785 = vpop.f32.mrb[0].mxu0
          %v2786 = vadd.f32 %v2593, %v2785
          %2787 = vmatprep.mubr.bf16.mxu0 %v2051
          %2788 = vmatmul.mubr.bf16.gmra.mrb[0].mxu0 %v2050
          %v2789 = vpop.f32.mrb[0].mxu0
          %v2790 = vadd.f32 %v2597, %v2789
          %v2791 = vpop.f32.mrb[0].mxu0
          %v2792 = vadd.f32 %v2599, %v2791
          %v2793 = vpop.f32.mrb[0].mxu0
          %v2794 = vadd.f32 %v2601, %v2793
          %v2795 = vpop.f32.mrb[0].mxu0
          %v2796 = vadd.f32 %v2603, %v2795
          %2797 = vmatprep.mubr.bf16.mxu0 %v2055
          %2798 = vmatmul.mubr.bf16.gmra.mrb[0].mxu0 %v2054
          %v2799 = vpop.f32.mrb[0].mxu0
          %v2800 = vadd.f32 %v2607, %v2799
          %v2801 = vpop.f32.mrb[0].mxu0
          %v2802 = vadd.f32 %v2609, %v2801
          %v2803 = vpop.f32.mrb[0].mxu0
          %v2804 = vadd.f32 %v2611, %v2803
          %v2805 = vpop.f32.mrb[0].mxu0
          %v2806 = vadd.f32 %v2613, %v2805
          %2807 = vmatprep.mubr.bf16.mxu0 %v2059
          %2808 = vmatmul.mubr.bf16.gmra.mrb[0].mxu0 %v2058
          %v2809 = vpop.f32.mrb[0].mxu0
          %v2810 = vadd.f32 %v2617, %v2809
          %v2811 = vpop.f32.mrb[0].mxu0
          %v2812 = vadd.f32 %v2619, %v2811
          %v2813 = vpop.f32.mrb[0].mxu0
          %v2814 = vadd.f32 %v2621, %v2813
          %v2815 = vpop.f32.mrb[0].mxu0
          %v2816 = vadd.f32 %v2623, %v2815
          %2817 = vmatprep.mubr.bf16.mxu0 %v2063
          %2818 = vmatmul.mubr.bf16.gmra.mrb[0].mxu0 %v2062
          %v2819 = vpop.f32.mrb[0].mxu0
          %v2820 = vadd.f32 %v2627, %v2819
          %v2821 = vpop.f32.mrb[0].mxu0
          %v2822 = vadd.f32 %v2629, %v2821
          %v2823 = vpop.f32.mrb[0].mxu0
          %v2824 = vadd.f32 %v2631, %v2823
          %v2825 = vpop.f32.mrb[0].mxu0
          %v2826 = vadd.f32 %v2633, %v2825
          %2827 = vmatprep.mubr.bf16.mxu0 %v2067
          %2828 = vmatmul.mubr.bf16.gmra.mrb[0].mxu0 %v2066
          %v2829 = vpop.f32.mrb[0].mxu0
          %v2830 = vadd.f32 %v2637, %v2829
          %v2831 = vpop.f32.mrb[0].mxu0
          %v2832 = vadd.f32 %v2639, %v2831
          %v2833 = vpop.f32.mrb[0].mxu0
          %v2834 = vadd.f32 %v2641, %v2833
          %v2835 = vpop.f32.mrb[0].mxu0
          %v2836 = vadd.f32 %v2643, %v2835
          %2837 = vmatprep.mubr.bf16.mxu0 %v2071
          %2838 = vmatmul.mubr.bf16.gmra.mrb[0].mxu0 %v2070
          %v2839 = vpop.f32.mrb[0].mxu0
          %v2840 = vadd.f32 %v2647, %v2839
          %v2841 = vpop.f32.mrb[0].mxu0
          %v2842 = vadd.f32 %v2649, %v2841
          %v2843 = vpop.f32.mrb[0].mxu0
          %v2844 = vadd.f32 %v2651, %v2843
          %v2845 = vpop.f32.mrb[0].mxu0
          %v2846 = vadd.f32 %v2653, %v2845
          %2847 = vmatprep.mubr.bf16.mxu0 %v2075
          %2848 = vmatmul.mubr.bf16.gmra.mrb[0].mxu0 %v2074
          %v2849 = vpop.f32.mrb[0].mxu0
          %v2850 = vadd.f32 %v2657, %v2849
          %v2851 = vpop.f32.mrb[0].mxu0
          %v2852 = vadd.f32 %v2659, %v2851
          %v2853 = vpop.f32.mrb[0].mxu0
          %v2854 = vadd.f32 %v2661, %v2853
          %v2855 = vpop.f32.mrb[0].mxu0
          %v2856 = vadd.f32 %v2663, %v2855
          %2857 = vdwg.mxu0
          %v2858 = vmax.f32 %v2700, 0.0
          %v2859 = vmax.f32 %v2702, 0.0
          %v2860 = vmax.f32 %v2704, 0.0
          %v2861 = vmax.f32 %v2706, 0.0
          %v2862 = vmax.f32 %v2710, 0.0
          %v2863 = vmax.f32 %v2712, 0.0
          %v2864 = vmax.f32 %v2714, 0.0
          %v2865 = vmax.f32 %v2716, 0.0
          %v2866 = vmax.f32 %v2720, 0.0
          %v2867 = vmax.f32 %v2722, 0.0
          %v2868 = vmax.f32 %v2724, 0.0
          %v2869 = vmax.f32 %v2726, 0.0
          %v2870 = vmax.f32 %v2730, 0.0
          %v2871 = vmax.f32 %v2732, 0.0
          %v2872 = vmax.f32 %v2734, 0.0
          %v2873 = vmax.f32 %v2736, 0.0
          %v2874 = vmax.f32 %v2740, 0.0
          %v2875 = vmax.f32 %v2742, 0.0
          %v2876 = vmax.f32 %v2744, 0.0
          %v2877 = vmax.f32 %v2746, 0.0
          %v2878 = vmax.f32 %v2750, 0.0
          %v2879 = vmax.f32 %v2752, 0.0
          %v2880 = vmax.f32 %v2754, 0.0
          %v2881 = vmax.f32 %v2756, 0.0
          %v2882 = vmax.f32 %v2760, 0.0
          %v2883 = vmax.f32 %v2762, 0.0
          %v2884 = vmax.f32 %v2764, 0.0
          %v2885 = vmax.f32 %v2766, 0.0
          %v2886 = vmax.f32 %v2770, 0.0
          %v2887 = vmax.f32 %v2772, 0.0
          %v2888 = vmax.f32 %v2774, 0.0
          %v2889 = vmax.f32 %v2776, 0.0
          %v2890 = vmax.f32 %v2780, 0.0
          %v2891 = vmax.f32 %v2782, 0.0
          %v2892 = vmax.f32 %v2784, 0.0
          %v2893 = vmax.f32 %v2786, 0.0
          %v2894 = vmax.f32 %v2790, 0.0
          %v2895 = vmax.f32 %v2792, 0.0
          %v2896 = vmax.f32 %v2794, 0.0
          %v2897 = vmax.f32 %v2796, 0.0
          %v2898 = vmax.f32 %v2800, 0.0
          %v2899 = vmax.f32 %v2802, 0.0
          %v2900 = vmax.f32 %v2804, 0.0
          %v2901 = vmax.f32 %v2806, 0.0
          %v2902 = vmax.f32 %v2810, 0.0
          %v2903 = vmax.f32 %v2812, 0.0
          %v2904 = vmax.f32 %v2814, 0.0
          %v2905 = vmax.f32 %v2816, 0.0
          %v2906 = vmax.f32 %v2820, 0.0
          %v2907 = vmax.f32 %v2822, 0.0
          %v2908 = vmax.f32 %v2824, 0.0
          %v2909 = vmax.f32 %v2826, 0.0
          %v2910 = vmax.f32 %v2830, 0.0
          %v2911 = vmax.f32 %v2832, 0.0
          %v2912 = vmax.f32 %v2834, 0.0
          %v2913 = vmax.f32 %v2836, 0.0
          %v2914 = vmax.f32 %v2840, 0.0
          %v2915 = vmax.f32 %v2842, 0.0
          %v2916 = vmax.f32 %v2844, 0.0
          %v2917 = vmax.f32 %v2846, 0.0
          %v2918 = vmax.f32 %v2850, 0.0
          %v2919 = vmax.f32 %v2852, 0.0
          %v2920 = vmax.f32 %v2854, 0.0
          %v2921 = vmax.f32 %v2856, 0.0
          %v2922 = vpack.c.bf16 %v2860, %v2858
          %v2923 = vpack.c.bf16 %v2861, %v2859
          %v2924 = vpack.c.bf16 %v2864, %v2862
          %v2925 = vpack.c.bf16 %v2865, %v2863
          %v2926 = vpack.c.bf16 %v2868, %v2866
          %v2927 = vpack.c.bf16 %v2869, %v2867
          %v2928 = vpack.c.bf16 %v2872, %v2870
          %v2929 = vpack.c.bf16 %v2873, %v2871
          %v2930 = vpack.c.bf16 %v2876, %v2874
          %v2931 = vpack.c.bf16 %v2877, %v2875
          %v2932 = vpack.c.bf16 %v2880, %v2878
          %v2933 = vpack.c.bf16 %v2881, %v2879
          %v2934 = vpack.c.bf16 %v2884, %v2882
          %v2935 = vpack.c.bf16 %v2885, %v2883
          %v2936 = vpack.c.bf16 %v2888, %v2886
          %v2937 = vpack.c.bf16 %v2889, %v2887
          %v2938 = vpack.c.bf16 %v2892, %v2890
          %v2939 = vpack.c.bf16 %v2893, %v2891
          %v2940 = vpack.c.bf16 %v2896, %v2894
          %v2941 = vpack.c.bf16 %v2897, %v2895
          %v2942 = vpack.c.bf16 %v2900, %v2898
          %v2943 = vpack.c.bf16 %v2901, %v2899
          %v2944 = vpack.c.bf16 %v2904, %v2902
          %v2945 = vpack.c.bf16 %v2905, %v2903
          %v2946 = vpack.c.bf16 %v2908, %v2906
          %v2947 = vpack.c.bf16 %v2909, %v2907
          %v2948 = vpack.c.bf16 %v2912, %v2910
          %v2949 = vpack.c.bf16 %v2913, %v2911
          %v2950 = vpack.c.bf16 %v2916, %v2914
          %v2951 = vpack.c.bf16 %v2917, %v2915
          %v2952 = vpack.c.bf16 %v2920, %v2918
          %v2953 = vpack.c.bf16 %v2921, %v2919
          %v2954 = vld [vmem:[%s5] sm:$0xf]
          %v2955 = vld [vmem:[%s5 + $0x4] sm:$0xf]
          %v2956 = vld [vmem:[%s5 + $0x8] sm:$0xf]
          %v2957 = vld [vmem:[%s5 + $0xc] sm:$0xf]
          %v2958 = vld [vmem:[%s5 + $0x10] sm:$0xf]
          %v2959 = vld [vmem:[%s5 + $0x14] sm:$0xf]
          %v2960 = vld [vmem:[%s5 + $0x18] sm:$0xf]
          %v2961 = vld [vmem:[%s5 + $0x1c] sm:$0xf]
          %v2962 = vld [vmem:[%s5 + $0x20] sm:$0xf]
          %v2963 = vld [vmem:[%s5 + $0x24] sm:$0xf]
          %v2964 = vld [vmem:[%s5 + $0x28] sm:$0xf]
          %v2965 = vld [vmem:[%s5 + $0x2c] sm:$0xf]
          %v2966 = vld [vmem:[%s5 + $0x30] sm:$0xf]
          %v2967 = vld [vmem:[%s5 + $0x34] sm:$0xf]
          %v2968 = vld [vmem:[%s5 + $0x38] sm:$0xf]
          %v2969 = vld [vmem:[%s5 + $0x3c] sm:$0xf]
          %v2970 = vld [vmem:[%s5 + $0x40] sm:$0xf]
          %v2971 = vld [vmem:[%s5 + $0x44] sm:$0xf]
          %v2972 = vld [vmem:[%s5 + $0x48] sm:$0xf]
          %v2973 = vld [vmem:[%s5 + $0x4c] sm:$0xf]
          %v2974 = vld [vmem:[%s5 + $0x50] sm:$0xf]
          %v2975 = vld [vmem:[%s5 + $0x54] sm:$0xf]
          %v2976 = vld [vmem:[%s5 + $0x58] sm:$0xf]
          %v2977 = vld [vmem:[%s5 + $0x5c] sm:$0xf]
          %v2978 = vld [vmem:[%s5 + $0x60] sm:$0xf]
          %v2979 = vld [vmem:[%s5 + $0x64] sm:$0xf]
          %v2980 = vld [vmem:[%s5 + $0x68] sm:$0xf]
          %v2981 = vld [vmem:[%s5 + $0x6c] sm:$0xf]
          %v2982 = vld [vmem:[%s5 + $0x70] sm:$0xf]
          %v2983 = vld [vmem:[%s5 + $0x74] sm:$0xf]
          %v2984 = vld [vmem:[%s5 + $0x78] sm:$0xf]
          %v2985 = vld [vmem:[%s5 + $0x7c] sm:$0xf]
          %v2986 = vld [vmem:[%s6] sm:$0x1]
          %v2988 = vlaneseq
          %v2989 = vshrl.u32 %v2988, 7
          %v2990 = vsub.s32 0, %v2989
          %v2991 = vrot.slane %v2986, %v2990
          %v3025 = vunpack.c.l.b16 %v2954
          %v3026 = vunpack.c.l.b16 %v2955
          %v3027 = vunpack.c.l.b16 %v2956
          %v3028 = vunpack.c.l.b16 %v2957
          %v3029 = vunpack.c.l.b16 %v2958
          %v3030 = vunpack.c.l.b16 %v2959
          %v3031 = vunpack.c.l.b16 %v2960
          %v3032 = vunpack.c.l.b16 %v2961
          %v3033 = vunpack.c.l.b16 %v2962
          %v3034 = vunpack.c.l.b16 %v2963
          %v3035 = vunpack.c.l.b16 %v2964
          %v3036 = vunpack.c.l.b16 %v2965
          %v3037 = vunpack.c.l.b16 %v2966
          %v3038 = vunpack.c.l.b16 %v2967
          %v3039 = vunpack.c.l.b16 %v2968
          %v3040 = vunpack.c.l.b16 %v2969
          %v3041 = vunpack.c.l.b16 %v2970
          %v3042 = vunpack.c.l.b16 %v2971
          %v3043 = vunpack.c.l.b16 %v2972
          %v3044 = vunpack.c.l.b16 %v2973
          %v3045 = vunpack.c.l.b16 %v2974
          %v3046 = vunpack.c.l.b16 %v2975
          %v3047 = vunpack.c.l.b16 %v2976
          %v3048 = vunpack.c.l.b16 %v2977
          %v3049 = vunpack.c.l.b16 %v2978
          %v3050 = vunpack.c.l.b16 %v2979
          %v3051 = vunpack.c.l.b16 %v2980
          %v3052 = vunpack.c.l.b16 %v2981
          %v3053 = vunpack.c.l.b16 %v2982
          %v3054 = vunpack.c.l.b16 %v2983
          %v3055 = vunpack.c.l.b16 %v2984
          %v3056 = vunpack.c.l.b16 %v2985
          %v3057 = vpack.c.b16 %v3026, %v3025
          %v3058 = vpack.c.b16 %v3028, %v3027
          %v3059 = vpack.c.b16 %v3030, %v3029
          %v3060 = vpack.c.b16 %v3032, %v3031
          %v3061 = vpack.c.b16 %v3034, %v3033
          %v3062 = vpack.c.b16 %v3036, %v3035
          %v3063 = vpack.c.b16 %v3038, %v3037
          %v3064 = vpack.c.b16 %v3040, %v3039
          %v3065 = vpack.c.b16 %v3042, %v3041
          %v3066 = vpack.c.b16 %v3044, %v3043
          %v3067 = vpack.c.b16 %v3046, %v3045
          %v3068 = vpack.c.b16 %v3048, %v3047
          %v3069 = vpack.c.b16 %v3050, %v3049
          %v3070 = vpack.c.b16 %v3052, %v3051
          %v3071 = vpack.c.b16 %v3054, %v3053
          %v3072 = vpack.c.b16 %v3056, %v3055
          %3089 = vmatprep.subr.bf16.mxu0 0
          %3090 = vmatpush1.bf16.msra.mxu0 %v3057
          %3091 = vmatprep.subr.bf16.mxu0 0
          %3092 = vmatpush1.bf16.msra.mxu0 %v3058
          %3093 = vmatprep.subr.bf16.mxu0 0
          %3094 = vmatpush1.bf16.msra.mxu0 %v3059
          %3095 = vmatprep.subr.bf16.mxu0 0
          %3096 = vmatpush1.bf16.msra.mxu0 %v3060
          %3097 = vmatprep.subr.bf16.mxu0 0
          %3098 = vmatpush1.bf16.msra.mxu0 %v3061
          %3099 = vmatprep.subr.bf16.mxu0 0
          %3100 = vmatpush1.bf16.msra.mxu0 %v3062
          %3101 = vmatprep.subr.bf16.mxu0 0
          %3102 = vmatpush1.bf16.msra.mxu0 %v3063
          %3103 = vmatprep.subr.bf16.mxu0 0
          %3104 = vmatpush1.bf16.msra.mxu0 %v3064
          %3105 = vmatprep.subr.bf16.mxu0 0
          %3106 = vmatpush1.bf16.msra.mxu0 %v3065
          %3107 = vmatprep.subr.bf16.mxu0 0
          %3108 = vmatpush1.bf16.msra.mxu0 %v3066
          %3109 = vmatprep.subr.bf16.mxu0 0
          %3110 = vmatpush1.bf16.msra.mxu0 %v3067
          %3111 = vmatprep.subr.bf16.mxu0 0
          %3112 = vmatpush1.bf16.msra.mxu0 %v3068
          %3113 = vmatprep.subr.bf16.mxu0 0
          %3114 = vmatpush1.bf16.msra.mxu0 %v3069
          %3115 = vmatprep.subr.bf16.mxu0 0
          %3116 = vmatpush1.bf16.msra.mxu0 %v3070
          %3117 = vmatprep.subr.bf16.mxu0 0
          %3118 = vmatpush1.bf16.msra.mxu0 %v3071
          %3119 = vmatprep.subr.bf16.mxu0 0
          %3120 = vmatpush1.bf16.msra.mxu0 %v3072
          %3121 = vmatprep.mubr.bf16.mxu0 %v2923
          %3122 = vmatmul.mubr.bf16.gmra.mrb[0].mxu0 %v2922
          %v3123 = vpop.f32.mrb[0].mxu0
          %v3124 = vadd.f32 %v2991, %v3123
          %v3125 = vpop.f32.mrb[0].mxu0
          %v3126 = vpop.f32.mrb[0].mxu0
          %v3127 = vadd.f32 %v2991, %v3126
          %v3128 = vpop.f32.mrb[0].mxu0
          %3129 = vmatprep.mubr.bf16.mxu0 %v2925
          %3130 = vmatmul.mubr.bf16.gmra.mrb[0].mxu0 %v2924
          %v3131 = vpop.f32.mrb[0].mxu0
          %v3132 = vadd.f32 %v2991, %v3131
          %v3133 = vpop.f32.mrb[0].mxu0
          %v3134 = vpop.f32.mrb[0].mxu0
          %v3135 = vadd.f32 %v2991, %v3134
          %v3136 = vpop.f32.mrb[0].mxu0
          %3137 = vmatprep.mubr.bf16.mxu0 %v2927
          %3138 = vmatmul.mubr.bf16.gmra.mrb[0].mxu0 %v2926
          %v3139 = vpop.f32.mrb[0].mxu0
          %v3140 = vadd.f32 %v2991, %v3139
          %v3141 = vpop.f32.mrb[0].mxu0
          %v3142 = vpop.f32.mrb[0].mxu0
          %v3143 = vadd.f32 %v2991, %v3142
          %v3144 = vpop.f32.mrb[0].mxu0
          %3145 = vmatprep.mubr.bf16.mxu0 %v2929
          %3146 = vmatmul.mubr.bf16.gmra.mrb[0].mxu0 %v2928
          %v3147 = vpop.f32.mrb[0].mxu0
          %v3148 = vadd.f32 %v2991, %v3147
          %v3149 = vpop.f32.mrb[0].mxu0
          %v3150 = vpop.f32.mrb[0].mxu0
          %v3151 = vadd.f32 %v2991, %v3150
          %v3152 = vpop.f32.mrb[0].mxu0
          %3153 = vmatprep.mubr.bf16.mxu0 %v2931
          %3154 = vmatmul.mubr.bf16.gmra.mrb[0].mxu0 %v2930
          %v3155 = vpop.f32.mrb[0].mxu0
          %v3156 = vadd.f32 %v2991, %v3155
          %v3157 = vpop.f32.mrb[0].mxu0
          %v3158 = vpop.f32.mrb[0].mxu0
          %v3159 = vadd.f32 %v2991, %v3158
          %v3160 = vpop.f32.mrb[0].mxu0
          %3161 = vmatprep.mubr.bf16.mxu0 %v2933
          %3162 = vmatmul.mubr.bf16.gmra.mrb[0].mxu0 %v2932
          %v3163 = vpop.f32.mrb[0].mxu0
          %v3164 = vadd.f32 %v2991, %v3163
          %v3165 = vpop.f32.mrb[0].mxu0
          %v3166 = vpop.f32.mrb[0].mxu0
          %v3167 = vadd.f32 %v2991, %v3166
          %v3168 = vpop.f32.mrb[0].mxu0
          %3169 = vmatprep.mubr.bf16.mxu0 %v2935
          %3170 = vmatmul.mubr.bf16.gmra.mrb[0].mxu0 %v2934
          %v3171 = vpop.f32.mrb[0].mxu0
          %v3172 = vadd.f32 %v2991, %v3171
          %v3173 = vpop.f32.mrb[0].mxu0
          %v3174 = vpop.f32.mrb[0].mxu0
          %v3175 = vadd.f32 %v2991, %v3174
          %v3176 = vpop.f32.mrb[0].mxu0
          %3177 = vmatprep.mubr.bf16.mxu0 %v2937
          %3178 = vmatmul.mubr.bf16.gmra.mrb[0].mxu0 %v2936
          %v3179 = vpop.f32.mrb[0].mxu0
          %v3180 = vadd.f32 %v2991, %v3179
          %v3181 = vpop.f32.mrb[0].mxu0
          %v3182 = vpop.f32.mrb[0].mxu0
          %v3183 = vadd.f32 %v2991, %v3182
          %v3184 = vpop.f32.mrb[0].mxu0
          %3185 = vmatprep.mubr.bf16.mxu0 %v2939
          %3186 = vmatmul.mubr.bf16.gmra.mrb[0].mxu0 %v2938
          %v3187 = vpop.f32.mrb[0].mxu0
          %v3188 = vadd.f32 %v2991, %v3187
          %v3189 = vpop.f32.mrb[0].mxu0
          %v3190 = vpop.f32.mrb[0].mxu0
          %v3191 = vadd.f32 %v2991, %v3190
          %v3192 = vpop.f32.mrb[0].mxu0
          %3193 = vmatprep.mubr.bf16.mxu0 %v2941
          %3194 = vmatmul.mubr.bf16.gmra.mrb[0].mxu0 %v2940
          %v3195 = vpop.f32.mrb[0].mxu0
          %v3196 = vadd.f32 %v2991, %v3195
          %v3197 = vpop.f32.mrb[0].mxu0
          %v3198 = vpop.f32.mrb[0].mxu0
          %v3199 = vadd.f32 %v2991, %v3198
          %v3200 = vpop.f32.mrb[0].mxu0
          %3201 = vmatprep.mubr.bf16.mxu0 %v2943
          %3202 = vmatmul.mubr.bf16.gmra.mrb[0].mxu0 %v2942
          %v3203 = vpop.f32.mrb[0].mxu0
          %v3204 = vadd.f32 %v2991, %v3203
          %v3205 = vpop.f32.mrb[0].mxu0
          %v3206 = vpop.f32.mrb[0].mxu0
          %v3207 = vadd.f32 %v2991, %v3206
          %v3208 = vpop.f32.mrb[0].mxu0
          %3209 = vmatprep.mubr.bf16.mxu0 %v2945
          %3210 = vmatmul.mubr.bf16.gmra.mrb[0].mxu0 %v2944
          %v3211 = vpop.f32.mrb[0].mxu0
          %v3212 = vadd.f32 %v2991, %v3211
          %v3213 = vpop.f32.mrb[0].mxu0
          %v3214 = vpop.f32.mrb[0].mxu0
          %v3215 = vadd.f32 %v2991, %v3214
          %v3216 = vpop.f32.mrb[0].mxu0
          %3217 = vmatprep.mubr.bf16.mxu0 %v2947
          %3218 = vmatmul.mubr.bf16.gmra.mrb[0].mxu0 %v2946
          %v3219 = vpop.f32.mrb[0].mxu0
          %v3220 = vadd.f32 %v2991, %v3219
          %v3221 = vpop.f32.mrb[0].mxu0
          %v3222 = vpop.f32.mrb[0].mxu0
          %v3223 = vadd.f32 %v2991, %v3222
          %v3224 = vpop.f32.mrb[0].mxu0
          %3225 = vmatprep.mubr.bf16.mxu0 %v2949
          %3226 = vmatmul.mubr.bf16.gmra.mrb[0].mxu0 %v2948
          %v3227 = vpop.f32.mrb[0].mxu0
          %v3228 = vadd.f32 %v2991, %v3227
          %v3229 = vpop.f32.mrb[0].mxu0
          %v3230 = vpop.f32.mrb[0].mxu0
          %v3231 = vadd.f32 %v2991, %v3230
          %v3232 = vpop.f32.mrb[0].mxu0
          %3233 = vmatprep.mubr.bf16.mxu0 %v2951
          %3234 = vmatmul.mubr.bf16.gmra.mrb[0].mxu0 %v2950
          %v3235 = vpop.f32.mrb[0].mxu0
          %v3236 = vadd.f32 %v2991, %v3235
          %v3237 = vpop.f32.mrb[0].mxu0
          %v3238 = vpop.f32.mrb[0].mxu0
          %v3239 = vadd.f32 %v2991, %v3238
          %v3240 = vpop.f32.mrb[0].mxu0
          %3241 = vmatprep.mubr.bf16.mxu0 %v2953
          %3242 = vmatmul.mubr.bf16.gmra.mrb[0].mxu0 %v2952
          %v3243 = vpop.f32.mrb[0].mxu0
          %v3244 = vadd.f32 %v2991, %v3243
          %v3245 = vpop.f32.mrb[0].mxu0
          %v3246 = vpop.f32.mrb[0].mxu0
          %v3247 = vadd.f32 %v2991, %v3246
          %v3248 = vpop.f32.mrb[0].mxu0
          %3249 = vdwg.mxu0
          %v3250 = vmax.f32 %v3124, 0.0
          %v3251 = vmax.f32 %v3127, 0.0
          %v3252 = vmax.f32 %v3132, 0.0
          %v3253 = vmax.f32 %v3135, 0.0
          %v3254 = vmax.f32 %v3140, 0.0
          %v3255 = vmax.f32 %v3143, 0.0
          %v3256 = vmax.f32 %v3148, 0.0
          %v3257 = vmax.f32 %v3151, 0.0
          %v3258 = vmax.f32 %v3156, 0.0
          %v3259 = vmax.f32 %v3159, 0.0
          %v3260 = vmax.f32 %v3164, 0.0
          %v3261 = vmax.f32 %v3167, 0.0
          %v3262 = vmax.f32 %v3172, 0.0
          %v3263 = vmax.f32 %v3175, 0.0
          %v3264 = vmax.f32 %v3180, 0.0
          %v3265 = vmax.f32 %v3183, 0.0
          %v3266 = vmax.f32 %v3188, 0.0
          %v3267 = vmax.f32 %v3191, 0.0
          %v3268 = vmax.f32 %v3196, 0.0
          %v3269 = vmax.f32 %v3199, 0.0
          %v3270 = vmax.f32 %v3204, 0.0
          %v3271 = vmax.f32 %v3207, 0.0
          %v3272 = vmax.f32 %v3212, 0.0
          %v3273 = vmax.f32 %v3215, 0.0
          %v3274 = vmax.f32 %v3220, 0.0
          %v3275 = vmax.f32 %v3223, 0.0
          %v3276 = vmax.f32 %v3228, 0.0
          %v3277 = vmax.f32 %v3231, 0.0
          %v3278 = vmax.f32 %v3236, 0.0
          %v3279 = vmax.f32 %v3239, 0.0
          %v3280 = vmax.f32 %v3244, 0.0
          %v3281 = vmax.f32 %v3247, 0.0
          %v3282 = vpack.c.bf16 %v3251, %v3250
          %v3283 = vpack.c.bf16 %v3253, %v3252
          %v3284 = vpack.c.bf16 %v3255, %v3254
          %v3285 = vpack.c.bf16 %v3257, %v3256
          %v3286 = vpack.c.bf16 %v3259, %v3258
          %v3287 = vpack.c.bf16 %v3261, %v3260
          %v3288 = vpack.c.bf16 %v3263, %v3262
          %v3289 = vpack.c.bf16 %v3265, %v3264
          %v3290 = vpack.c.bf16 %v3267, %v3266
          %v3291 = vpack.c.bf16 %v3269, %v3268
          %v3292 = vpack.c.bf16 %v3271, %v3270
          %v3293 = vpack.c.bf16 %v3273, %v3272
          %v3294 = vpack.c.bf16 %v3275, %v3274
          %v3295 = vpack.c.bf16 %v3277, %v3276
          %v3296 = vpack.c.bf16 %v3279, %v3278
          %v3297 = vpack.c.bf16 %v3281, %v3280
          %v3298 = vld [vmem:[#allocation3] sm:$0xf]
          %v3299 = vld [vmem:[#allocation3 + $0x4] sm:$0xf]
          %v3300 = vld [vmem:[#allocation3 + $0x8] sm:$0xf]
          %v3301 = vld [vmem:[#allocation3 + $0xc] sm:$0xf]
          %v3302 = vld [vmem:[#allocation3 + $0x10] sm:$0xf]
          %v3303 = vld [vmem:[#allocation3 + $0x14] sm:$0xf]
          %v3304 = vld [vmem:[#allocation3 + $0x18] sm:$0xf]
          %v3305 = vld [vmem:[#allocation3 + $0x1c] sm:$0xf]
          %v3306 = vld [vmem:[#allocation3 + $0x20] sm:$0xf]
          %v3307 = vld [vmem:[#allocation3 + $0x24] sm:$0xf]
          %v3308 = vld [vmem:[#allocation3 + $0x28] sm:$0xf]
          %v3309 = vld [vmem:[#allocation3 + $0x2c] sm:$0xf]
          %v3310 = vld [vmem:[#allocation3 + $0x30] sm:$0xf]
          %v3311 = vld [vmem:[#allocation3 + $0x34] sm:$0xf]
          %v3312 = vld [vmem:[#allocation3 + $0x38] sm:$0xf]
          %v3313 = vld [vmem:[#allocation3 + $0x3c] sm:$0xf]
          %v3314 = vld [vmem:[%s8] sm:$0x1]
          %v3316 = vlaneseq
          %v3317 = vshrl.u32 %v3316, 7
          %v3318 = vsub.s32 0, %v3317
          %v3319 = vrot.slane %v3314, %v3318
          %v3337 = vunpack.c.l.b16 %v3298
          %v3338 = vunpack.c.l.b16 %v3299
          %v3339 = vunpack.c.l.b16 %v3300
          %v3340 = vunpack.c.l.b16 %v3301
          %v3341 = vunpack.c.l.b16 %v3302
          %v3342 = vunpack.c.l.b16 %v3303
          %v3343 = vunpack.c.l.b16 %v3304
          %v3344 = vunpack.c.l.b16 %v3305
          %v3345 = vunpack.c.l.b16 %v3306
          %v3346 = vunpack.c.l.b16 %v3307
          %v3347 = vunpack.c.l.b16 %v3308
          %v3348 = vunpack.c.l.b16 %v3309
          %v3349 = vunpack.c.l.b16 %v3310
          %v3350 = vunpack.c.l.b16 %v3311
          %v3351 = vunpack.c.l.b16 %v3312
          %v3352 = vunpack.c.l.b16 %v3313
          %v3353 = vpack.c.b16 %v3338, %v3337
          %v3354 = vpack.c.b16 %v3340, %v3339
          %v3355 = vpack.c.b16 %v3342, %v3341
          %v3356 = vpack.c.b16 %v3344, %v3343
          %v3357 = vpack.c.b16 %v3346, %v3345
          %v3358 = vpack.c.b16 %v3348, %v3347
          %v3359 = vpack.c.b16 %v3350, %v3349
          %v3360 = vpack.c.b16 %v3352, %v3351
          %3369 = vmatprep.subr.bf16.mxu0 0
          %3370 = vmatpush1.bf16.msra.mxu0 %v3353
          %3371 = vmatprep.subr.bf16.mxu0 0
          %3372 = vmatpush1.bf16.msra.mxu0 %v3354
          %3373 = vmatprep.subr.bf16.mxu0 0
          %3374 = vmatpush1.bf16.msra.mxu0 %v3355
          %3375 = vmatprep.subr.bf16.mxu0 0
          %3376 = vmatpush1.bf16.msra.mxu0 %v3356
          %3377 = vmatprep.subr.bf16.mxu0 0
          %3378 = vmatpush1.bf16.msra.mxu0 %v3357
          %3379 = vmatprep.subr.bf16.mxu0 0
          %3380 = vmatpush1.bf16.msra.mxu0 %v3358
          %3381 = vmatprep.subr.bf16.mxu0 0
          %3382 = vmatpush1.bf16.msra.mxu0 %v3359
          %3383 = vmatprep.subr.bf16.mxu0 0
          %3384 = vmatpush1.bf16.msra.mxu0 %v3360
          %3385 = vmatprep.subr.bf16.mxu0 0
          %3386 = vmatpush1.bf16.msra.mxu0 0
          %3387 = vmatprep.subr.bf16.mxu0 0
          %3388 = vmatpush1.bf16.msra.mxu0 0
          %3389 = vmatprep.subr.bf16.mxu0 0
          %3390 = vmatpush1.bf16.msra.mxu0 0
          %3391 = vmatprep.subr.bf16.mxu0 0
          %3392 = vmatpush1.bf16.msra.mxu0 0
          %3393 = vmatprep.subr.bf16.mxu0 0
          %3394 = vmatpush1.bf16.msra.mxu0 0
          %3395 = vmatprep.subr.bf16.mxu0 0
          %3396 = vmatpush1.bf16.msra.mxu0 0
          %3397 = vmatprep.subr.bf16.mxu0 0
          %3398 = vmatpush1.bf16.msra.mxu0 0
          %3399 = vmatprep.subr.bf16.mxu0 0
          %3400 = vmatpush1.bf16.msra.mxu0 0
          %3401 = vmatprep.mubr.bf16.mxu0 0
          %3402 = vmatmul.mubr.bf16.gmra.mrb[0].mxu0 %v3282
          %v3403 = vpop.f32.mrb[0].mxu0
          %v3404 = vadd.f32 %v3319, %v3403
          %v3405 = vpop.f32.mrb[0].mxu0
          %v3406 = vpop.f32.mrb[0].mxu0
          %v3407 = vadd.f32 %v3319, %v3406
          %v3408 = vpop.f32.mrb[0].mxu0
          %3409 = vmatprep.mubr.bf16.mxu0 0
          %3410 = vmatmul.mubr.bf16.gmra.mrb[0].mxu0 %v3283
          %v3411 = vpop.f32.mrb[0].mxu0
          %v3412 = vadd.f32 %v3319, %v3411
          %v3413 = vpop.f32.mrb[0].mxu0
          %v3414 = vpop.f32.mrb[0].mxu0
          %v3415 = vadd.f32 %v3319, %v3414
          %v3416 = vpop.f32.mrb[0].mxu0
          %3417 = vmatprep.mubr.bf16.mxu0 0
          %3418 = vmatmul.mubr.bf16.gmra.mrb[0].mxu0 %v3284
          %v3419 = vpop.f32.mrb[0].mxu0
          %v3420 = vadd.f32 %v3319, %v3419
          %v3421 = vpop.f32.mrb[0].mxu0
          %v3422 = vpop.f32.mrb[0].mxu0
          %v3423 = vadd.f32 %v3319, %v3422
          %v3424 = vpop.f32.mrb[0].mxu0
          %3425 = vmatprep.mubr.bf16.mxu0 0
          %3426 = vmatmul.mubr.bf16.gmra.mrb[0].mxu0 %v3285
          %v3427 = vpop.f32.mrb[0].mxu0
          %v3428 = vadd.f32 %v3319, %v3427
          %v3429 = vpop.f32.mrb[0].mxu0
          %v3430 = vpop.f32.mrb[0].mxu0
          %v3431 = vadd.f32 %v3319, %v3430
          %v3432 = vpop.f32.mrb[0].mxu0
          %3433 = vmatprep.mubr.bf16.mxu0 0
          %3434 = vmatmul.mubr.bf16.gmra.mrb[0].mxu0 %v3286
          %v3435 = vpop.f32.mrb[0].mxu0
          %v3436 = vadd.f32 %v3319, %v3435
          %v3437 = vpop.f32.mrb[0].mxu0
          %v3438 = vpop.f32.mrb[0].mxu0
          %v3439 = vadd.f32 %v3319, %v3438
          %v3440 = vpop.f32.mrb[0].mxu0
          %3441 = vmatprep.mubr.bf16.mxu0 0
          %3442 = vmatmul.mubr.bf16.gmra.mrb[0].mxu0 %v3287
          %v3443 = vpop.f32.mrb[0].mxu0
          %v3444 = vadd.f32 %v3319, %v3443
          %v3445 = vpop.f32.mrb[0].mxu0
          %v3446 = vpop.f32.mrb[0].mxu0
          %v3447 = vadd.f32 %v3319, %v3446
          %v3448 = vpop.f32.mrb[0].mxu0
          %3449 = vmatprep.mubr.bf16.mxu0 0
          %3450 = vmatmul.mubr.bf16.gmra.mrb[0].mxu0 %v3288
          %v3451 = vpop.f32.mrb[0].mxu0
          %v3452 = vadd.f32 %v3319, %v3451
          %v3453 = vpop.f32.mrb[0].mxu0
          %v3454 = vpop.f32.mrb[0].mxu0
          %v3455 = vadd.f32 %v3319, %v3454
          %v3456 = vpop.f32.mrb[0].mxu0
          %3457 = vmatprep.mubr.bf16.mxu0 0
          %3458 = vmatmul.mubr.bf16.gmra.mrb[0].mxu0 %v3289
          %v3459 = vpop.f32.mrb[0].mxu0
          %v3460 = vadd.f32 %v3319, %v3459
          %v3461 = vpop.f32.mrb[0].mxu0
          %v3462 = vpop.f32.mrb[0].mxu0
          %v3463 = vadd.f32 %v3319, %v3462
          %v3464 = vpop.f32.mrb[0].mxu0
          %3465 = vmatprep.mubr.bf16.mxu0 0
          %3466 = vmatmul.mubr.bf16.gmra.mrb[0].mxu0 %v3290
          %v3467 = vpop.f32.mrb[0].mxu0
          %v3468 = vadd.f32 %v3319, %v3467
          %v3469 = vpop.f32.mrb[0].mxu0
          %v3470 = vpop.f32.mrb[0].mxu0
          %v3471 = vadd.f32 %v3319, %v3470
          %v3472 = vpop.f32.mrb[0].mxu0
          %3473 = vmatprep.mubr.bf16.mxu0 0
          %3474 = vmatmul.mubr.bf16.gmra.mrb[0].mxu0 %v3291
          %v3475 = vpop.f32.mrb[0].mxu0
          %v3476 = vadd.f32 %v3319, %v3475
          %v3477 = vpop.f32.mrb[0].mxu0
          %v3478 = vpop.f32.mrb[0].mxu0
          %v3479 = vadd.f32 %v3319, %v3478
          %v3480 = vpop.f32.mrb[0].mxu0
          %3481 = vmatprep.mubr.bf16.mxu0 0
          %3482 = vmatmul.mubr.bf16.gmra.mrb[0].mxu0 %v3292
          %v3483 = vpop.f32.mrb[0].mxu0
          %v3484 = vadd.f32 %v3319, %v3483
          %v3485 = vpop.f32.mrb[0].mxu0
          %v3486 = vpop.f32.mrb[0].mxu0
          %v3487 = vadd.f32 %v3319, %v3486
          %v3488 = vpop.f32.mrb[0].mxu0
          %3489 = vmatprep.mubr.bf16.mxu0 0
          %3490 = vmatmul.mubr.bf16.gmra.mrb[0].mxu0 %v3293
          %v3491 = vpop.f32.mrb[0].mxu0
          %v3492 = vadd.f32 %v3319, %v3491
          %v3493 = vpop.f32.mrb[0].mxu0
          %v3494 = vpop.f32.mrb[0].mxu0
          %v3495 = vadd.f32 %v3319, %v3494
          %v3496 = vpop.f32.mrb[0].mxu0
          %3497 = vmatprep.mubr.bf16.mxu0 0
          %3498 = vmatmul.mubr.bf16.gmra.mrb[0].mxu0 %v3294
          %v3499 = vpop.f32.mrb[0].mxu0
          %v3500 = vadd.f32 %v3319, %v3499
          %v3501 = vpop.f32.mrb[0].mxu0
          %v3502 = vpop.f32.mrb[0].mxu0
          %v3503 = vadd.f32 %v3319, %v3502
          %v3504 = vpop.f32.mrb[0].mxu0
          %3505 = vmatprep.mubr.bf16.mxu0 0
          %3506 = vmatmul.mubr.bf16.gmra.mrb[0].mxu0 %v3295
          %v3507 = vpop.f32.mrb[0].mxu0
          %v3508 = vadd.f32 %v3319, %v3507
          %v3509 = vpop.f32.mrb[0].mxu0
          %v3510 = vpop.f32.mrb[0].mxu0
          %v3511 = vadd.f32 %v3319, %v3510
          %v3512 = vpop.f32.mrb[0].mxu0
          %3513 = vmatprep.mubr.bf16.mxu0 0
          %3514 = vmatmul.mubr.bf16.gmra.mrb[0].mxu0 %v3296
          %v3515 = vpop.f32.mrb[0].mxu0
          %v3516 = vadd.f32 %v3319, %v3515
          %v3517 = vpop.f32.mrb[0].mxu0
          %v3518 = vpop.f32.mrb[0].mxu0
          %v3519 = vadd.f32 %v3319, %v3518
          %v3520 = vpop.f32.mrb[0].mxu0
          %3521 = vmatprep.mubr.bf16.mxu0 0
          %3522 = vmatmul.mubr.bf16.gmra.mrb[0].mxu0 %v3297
          %v3523 = vpop.f32.mrb[0].mxu0
          %v3524 = vadd.f32 %v3319, %v3523
          %v3525 = vpop.f32.mrb[0].mxu0
          %v3526 = vpop.f32.mrb[0].mxu0
          %v3527 = vadd.f32 %v3319, %v3526
          %v3528 = vpop.f32.mrb[0].mxu0
          %3529 = vdwg.mxu0
          %v3530 = vmax.f32 %v3404, 0.0
          %v3531 = vmax.f32 %v3407, 0.0
          %v3532 = vmax.f32 %v3412, 0.0
          %v3533 = vmax.f32 %v3415, 0.0
          %v3534 = vmax.f32 %v3420, 0.0
          %v3535 = vmax.f32 %v3423, 0.0
          %v3536 = vmax.f32 %v3428, 0.0
          %v3537 = vmax.f32 %v3431, 0.0
          %v3538 = vmax.f32 %v3436, 0.0
          %v3539 = vmax.f32 %v3439, 0.0
          %v3540 = vmax.f32 %v3444, 0.0
          %v3541 = vmax.f32 %v3447, 0.0
          %v3542 = vmax.f32 %v3452, 0.0
          %v3543 = vmax.f32 %v3455, 0.0
          %v3544 = vmax.f32 %v3460, 0.0
          %v3545 = vmax.f32 %v3463, 0.0
          %v3546 = vmax.f32 %v3468, 0.0
          %v3547 = vmax.f32 %v3471, 0.0
          %v3548 = vmax.f32 %v3476, 0.0
          %v3549 = vmax.f32 %v3479, 0.0
          %v3550 = vmax.f32 %v3484, 0.0
          %v3551 = vmax.f32 %v3487, 0.0
          %v3552 = vmax.f32 %v3492, 0.0
          %v3553 = vmax.f32 %v3495, 0.0
          %v3554 = vmax.f32 %v3500, 0.0
          %v3555 = vmax.f32 %v3503, 0.0
          %v3556 = vmax.f32 %v3508, 0.0
          %v3557 = vmax.f32 %v3511, 0.0
          %v3558 = vmax.f32 %v3516, 0.0
          %v3559 = vmax.f32 %v3519, 0.0
          %v3560 = vmax.f32 %v3524, 0.0
          %v3561 = vmax.f32 %v3527, 0.0
          %v3562 = vpack.c.bf16 %v3531, %v3530
          %v3563 = vpack.c.bf16 %v3533, %v3532
          %v3564 = vpack.c.bf16 %v3535, %v3534
          %v3565 = vpack.c.bf16 %v3537, %v3536
          %v3566 = vpack.c.bf16 %v3539, %v3538
          %v3567 = vpack.c.bf16 %v3541, %v3540
          %v3568 = vpack.c.bf16 %v3543, %v3542
          %v3569 = vpack.c.bf16 %v3545, %v3544
          %v3570 = vpack.c.bf16 %v3547, %v3546
          %v3571 = vpack.c.bf16 %v3549, %v3548
          %v3572 = vpack.c.bf16 %v3551, %v3550
          %v3573 = vpack.c.bf16 %v3553, %v3552
          %v3574 = vpack.c.bf16 %v3555, %v3554
          %v3575 = vpack.c.bf16 %v3557, %v3556
          %v3576 = vpack.c.bf16 %v3559, %v3558
          %v3577 = vpack.c.bf16 %v3561, %v3560
          %v3578 = vld [vmem:[#allocation5] sm:$0xf]
          %v3579 = vld [vmem:[#allocation5 + $0x4] sm:$0xf]
          %v3580 = vld [vmem:[#allocation5 + $0x8] sm:$0xf]
          %v3581 = vld [vmem:[#allocation5 + $0xc] sm:$0xf]
          %v3582 = vld [vmem:[#allocation5 + $0x10] sm:$0xf]
          %v3583 = vld [vmem:[#allocation5 + $0x14] sm:$0xf]
          %v3584 = vld [vmem:[#allocation5 + $0x18] sm:$0xf]
          %v3585 = vld [vmem:[#allocation5 + $0x1c] sm:$0xf]
          %v3586 = vld [vmem:[#allocation5 + $0x20] sm:$0xf]
          %v3587 = vld [vmem:[#allocation5 + $0x24] sm:$0xf]
          %v3588 = vld [vmem:[#allocation5 + $0x28] sm:$0xf]
          %v3589 = vld [vmem:[#allocation5 + $0x2c] sm:$0xf]
          %v3590 = vld [vmem:[#allocation5 + $0x30] sm:$0xf]
          %v3591 = vld [vmem:[#allocation5 + $0x34] sm:$0xf]
          %v3592 = vld [vmem:[#allocation5 + $0x38] sm:$0xf]
          %v3593 = vld [vmem:[#allocation5 + $0x3c] sm:$0xf]
          %v3594 = vld [vmem:[%s10] sm:$0x1]
          %v3596 = vlaneseq
          %v3597 = vshrl.u32 %v3596, 7
          %v3598 = vsub.s32 0, %v3597
          %v3599 = vrot.slane %v3594, %v3598
          %v3617 = vunpack.c.l.b16 %v3578
          %v3618 = vunpack.c.l.b16 %v3579
          %v3619 = vunpack.c.l.b16 %v3580
          %v3620 = vunpack.c.l.b16 %v3581
          %v3621 = vunpack.c.l.b16 %v3582
          %v3622 = vunpack.c.l.b16 %v3583
          %v3623 = vunpack.c.l.b16 %v3584
          %v3624 = vunpack.c.l.b16 %v3585
          %v3625 = vunpack.c.l.b16 %v3586
          %v3626 = vunpack.c.l.b16 %v3587
          %v3627 = vunpack.c.l.b16 %v3588
          %v3628 = vunpack.c.l.b16 %v3589
          %v3629 = vunpack.c.l.b16 %v3590
          %v3630 = vunpack.c.l.b16 %v3591
          %v3631 = vunpack.c.l.b16 %v3592
          %v3632 = vunpack.c.l.b16 %v3593
          %v3633 = vpack.c.b16 %v3618, %v3617
          %v3634 = vpack.c.b16 %v3620, %v3619
          %v3635 = vpack.c.b16 %v3622, %v3621
          %v3636 = vpack.c.b16 %v3624, %v3623
          %v3637 = vpack.c.b16 %v3626, %v3625
          %v3638 = vpack.c.b16 %v3628, %v3627
          %v3639 = vpack.c.b16 %v3630, %v3629
          %v3640 = vpack.c.b16 %v3632, %v3631
          %3649 = vmatprep.subr.bf16.mxu0 0
          %3650 = vmatpush1.bf16.msra.mxu0 %v3633
          %3651 = vmatprep.subr.bf16.mxu0 0
          %3652 = vmatpush1.bf16.msra.mxu0 %v3634
          %3653 = vmatprep.subr.bf16.mxu0 0
          %3654 = vmatpush1.bf16.msra.mxu0 %v3635
          %3655 = vmatprep.subr.bf16.mxu0 0
          %3656 = vmatpush1.bf16.msra.mxu0 %v3636
          %3657 = vmatprep.subr.bf16.mxu0 0
          %3658 = vmatpush1.bf16.msra.mxu0 %v3637
          %3659 = vmatprep.subr.bf16.mxu0 0
          %3660 = vmatpush1.bf16.msra.mxu0 %v3638
          %3661 = vmatprep.subr.bf16.mxu0 0
          %3662 = vmatpush1.bf16.msra.mxu0 %v3639
          %3663 = vmatprep.subr.bf16.mxu0 0
          %3664 = vmatpush1.bf16.msra.mxu0 %v3640
          %3665 = vmatprep.subr.bf16.mxu0 0
          %3666 = vmatpush1.bf16.msra.mxu0 0
          %3667 = vmatprep.subr.bf16.mxu0 0
          %3668 = vmatpush1.bf16.msra.mxu0 0
          %3669 = vmatprep.subr.bf16.mxu0 0
          %3670 = vmatpush1.bf16.msra.mxu0 0
          %3671 = vmatprep.subr.bf16.mxu0 0
          %3672 = vmatpush1.bf16.msra.mxu0 0
          %3673 = vmatprep.subr.bf16.mxu0 0
          %3674 = vmatpush1.bf16.msra.mxu0 0
          %3675 = vmatprep.subr.bf16.mxu0 0
          %3676 = vmatpush1.bf16.msra.mxu0 0
          %3677 = vmatprep.subr.bf16.mxu0 0
          %3678 = vmatpush1.bf16.msra.mxu0 0
          %3679 = vmatprep.subr.bf16.mxu0 0
          %3680 = vmatpush1.bf16.msra.mxu0 0
          %3681 = vmatprep.mubr.bf16.mxu0 0
          %3682 = vmatmul.mubr.bf16.gmra.mrb[0].mxu0 %v3562
          %v3683 = vpop.f32.mrb[0].mxu0
          %v3684 = vadd.f32 %v3599, %v3683
          %v3685 = vpop.f32.mrb[0].mxu0
          %v3686 = vpop.f32.mrb[0].mxu0
          %v3687 = vadd.f32 %v3599, %v3686
          %v3688 = vpop.f32.mrb[0].mxu0
          %3689 = vmatprep.mubr.bf16.mxu0 0
          %3690 = vmatmul.mubr.bf16.gmra.mrb[0].mxu0 %v3563
          %v3691 = vpop.f32.mrb[0].mxu0
          %v3692 = vadd.f32 %v3599, %v3691
          %v3693 = vpop.f32.mrb[0].mxu0
          %v3694 = vpop.f32.mrb[0].mxu0
          %v3695 = vadd.f32 %v3599, %v3694
          %v3696 = vpop.f32.mrb[0].mxu0
          %3697 = vmatprep.mubr.bf16.mxu0 0
          %3698 = vmatmul.mubr.bf16.gmra.mrb[0].mxu0 %v3564
          %v3699 = vpop.f32.mrb[0].mxu0
          %v3700 = vadd.f32 %v3599, %v3699
          %v3701 = vpop.f32.mrb[0].mxu0
          %v3702 = vpop.f32.mrb[0].mxu0
          %v3703 = vadd.f32 %v3599, %v3702
          %v3704 = vpop.f32.mrb[0].mxu0
          %3705 = vmatprep.mubr.bf16.mxu0 0
          %3706 = vmatmul.mubr.bf16.gmra.mrb[0].mxu0 %v3565
          %v3707 = vpop.f32.mrb[0].mxu0
          %v3708 = vadd.f32 %v3599, %v3707
          %v3709 = vpop.f32.mrb[0].mxu0
          %v3710 = vpop.f32.mrb[0].mxu0
          %v3711 = vadd.f32 %v3599, %v3710
          %v3712 = vpop.f32.mrb[0].mxu0
          %3713 = vmatprep.mubr.bf16.mxu0 0
          %3714 = vmatmul.mubr.bf16.gmra.mrb[0].mxu0 %v3566
          %v3715 = vpop.f32.mrb[0].mxu0
          %v3716 = vadd.f32 %v3599, %v3715
          %v3717 = vpop.f32.mrb[0].mxu0
          %v3718 = vpop.f32.mrb[0].mxu0
          %v3719 = vadd.f32 %v3599, %v3718
          %v3720 = vpop.f32.mrb[0].mxu0
          %3721 = vmatprep.mubr.bf16.mxu0 0
          %3722 = vmatmul.mubr.bf16.gmra.mrb[0].mxu0 %v3567
          %v3723 = vpop.f32.mrb[0].mxu0
          %v3724 = vadd.f32 %v3599, %v3723
          %v3725 = vpop.f32.mrb[0].mxu0
          %v3726 = vpop.f32.mrb[0].mxu0
          %v3727 = vadd.f32 %v3599, %v3726
          %v3728 = vpop.f32.mrb[0].mxu0
          %3729 = vmatprep.mubr.bf16.mxu0 0
          %3730 = vmatmul.mubr.bf16.gmra.mrb[0].mxu0 %v3568
          %v3731 = vpop.f32.mrb[0].mxu0
          %v3732 = vadd.f32 %v3599, %v3731
          %v3733 = vpop.f32.mrb[0].mxu0
          %v3734 = vpop.f32.mrb[0].mxu0
          %v3735 = vadd.f32 %v3599, %v3734
          %v3736 = vpop.f32.mrb[0].mxu0
          %3737 = vmatprep.mubr.bf16.mxu0 0
          %3738 = vmatmul.mubr.bf16.gmra.mrb[0].mxu0 %v3569
          %v3739 = vpop.f32.mrb[0].mxu0
          %v3740 = vadd.f32 %v3599, %v3739
          %v3741 = vpop.f32.mrb[0].mxu0
          %v3742 = vpop.f32.mrb[0].mxu0
          %v3743 = vadd.f32 %v3599, %v3742
          %v3744 = vpop.f32.mrb[0].mxu0
          %3745 = vmatprep.mubr.bf16.mxu0 0
          %3746 = vmatmul.mubr.bf16.gmra.mrb[0].mxu0 %v3570
          %v3747 = vpop.f32.mrb[0].mxu0
          %v3748 = vadd.f32 %v3599, %v3747
          %v3749 = vpop.f32.mrb[0].mxu0
          %v3750 = vpop.f32.mrb[0].mxu0
          %v3751 = vadd.f32 %v3599, %v3750
          %v3752 = vpop.f32.mrb[0].mxu0
          %3753 = vmatprep.mubr.bf16.mxu0 0
          %3754 = vmatmul.mubr.bf16.gmra.mrb[0].mxu0 %v3571
          %v3755 = vpop.f32.mrb[0].mxu0
          %v3756 = vadd.f32 %v3599, %v3755
          %v3757 = vpop.f32.mrb[0].mxu0
          %v3758 = vpop.f32.mrb[0].mxu0
          %v3759 = vadd.f32 %v3599, %v3758
          %v3760 = vpop.f32.mrb[0].mxu0
          %3761 = vmatprep.mubr.bf16.mxu0 0
          %3762 = vmatmul.mubr.bf16.gmra.mrb[0].mxu0 %v3572
          %v3763 = vpop.f32.mrb[0].mxu0
          %v3764 = vadd.f32 %v3599, %v3763
          %v3765 = vpop.f32.mrb[0].mxu0
          %v3766 = vpop.f32.mrb[0].mxu0
          %v3767 = vadd.f32 %v3599, %v3766
          %v3768 = vpop.f32.mrb[0].mxu0
          %3769 = vmatprep.mubr.bf16.mxu0 0
          %3770 = vmatmul.mubr.bf16.gmra.mrb[0].mxu0 %v3573
          %v3771 = vpop.f32.mrb[0].mxu0
          %v3772 = vadd.f32 %v3599, %v3771
          %v3773 = vpop.f32.mrb[0].mxu0
          %v3774 = vpop.f32.mrb[0].mxu0
          %v3775 = vadd.f32 %v3599, %v3774
          %v3776 = vpop.f32.mrb[0].mxu0
          %3777 = vmatprep.mubr.bf16.mxu0 0
          %3778 = vmatmul.mubr.bf16.gmra.mrb[0].mxu0 %v3574
          %v3779 = vpop.f32.mrb[0].mxu0
          %v3780 = vadd.f32 %v3599, %v3779
          %v3781 = vpop.f32.mrb[0].mxu0
          %v3782 = vpop.f32.mrb[0].mxu0
          %v3783 = vadd.f32 %v3599, %v3782
          %v3784 = vpop.f32.mrb[0].mxu0
          %3785 = vmatprep.mubr.bf16.mxu0 0
          %3786 = vmatmul.mubr.bf16.gmra.mrb[0].mxu0 %v3575
          %v3787 = vpop.f32.mrb[0].mxu0
          %v3788 = vadd.f32 %v3599, %v3787
          %v3789 = vpop.f32.mrb[0].mxu0
          %v3790 = vpop.f32.mrb[0].mxu0
          %v3791 = vadd.f32 %v3599, %v3790
          %v3792 = vpop.f32.mrb[0].mxu0
          %3793 = vmatprep.mubr.bf16.mxu0 0
          %3794 = vmatmul.mubr.bf16.gmra.mrb[0].mxu0 %v3576
          %v3795 = vpop.f32.mrb[0].mxu0
          %v3796 = vadd.f32 %v3599, %v3795
          %v3797 = vpop.f32.mrb[0].mxu0
          %v3798 = vpop.f32.mrb[0].mxu0
          %v3799 = vadd.f32 %v3599, %v3798
          %v3800 = vpop.f32.mrb[0].mxu0
          %3801 = vmatprep.mubr.bf16.mxu0 0
          %3802 = vmatmul.mubr.bf16.gmra.mrb[0].mxu0 %v3577
          %v3803 = vpop.f32.mrb[0].mxu0
          %v3804 = vadd.f32 %v3599, %v3803
          %v3805 = vpop.f32.mrb[0].mxu0
          %v3806 = vpop.f32.mrb[0].mxu0
          %v3807 = vadd.f32 %v3599, %v3806
          %v3808 = vpop.f32.mrb[0].mxu0
          %3809 = vdwg.mxu0
          %v3810 = vpack.c.bf16 %v3687, %v3684
          %v3811 = vpack.c.bf16 %v3695, %v3692
          %v3812 = vpack.c.bf16 %v3703, %v3700
          %v3813 = vpack.c.bf16 %v3711, %v3708
          %v3814 = vpack.c.bf16 %v3719, %v3716
          %v3815 = vpack.c.bf16 %v3727, %v3724
          %v3816 = vpack.c.bf16 %v3735, %v3732
          %v3817 = vpack.c.bf16 %v3743, %v3740
          %v3818 = vpack.c.bf16 %v3751, %v3748
          %v3819 = vpack.c.bf16 %v3759, %v3756
          %v3820 = vpack.c.bf16 %v3767, %v3764
          %v3821 = vpack.c.bf16 %v3775, %v3772
          %v3822 = vpack.c.bf16 %v3783, %v3780
          %v3823 = vpack.c.bf16 %v3791, %v3788
          %v3824 = vpack.c.bf16 %v3799, %v3796
          %v3825 = vpack.c.bf16 %v3807, %v3804
          %v3842 = vunpack.c.l.b16 %v3810
          %v3843 = vunpack.c.h.b16 %v3810
          %v3844 = vunpack.c.l.b16 %v3811
          %v3845 = vunpack.c.h.b16 %v3811
          %v3846 = vunpack.c.l.b16 %v3812
          %v3847 = vunpack.c.h.b16 %v3812
          %v3848 = vunpack.c.l.b16 %v3813
          %v3849 = vunpack.c.h.b16 %v3813
          %v3850 = vunpack.c.l.b16 %v3814
          %v3851 = vunpack.c.h.b16 %v3814
          %v3852 = vunpack.c.l.b16 %v3815
          %v3853 = vunpack.c.h.b16 %v3815
          %v3854 = vunpack.c.l.b16 %v3816
          %v3855 = vunpack.c.h.b16 %v3816
          %v3856 = vunpack.c.l.b16 %v3817
          %v3857 = vunpack.c.h.b16 %v3817
          %v3858 = vunpack.c.l.b16 %v3818
          %v3859 = vunpack.c.h.b16 %v3818
          %v3860 = vunpack.c.l.b16 %v3819
          %v3861 = vunpack.c.h.b16 %v3819
          %v3862 = vunpack.c.l.b16 %v3820
          %v3863 = vunpack.c.h.b16 %v3820
          %v3864 = vunpack.c.l.b16 %v3821
          %v3865 = vunpack.c.h.b16 %v3821
          %v3866 = vunpack.c.l.b16 %v3822
          %v3867 = vunpack.c.h.b16 %v3822
          %v3868 = vunpack.c.l.b16 %v3823
          %v3869 = vunpack.c.h.b16 %v3823
          %v3870 = vunpack.c.l.b16 %v3824
          %v3871 = vunpack.c.h.b16 %v3824
          %v3872 = vunpack.c.l.b16 %v3825
          %v3873 = vunpack.c.h.b16 %v3825
          %v3874 = vpack.c.b16 %v3842, %v3842
          %v3875 = vpack.c.b16 %v3843, %v3843
          %v3876 = vpack.c.b16 %v3844, %v3844
          %v3877 = vpack.c.b16 %v3845, %v3845
          %v3878 = vpack.c.b16 %v3846, %v3846
          %v3879 = vpack.c.b16 %v3847, %v3847
          %v3880 = vpack.c.b16 %v3848, %v3848
          %v3881 = vpack.c.b16 %v3849, %v3849
          %v3882 = vpack.c.b16 %v3850, %v3850
          %v3883 = vpack.c.b16 %v3851, %v3851
          %v3884 = vpack.c.b16 %v3852, %v3852
          %v3885 = vpack.c.b16 %v3853, %v3853
          %v3886 = vpack.c.b16 %v3854, %v3854
          %v3887 = vpack.c.b16 %v3855, %v3855
          %v3888 = vpack.c.b16 %v3856, %v3856
          %v3889 = vpack.c.b16 %v3857, %v3857
          %v3890 = vpack.c.b16 %v3858, %v3858
          %v3891 = vpack.c.b16 %v3859, %v3859
          %v3892 = vpack.c.b16 %v3860, %v3860
          %v3893 = vpack.c.b16 %v3861, %v3861
          %v3894 = vpack.c.b16 %v3862, %v3862
          %v3895 = vpack.c.b16 %v3863, %v3863
          %v3896 = vpack.c.b16 %v3864, %v3864
          %v3897 = vpack.c.b16 %v3865, %v3865
          %v3898 = vpack.c.b16 %v3866, %v3866
          %v3899 = vpack.c.b16 %v3867, %v3867
          %v3900 = vpack.c.b16 %v3868, %v3868
          %v3901 = vpack.c.b16 %v3869, %v3869
          %v3902 = vpack.c.b16 %v3870, %v3870
          %v3903 = vpack.c.b16 %v3871, %v3871
          %v3904 = vpack.c.b16 %v3872, %v3872
          %v3905 = vpack.c.b16 %v3873, %v3873
          %3938 = vst [vmem:[%s441] sm:$0xf] %v3874
          %3939 = vst [vmem:[%s441 + $0x4] sm:$0xf] %v3875
          %3940 = vst [vmem:[%s441 + $0x8] sm:$0xf] %v3876
          %3941 = vst [vmem:[%s441 + $0xc] sm:$0xf] %v3877
          %3942 = vst [vmem:[%s441 + $0x10] sm:$0xf] %v3878
          %3943 = vst [vmem:[%s441 + $0x14] sm:$0xf] %v3879
          %3944 = vst [vmem:[%s441 + $0x18] sm:$0xf] %v3880
          %3945 = vst [vmem:[%s441 + $0x1c] sm:$0xf] %v3881
          %3946 = vst [vmem:[%s441 + $0x20] sm:$0xf] %v3882
          %3947 = vst [vmem:[%s441 + $0x24] sm:$0xf] %v3883
          %3948 = vst [vmem:[%s441 + $0x28] sm:$0xf] %v3884
          %3949 = vst [vmem:[%s441 + $0x2c] sm:$0xf] %v3885
          %3950 = vst [vmem:[%s441 + $0x30] sm:$0xf] %v3886
          %3951 = vst [vmem:[%s441 + $0x34] sm:$0xf] %v3887
          %3952 = vst [vmem:[%s441 + $0x38] sm:$0xf] %v3888
          %3953 = vst [vmem:[%s441 + $0x3c] sm:$0xf] %v3889
          %3954 = vst [vmem:[%s441 + $0x40] sm:$0xf] %v3890
          %3955 = vst [vmem:[%s441 + $0x44] sm:$0xf] %v3891
          %3956 = vst [vmem:[%s441 + $0x48] sm:$0xf] %v3892
          %3957 = vst [vmem:[%s441 + $0x4c] sm:$0xf] %v3893
          %3958 = vst [vmem:[%s441 + $0x50] sm:$0xf] %v3894
          %3959 = vst [vmem:[%s441 + $0x54] sm:$0xf] %v3895
          %3960 = vst [vmem:[%s441 + $0x58] sm:$0xf] %v3896
          %3961 = vst [vmem:[%s441 + $0x5c] sm:$0xf] %v3897
          %3962 = vst [vmem:[%s441 + $0x60] sm:$0xf] %v3898
          %3963 = vst [vmem:[%s441 + $0x64] sm:$0xf] %v3899
          %3964 = vst [vmem:[%s441 + $0x68] sm:$0xf] %v3900
          %3965 = vst [vmem:[%s441 + $0x6c] sm:$0xf] %v3901
          %3966 = vst [vmem:[%s441 + $0x70] sm:$0xf] %v3902
          %3967 = vst [vmem:[%s441 + $0x74] sm:$0xf] %v3903
          %3968 = vst [vmem:[%s441 + $0x78] sm:$0xf] %v3904
          %3969 = vst [vmem:[%s441 + $0x7c] sm:$0xf] %v3905
        $region80: #{_large_mlp_forward_impl.1} parent=63 // pred_fallthru
          _
        %s3970 = smul.u32 32, %s28
        %p3971 = scmp.lt.s32.totalorder %s3970, 63
        %s3972 = scalar_select %p3971, %s3970, 63
        %s3973 = smul.addr %s3972, 4
        %s3974 = scalar_lea.vmem %s11, %s3973
        // Predicated region
        $region81: #{_large_mlp_forward_impl.1} parent=63 // pred_check
          %p3975 = pneg %p292
        $region82: #{_large_mlp_forward_impl.1} parent=63 // pred_check_branch
          %3977 = sbr.rel (%p3975) target = $region84
        $region83: #{_large_mlp_forward_impl.1} parent=63 // pred_region
          %s3978 = smul.u32 32, %s28
        $region84: #{_large_mlp_forward_impl.1} parent=63 // pred_fallthru
          _
      $region64: #{_large_mlp_forward_impl.1} parent=5 // pred_fallthru
        _
      %p3979 = scmp.le.s32.totalorder 2, %s19
      // Predicated region
      $region85: #{_large_mlp_forward_impl.1} parent=5 // pred_check
        %p3980 = pneg %p3979
      $region86: #{_large_mlp_forward_impl.1} parent=5 // pred_check_branch
        %3982 = sbr.rel (%p3980) target = $region88
      $region87: #{_large_mlp_forward_impl.1} parent=5 // pred_region
        %s3983 = ssub.s32 %s19, 2
        // Predicated region
        $region89: #{_large_mlp_forward_impl.1} parent=87 // pred_check
          %p3984 = pneg %p298
        $region90: #{_large_mlp_forward_impl.1} parent=87 // pred_check_branch
          %3986 = sbr.rel (%p3984) target = $region92
        $region91: #{_large_mlp_forward_impl.1} parent=87 // pred_region
          %s3987 = smul.u32 32, %s30
          %p3988 = scmp.lt.s32.totalorder %s3987, 63
          %s3989 = scalar_select %p3988, %s3987, 63
          %s3990 = smul.addr %s3989, 4
          %s3991 = scalar_lea.vmem %s11, %s3990
        $region92: #{_large_mlp_forward_impl.1} parent=87 // pred_fallthru
          _
      $region88: #{_large_mlp_forward_impl.1} parent=5 // pred_fallthru
        _
    $region6: #{_large_mlp_forward_impl.1} parent=1 // loop_footer
      %s23 = sadd.s32 1, %s19
    $region7: #{_large_mlp_forward_impl.1} parent=1 // loop_footer_branch
      %18 = sbr.rel target = $region3
    $region8: #{_large_mlp_forward_impl.1} parent=1 // loop_exit
      _
    %3992 = vsyncpa [#allocation4], 1
    %s3993 = scalar_lea.sflag [#allocation4], 1
    %3994 = vsyncpa %s3993, 1
    %3995 = vsyncpa [#allocation6], 1

</llo_original>
